<compile_context>
chip_gen: v7x
topology: tpu7x:2x2x1
jax: 0.10.0
libtpu: 0.0.40
codegen_flags: <defaults>
</compile_context>

<pallas_src>
import jax
import jax.numpy as jnp
from jax.experimental import pallas as pl
from jax.experimental.pallas import tpu as pltpu

IN_DIM = 784
IN_PAD = 896            # 7 * 128 : lane-dense padding of the 784-wide dims
HID_DIM = 400
LATENT = 20
MV_DIM = 2 * LATENT     # fused mean || var head width


def _round_up(n, m):
    return ((n + m - 1) // m) * m


def vae_fwd_kernel(x_ref,
                   w_enc_ref, b_enc_ref,
                   w_mv_ref, b_mv_ref,
                   w_d1_ref, b_d1_ref,
                   w_d2_ref, b_d2_ref,
                   noise_ref,
                   est_ref, mv_ref):
    # Encoder: Linear(896 -> 400) + ReLU. bf16 MXU inputs, f32 accumulation.
    x = x_ref[...].astype(jnp.bfloat16)
    h = jnp.dot(x, w_enc_ref[...], preferred_element_type=jnp.float32) + b_enc_ref[...]
    h = jnp.maximum(h, 0.0)

    # Fused mean||var head: one Linear(400 -> 40) instead of two 20-wide dots.
    mv = jnp.dot(h.astype(jnp.bfloat16), w_mv_ref[...],
                 preferred_element_type=jnp.float32) + b_mv_ref[...]
    mean = mv[:, :LATENT]
    var = mv[:, LATENT:]

    # Reparameterize: z = mean + noise * var (single noise row, broadcast over batch).
    z = mean + noise_ref[...] * var

    # Decoder: Linear(20 -> 400) + ReLU, Linear(400 -> 896) + Sigmoid.
    d = jnp.dot(z.astype(jnp.bfloat16), w_d1_ref[...],
                preferred_element_type=jnp.float32) + b_d1_ref[...]
    d = jnp.maximum(d, 0.0)
    logits = jnp.dot(d.astype(jnp.bfloat16), w_d2_ref[...],
                     preferred_element_type=jnp.float32) + b_d2_ref[...]
    # exp -> EUP, approx reciprocal -> EUP: keeps VALU free for the wide store tile.
    est_ref[...] = pl.reciprocal(1.0 + jnp.exp(-logits), approx=True)
    mv_ref[...] = mv


def prepare_kernel_params(params):
    """Pad to lane-dense widths, fuse the mean/var heads, cast weights to bf16.

    `params` holds f32 weights in (in, out) layout (transpose of PyTorch's
    (out, in)) and (1, out) biases.
    """
    w_enc = jnp.zeros((IN_PAD, HID_DIM), jnp.float32).at[:IN_DIM].set(params["w_enc"])
    w_d2 = jnp.zeros((HID_DIM, IN_PAD), jnp.float32).at[:, :IN_DIM].set(params["w_d2"])
    b_d2 = jnp.zeros((1, IN_PAD), jnp.float32).at[:, :IN_DIM].set(params["b_d2"])
    w_mv = jnp.concatenate([params["w_mu"], params["w_var"]], axis=1)
    b_mv = jnp.concatenate([params["b_mu"], params["b_var"]], axis=1)
    return {
        "w_enc": w_enc.astype(jnp.bfloat16),
        "b_enc": params["b_enc"].astype(jnp.float32),
        "w_mv": w_mv.astype(jnp.bfloat16),
        "b_mv": b_mv.astype(jnp.float32),
        "w_d1": params["w_d1"].astype(jnp.bfloat16),
        "b_d1": params["b_d1"].astype(jnp.float32),
        "w_d2": w_d2.astype(jnp.bfloat16),
        "b_d2": b_d2.astype(jnp.float32),
    }


def vae_forward(x, kparams, noise, *, block_batch=256):
    """x: (B, 784) f32.  kparams: output of prepare_kernel_params.
    noise: (1, LATENT) f32.  Returns (estimate, mean, var)."""
    B = x.shape[0]
    # TB=256 fills v6e/v7x's 2x256^2 MXU; shrink for small / ragged batches.
    tb = min(block_batch, _round_up(B, 8))
    bp = _round_up(B, tb)
    grid = (bp // tb,)

    # Zero-pad batch to a tile multiple and the 784 columns to 896 (lane-dense).
    xp = jnp.zeros((bp, IN_PAD), jnp.float32).at[:B, :IN_DIM].set(
        x.astype(jnp.float32))

    def batch_spec(width):
        return pl.BlockSpec((tb, width), lambda i: (i, 0))

    def const_spec(shape):
        return pl.BlockSpec(shape, lambda i: (0, 0))

    flops = 2 * bp * (IN_PAD * HID_DIM + HID_DIM * MV_DIM
                      + LATENT * HID_DIM + HID_DIM * IN_PAD)
    weight_bytes = sum(int(v.size) * v.dtype.itemsize for v in kparams.values())
    bytes_accessed = (xp.size * 4 + bp * IN_PAD * 4 + bp * MV_DIM * 4
                      + weight_bytes + noise.size * 4)

    est_p, mv = pl.pallas_call(
        vae_fwd_kernel,
        grid=grid,
        in_specs=[
            batch_spec(IN_PAD),                   # x (tiled on batch)
            const_spec((IN_PAD, HID_DIM)),        # w_enc   (VMEM resident)
            const_spec((1, HID_DIM)),             # b_enc
            const_spec((HID_DIM, MV_DIM)),        # w_mv (mu || var fused)
            const_spec((1, MV_DIM)),              # b_mv
            const_spec((LATENT, HID_DIM)),        # w_d1
            const_spec((1, HID_DIM)),             # b_d1
            const_spec((HID_DIM, IN_PAD)),        # w_d2
            const_spec((1, IN_PAD)),              # b_d2
            const_spec((1, LATENT)),              # noise
        ],
        out_specs=(batch_spec(IN_PAD), batch_spec(MV_DIM)),
        out_shape=(
            jax.ShapeDtypeStruct((bp, IN_PAD), jnp.float32),   # padded estimate
            jax.ShapeDtypeStruct((bp, MV_DIM), jnp.float32),   # packed mean || var
        ),
        compiler_params=pltpu.CompilerParams(
            dimension_semantics=("parallel",)),
        cost_estimate=pl.CostEstimate(
            flops=flops, transcendentals=bp * IN_PAD,
            bytes_accessed=bytes_accessed),
    )(xp, kparams["w_enc"], kparams["b_enc"], kparams["w_mv"], kparams["b_mv"],
      kparams["w_d1"], kparams["b_d1"], kparams["w_d2"], kparams["b_d2"], noise)

    est = est_p[:B, :IN_DIM]
    mean = mv[:B, :LATENT]
    var = mv[:B, LATENT:]
    return est, mean, var


def init_params(key):
    """f32 params in (in, out) layout (transpose of PyTorch's (out, in))."""
    ks = jax.random.split(key, 10)
    scale = 0.02

    def w(k, shape):
        return (scale * jax.random.normal(k, shape)).astype(jnp.float32)

    return {
        "w_enc": w(ks[0], (IN_DIM, HID_DIM)),
        "b_enc": w(ks[1], (1, HID_DIM)),
        "w_mu":  w(ks[2], (HID_DIM, LATENT)),
        "b_mu":  w(ks[3], (1, LATENT)),
        "w_var": w(ks[4], (HID_DIM, LATENT)),
        "b_var": w(ks[5], (1, LATENT)),
        "w_d1":  w(ks[6], (LATENT, HID_DIM)),
        "b_d1":  w(ks[7], (1, HID_DIM)),
        "w_d2":  w(ks[8], (HID_DIM, IN_DIM)),
        "b_d2":  w(ks[9], (1, IN_DIM)),
    }


def reference_forward(x, params, noise):
    """Plain-JAX reference mirroring the PyTorch module, with weights rounded
    through bf16 (the kernel's weight precision) so comparisons are tight."""
    def f32(w):
        return w.astype(jnp.bfloat16).astype(jnp.float32)

    h = jnp.maximum(x @ f32(params["w_enc"]) + params["b_enc"], 0.0)
    mean = h @ f32(params["w_mu"]) + params["b_mu"]
    var = h @ f32(params["w_var"]) + params["b_var"]
    z = mean + noise * var
    d = jnp.maximum(z @ f32(params["w_d1"]) + params["b_d1"], 0.0)
    est = jax.nn.sigmoid(d @ f32(params["w_d2"]) + params["b_d2"])
    return est, mean, var


if __name__ == "__main__":
    key = jax.random.PRNGKey(0)
    k_param, k_x, k_noise = jax.random.split(key, 3)

    B = 256
    params = init_params(k_param)
    kparams = prepare_kernel_params(params)
    x = jax.random.uniform(k_x, (B, IN_DIM), dtype=jnp.float32)
    # Deterministic stand-in for torch.empty(latent_size).normal_(0, 1):
    # one noise row broadcast over the batch, exactly like the module.
    noise = jax.random.normal(k_noise, (1, LATENT), dtype=jnp.float32)

    # block_batch=128 -> grid=(2,): exercises the batch pipeline at small size.
    est, mean, var = vae_forward(x, kparams, noise, block_batch=128)
    jax.block_until_ready((est, mean, var))

    est_r, mean_r, var_r = reference_forward(x, params, noise)
    assert est.shape == (B, IN_DIM)
    assert mean.shape == (B, LATENT) and var.shape == (B, LATENT)
    assert float(jnp.max(jnp.abs(mean - mean_r))) < 3e-3
    assert float(jnp.max(jnp.abs(var - var_r))) < 3e-3
    assert float(jnp.max(jnp.abs(est - est_r))) < 1e-2

    print("KERNEL_OK")
</pallas_src>

<mosaic_0001>
module attributes {stable_mosaic.version = 11 : i64} {
  func.func @vae_fwd_kernel(%arg0: i32, %arg1: memref<128x896xf32, #tpu.memory_space<vmem>>, %arg2: memref<896x400xbf16, #tpu.memory_space<vmem>>, %arg3: memref<1x400xf32, #tpu.memory_space<vmem>>, %arg4: memref<400x40xbf16, #tpu.memory_space<vmem>>, %arg5: memref<1x40xf32, #tpu.memory_space<vmem>>, %arg6: memref<20x400xbf16, #tpu.memory_space<vmem>>, %arg7: memref<1x400xf32, #tpu.memory_space<vmem>>, %arg8: memref<400x896xbf16, #tpu.memory_space<vmem>>, %arg9: memref<1x896xf32, #tpu.memory_space<vmem>>, %arg10: memref<1x20xf32, #tpu.memory_space<vmem>>, %arg11: memref<128x896xf32, #tpu.memory_space<vmem>>, %arg12: memref<128x40xf32, #tpu.memory_space<vmem>>) attributes {dimension_semantics = [#tpu.dimension_semantics<parallel>], iteration_bounds = array<i64: 2>, scalar_prefetch = 0 : i64, scratch_operands = 0 : i64, tpu.core_type = #tpu.core_type<tc>, window_params = [{transform_indices = @transform_0, window_bounds = array<i64: 128, 896>}, {pipeline_mode = #tpu.pipeline_mode<synchronous>, transform_indices = @transform_1, window_bounds = array<i64: 896, 400>}, {pipeline_mode = #tpu.pipeline_mode<synchronous>, transform_indices = @transform_2, window_bounds = array<i64: 1, 400>}, {pipeline_mode = #tpu.pipeline_mode<synchronous>, transform_indices = @transform_3, window_bounds = array<i64: 400, 40>}, {pipeline_mode = #tpu.pipeline_mode<synchronous>, transform_indices = @transform_4, window_bounds = array<i64: 1, 40>}, {pipeline_mode = #tpu.pipeline_mode<synchronous>, transform_indices = @transform_5, window_bounds = array<i64: 20, 400>}, {pipeline_mode = #tpu.pipeline_mode<synchronous>, transform_indices = @transform_6, window_bounds = array<i64: 1, 400>}, {pipeline_mode = #tpu.pipeline_mode<synchronous>, transform_indices = @transform_7, window_bounds = array<i64: 400, 896>}, {pipeline_mode = #tpu.pipeline_mode<synchronous>, transform_indices = @transform_8, window_bounds = array<i64: 1, 896>}, {pipeline_mode = #tpu.pipeline_mode<synchronous>, transform_indices = @transform_9, window_bounds = array<i64: 1, 20>}, {transform_indices = @transform_10, window_bounds = array<i64: 128, 896>}, {transform_indices = @transform_11, window_bounds = array<i64: 128, 40>}]} {
    %c0 = arith.constant 0 : index
    %c0_0 = arith.constant 0 : index
    %0 = vector.load %arg1[%c0, %c0_0] : memref<128x896xf32, #tpu.memory_space<vmem>>, vector<128x896xf32>
    %1 = arith.truncf %0 : vector<128x896xf32> to vector<128x896xbf16>
    %c0_1 = arith.constant 0 : index
    %c0_2 = arith.constant 0 : index
    %2 = vector.load %arg2[%c0_1, %c0_2] : memref<896x400xbf16, #tpu.memory_space<vmem>>, vector<896x400xbf16>
    %cst = arith.constant dense<0.000000e+00> : vector<128x400xf32>
    %3 = tpu.matmul %1, %2, %cst {dimension_numbers = #tpu.dot_dimension_numbers<[1], [0], [0], [1], [0, 0, 1, 1], [], []>} : vector<128x896xbf16>, vector<896x400xbf16>, vector<128x400xf32> -> vector<128x400xf32>
    %c0_3 = arith.constant 0 : index
    %c0_4 = arith.constant 0 : index
    %4 = vector.load %arg3[%c0_3, %c0_4] : memref<1x400xf32, #tpu.memory_space<vmem>>, vector<1x400xf32>
    %5 = vector.broadcast %4 : vector<1x400xf32> to vector<128x400xf32>
    %6 = arith.addf %3, %5 : vector<128x400xf32>
    %cst_5 = arith.constant 0.000000e+00 : f32
    %7 = vector.broadcast %cst_5 : f32 to vector<128x400xf32>
    %8 = arith.maximumf %6, %7 : vector<128x400xf32>
    %9 = arith.truncf %8 : vector<128x400xf32> to vector<128x400xbf16>
    %c0_6 = arith.constant 0 : index
    %c0_7 = arith.constant 0 : index
    %10 = vector.load %arg4[%c0_6, %c0_7] : memref<400x40xbf16, #tpu.memory_space<vmem>>, vector<400x40xbf16>
    %cst_8 = arith.constant dense<0.000000e+00> : vector<128x40xf32>
    %11 = tpu.matmul %9, %10, %cst_8 {dimension_numbers = #tpu.dot_dimension_numbers<[1], [0], [0], [1], [0, 0, 1, 1], [], []>} : vector<128x400xbf16>, vector<400x40xbf16>, vector<128x40xf32> -> vector<128x40xf32>
    %c0_9 = arith.constant 0 : index
    %c0_10 = arith.constant 0 : index
    %12 = vector.load %arg5[%c0_9, %c0_10] : memref<1x40xf32, #tpu.memory_space<vmem>>, vector<1x40xf32>
    %13 = vector.broadcast %12 : vector<1x40xf32> to vector<128x40xf32>
    %14 = arith.addf %11, %13 : vector<128x40xf32>
    %15 = vector.extract_strided_slice %14 {offsets = [0, 0], sizes = [128, 20], strides = [1, 1]} : vector<128x40xf32> to vector<128x20xf32>
    %16 = vector.extract_strided_slice %14 {offsets = [0, 20], sizes = [128, 20], strides = [1, 1]} : vector<128x40xf32> to vector<128x20xf32>
    %c0_11 = arith.constant 0 : index
    %c0_12 = arith.constant 0 : index
    %17 = vector.load %arg10[%c0_11, %c0_12] : memref<1x20xf32, #tpu.memory_space<vmem>>, vector<1x20xf32>
    %18 = vector.broadcast %17 : vector<1x20xf32> to vector<128x20xf32>
    %19 = arith.mulf %18, %16 : vector<128x20xf32>
    %20 = arith.addf %15, %19 : vector<128x20xf32>
    %21 = arith.truncf %20 : vector<128x20xf32> to vector<128x20xbf16>
    %c0_13 = arith.constant 0 : index
    %c0_14 = arith.constant 0 : index
    %22 = vector.load %arg6[%c0_13, %c0_14] : memref<20x400xbf16, #tpu.memory_space<vmem>>, vector<20x400xbf16>
    %cst_15 = arith.constant dense<0.000000e+00> : vector<128x400xf32>
    %23 = tpu.matmul %21, %22, %cst_15 {dimension_numbers = #tpu.dot_dimension_numbers<[1], [0], [0], [1], [0, 0, 1, 1], [], []>} : vector<128x20xbf16>, vector<20x400xbf16>, vector<128x400xf32> -> vector<128x400xf32>
    %c0_16 = arith.constant 0 : index
    %c0_17 = arith.constant 0 : index
    %24 = vector.load %arg7[%c0_16, %c0_17] : memref<1x400xf32, #tpu.memory_space<vmem>>, vector<1x400xf32>
    %25 = vector.broadcast %24 : vector<1x400xf32> to vector<128x400xf32>
    %26 = arith.addf %23, %25 : vector<128x400xf32>
    %cst_18 = arith.constant 0.000000e+00 : f32
    %27 = vector.broadcast %cst_18 : f32 to vector<128x400xf32>
    %28 = arith.maximumf %26, %27 : vector<128x400xf32>
    %29 = arith.truncf %28 : vector<128x400xf32> to vector<128x400xbf16>
    %c0_19 = arith.constant 0 : index
    %c0_20 = arith.constant 0 : index
    %30 = vector.load %arg8[%c0_19, %c0_20] : memref<400x896xbf16, #tpu.memory_space<vmem>>, vector<400x896xbf16>
    %cst_21 = arith.constant dense<0.000000e+00> : vector<128x896xf32>
    %31 = tpu.matmul %29, %30, %cst_21 {dimension_numbers = #tpu.dot_dimension_numbers<[1], [0], [0], [1], [0, 0, 1, 1], [], []>} : vector<128x400xbf16>, vector<400x896xbf16>, vector<128x896xf32> -> vector<128x896xf32>
    %c0_22 = arith.constant 0 : index
    %c0_23 = arith.constant 0 : index
    %32 = vector.load %arg9[%c0_22, %c0_23] : memref<1x896xf32, #tpu.memory_space<vmem>>, vector<1x896xf32>
    %33 = vector.broadcast %32 : vector<1x896xf32> to vector<128x896xf32>
    %34 = arith.addf %31, %33 : vector<128x896xf32>
    %cst_24 = arith.constant 0.000000e+00 : f32
    %35 = vector.broadcast %cst_24 : f32 to vector<128x896xf32>
    %36 = arith.subf %35, %34 : vector<128x896xf32>
    %37 = math.exp %36 : vector<128x896xf32>
    %cst_25 = arith.constant 1.000000e+00 : f32
    %38 = vector.broadcast %cst_25 : f32 to vector<128x896xf32>
    %39 = arith.addf %38, %37 : vector<128x896xf32>
    %40 = tpu.reciprocal %39 {approx = true} : vector<128x896xf32> -> vector<128x896xf32>
    %c0_26 = arith.constant 0 : index
    %c0_27 = arith.constant 0 : index
    %41 = vector.load %arg11[%c0_26, %c0_27] : memref<128x896xf32, #tpu.memory_space<vmem>>, vector<128x896xf32>
    tpu.vector_store %arg11[%c0_26, %c0_27], %40 {strides = array<i32>} : memref<128x896xf32, #tpu.memory_space<vmem>>, vector<128x896xf32>,
    %c0_28 = arith.constant 0 : index
    %c0_29 = arith.constant 0 : index
    %42 = vector.load %arg12[%c0_28, %c0_29] : memref<128x40xf32, #tpu.memory_space<vmem>>, vector<128x40xf32>
    tpu.vector_store %arg12[%c0_28, %c0_29], %14 {strides = array<i32>} : memref<128x40xf32, #tpu.memory_space<vmem>>, vector<128x40xf32>,
    return
  }
  func.func @transform_0(%arg0: i32) -> (i32, i32) {
    %c0_i32 = arith.constant 0 : i32
    %c0_i32_0 = arith.constant 0 : i32
    return %arg0, %c0_i32 : i32, i32
  }
  func.func @transform_1(%arg0: i32) -> (i32, i32) {
    %c0_i32 = arith.constant 0 : i32
    %c0_i32_0 = arith.constant 0 : i32
    %c0_i32_1 = arith.constant 0 : i32
    return %c0_i32, %c0_i32_0 : i32, i32
  }
  func.func @transform_2(%arg0: i32) -> (i32, i32) {
    %c0_i32 = arith.constant 0 : i32
    %c0_i32_0 = arith.constant 0 : i32
    %c0_i32_1 = arith.constant 0 : i32
    return %c0_i32, %c0_i32_0 : i32, i32
  }
  func.func @transform_3(%arg0: i32) -> (i32, i32) {
    %c0_i32 = arith.constant 0 : i32
    %c0_i32_0 = arith.constant 0 : i32
    %c0_i32_1 = arith.constant 0 : i32
    return %c0_i32, %c0_i32_0 : i32, i32
  }
  func.func @transform_4(%arg0: i32) -> (i32, i32) {
    %c0_i32 = arith.constant 0 : i32
    %c0_i32_0 = arith.constant 0 : i32
    %c0_i32_1 = arith.constant 0 : i32
    return %c0_i32, %c0_i32_0 : i32, i32
  }
  func.func @transform_5(%arg0: i32) -> (i32, i32) {
    %c0_i32 = arith.constant 0 : i32
    %c0_i32_0 = arith.constant 0 : i32
    %c0_i32_1 = arith.constant 0 : i32
    return %c0_i32, %c0_i32_0 : i32, i32
  }
  func.func @transform_6(%arg0: i32) -> (i32, i32) {
    %c0_i32 = arith.constant 0 : i32
    %c0_i32_0 = arith.constant 0 : i32
    %c0_i32_1 = arith.constant 0 : i32
    return %c0_i32, %c0_i32_0 : i32, i32
  }
  func.func @transform_7(%arg0: i32) -> (i32, i32) {
    %c0_i32 = arith.constant 0 : i32
    %c0_i32_0 = arith.constant 0 : i32
    %c0_i32_1 = arith.constant 0 : i32
    return %c0_i32, %c0_i32_0 : i32, i32
  }
  func.func @transform_8(%arg0: i32) -> (i32, i32) {
    %c0_i32 = arith.constant 0 : i32
    %c0_i32_0 = arith.constant 0 : i32
    %c0_i32_1 = arith.constant 0 : i32
    return %c0_i32, %c0_i32_0 : i32, i32
  }
  func.func @transform_9(%arg0: i32) -> (i32, i32) {
    %c0_i32 = arith.constant 0 : i32
    %c0_i32_0 = arith.constant 0 : i32
    %c0_i32_1 = arith.constant 0 : i32
    return %c0_i32, %c0_i32_0 : i32, i32
  }
  func.func @transform_10(%arg0: i32) -> (i32, i32) {
    %c0_i32 = arith.constant 0 : i32
    %c0_i32_0 = arith.constant 0 : i32
    return %arg0, %c0_i32 : i32, i32
  }
  func.func @transform_11(%arg0: i32) -> (i32, i32) {
    %c0_i32 = arith.constant 0 : i32
    %c0_i32_0 = arith.constant 0 : i32
    return %arg0, %c0_i32 : i32, i32
  }
}

</mosaic_0001>

<llo_original>
// kernel: tpu_custom_call.1
$region0: #{tpu_custom_call.1}
  #allocation0 [shape = 'u32[]', space=smem, size = 0x4, offset = 0x4, fixed_abs, tag = 'smem constant byte address 0x4 - core index']
  #allocation1 [shape = 'u32[144,128]{1,0:T(1,128)}', space=vmem, size = 0x12000, scoped, tag = 'internal scratch']
  %s0 = inlined_call_operand.vmem [shape: f32[256,896], index: 0, kind: input, shape index: {}]
  %s1 = inlined_call_operand.vmem [shape: bf16[896,400], index: 1, kind: input, shape index: {}]
  %s2 = inlined_call_operand.vmem [shape: f32[1,400], index: 2, kind: input, shape index: {}]
  %s3 = inlined_call_operand.vmem [shape: bf16[400,40], index: 3, kind: input, shape index: {}]
  %s4 = inlined_call_operand.vmem [shape: f32[1,40], index: 4, kind: input, shape index: {}]
  %s5 = inlined_call_operand.vmem [shape: bf16[20,400], index: 5, kind: input, shape index: {}]
  %s6 = inlined_call_operand.vmem [shape: f32[1,400], index: 6, kind: input, shape index: {}]
  %s7 = inlined_call_operand.vmem [shape: bf16[400,896], index: 7, kind: input, shape index: {}]
  %s8 = inlined_call_operand.vmem [shape: f32[1,896], index: 8, kind: input, shape index: {}]
  %s9 = inlined_call_operand.vmem [shape: f32[1,20], index: 9, kind: input, shape index: {}]
  %s10 = inlined_call_operand.hbm [shape: f32[256,896], index: 10, kind: output, shape index: {0}]
  %s11 = inlined_call_operand.vmem [shape: f32[256,40], index: 11, kind: output, shape index: {1}]
  %12 = xla_tuple %s10, %s11
  %s13 = sld [smem:[#allocation0]]
  $region81: #{tpu_custom_call.1} parent=0
    _
  %s15 = ssub.s32 1, %s13
  %s16 = scalar_select 0, %s15, %s13
  $region1: #{tpu_custom_call.1} parent=0
    #allocation2 [shape = 'u8[917504]{0}', space=vmem, size = 0xe0000, scoped, tag = 'output window, operand 0']
    #allocation3 [shape = 's32[2]{0}', space=sflag, size = 0x8, scoped, tag = 'scoped memory for tpu_custom_call.1']
    %17 = vsyncpa [#allocation3], 0
    %s18 = scalar_lea.sflag [#allocation3], 1
    %19 = vsyncpa %s18, 0
    loop: start=0, step=1, limit=4
    $region2: #{tpu_custom_call.1} parent=1 // loop_pre_header
      _
    $region3: #{tpu_custom_call.1} parent=1 // loop_header
      %s21 = sphi 0, %s25
      %p22 = scmp.ge.s32.totalorder %s21, 4
      %s31 = sphi 0, %s33
      %s34 = sphi 0, %s31
      %s35 = sphi 0, %s34
      %s51 = sphi 0, %s35
      %s55 = sphi 0, %s55
      %s57 = sphi 0, %s55
      %s58 = sphi 0, %s57
      %s72 = sphi 0, %s58
      %s76 = sphi 0, %s76
      %s78 = sphi 0, %s76
      %s79 = sphi 0, %s78
      %s93 = sphi 0, %s79
      %s97 = sphi 0, %s97
      %s99 = sphi 0, %s97
      %s100 = sphi 0, %s99
      %s114 = sphi 0, %s100
      %s118 = sphi 0, %s118
      %s120 = sphi 0, %s118
      %s121 = sphi 0, %s120
      %s135 = sphi 0, %s121
      %s139 = sphi 0, %s139
      %s141 = sphi 0, %s139
      %s142 = sphi 0, %s141
      %s156 = sphi 0, %s142
      %s160 = sphi 0, %s160
      %s162 = sphi 0, %s160
      %s163 = sphi 0, %s162
      %s177 = sphi 0, %s163
      %s181 = sphi 0, %s181
      %s183 = sphi 0, %s181
      %s184 = sphi 0, %s183
      %s198 = sphi 0, %s184
      %s202 = sphi 0, %s202
      %s204 = sphi 0, %s202
      %s205 = sphi 0, %s204
      %s219 = sphi 0, %s205
      %s223 = sphi 0, %s223
      %s225 = sphi 0, %s223
      %s226 = sphi 0, %s225
      %s240 = sphi 0, %s226
      %s246 = sphi 0, %s248
      %s249 = sphi 0, %s246
      %s250 = sphi 0, %s249
      %s266 = sphi 0, %s250
      %s272 = sphi 0, %s274
      %s275 = sphi 0, %s272
      %s276 = sphi 0, %s275
      %s292 = sphi 0, %s276
    $region4: #{tpu_custom_call.1} parent=1 // loop_header_branch
      %24 = sbr.rel (%p22) target = $region8
    $region5: #{tpu_custom_call.1} parent=1 // loop_body
      %s26 = ssub.s32 %s21, 1
      %s27 = ssub.s32 %s21, 2
      %s28 = sadd.s32 %s21, 1
      %s29 = ssub.s32 %s21, %s28
      %p30 = scmp.eq.s32.totalorder %s29, 0
      %s32 = sadd.s32 %s31, 1
      %s33 = scalar_select %p30, %s31, %s32
      %p36 = pneg %p30
      %p37 = scmp.eq.s32.totalorder %s21, 1
      %p38 = por %p36, %p37
      %p39 = scmp.ne.s32.totalorder %s31, %s34
      %p40 = scmp.eq.s32.totalorder %s21, 0
      %p41 = por %p39, %p40
      %p42 = scmp.ne.s32.totalorder %s31, %s34
      %p43 = scmp.eq.s32.totalorder %s26, 1
      %p44 = por %p42, %p43
      %p45 = scmp.ne.s32.totalorder %s34, %s35
      %p46 = scmp.eq.s32.totalorder %s26, 0
      %p47 = por %p45, %p46
      %p48 = scmp.ne.s32.totalorder %s34, %s35
      %p49 = scmp.eq.s32.totalorder %s27, 1
      %p50 = por %p48, %p49
      %p52 = scmp.ne.s32.totalorder %s35, %s51
      %p53 = scmp.eq.s32.totalorder %s27, 0
      %p54 = por %p52, %p53
      %s56 = sadd.s32 %s55, 1
      %p59 = scmp.eq.s32.totalorder %s21, 1
      %p60 = scmp.ne.s32.totalorder %s55, %s57
      %p61 = scmp.eq.s32.totalorder %s21, 0
      %p62 = por %p60, %p61
      %p63 = scmp.ne.s32.totalorder %s55, %s57
      %p64 = scmp.eq.s32.totalorder %s26, 1
      %p65 = por %p63, %p64
      %p66 = scmp.ne.s32.totalorder %s57, %s58
      %p67 = scmp.eq.s32.totalorder %s26, 0
      %p68 = por %p66, %p67
      %p69 = scmp.ne.s32.totalorder %s57, %s58
      %p70 = scmp.eq.s32.totalorder %s27, 1
      %p71 = por %p69, %p70
      %p73 = scmp.ne.s32.totalorder %s58, %s72
      %p74 = scmp.eq.s32.totalorder %s27, 0
      %p75 = por %p73, %p74
      %s77 = sadd.s32 %s76, 1
      %p80 = scmp.eq.s32.totalorder %s21, 1
      %p81 = scmp.ne.s32.totalorder %s76, %s78
      %p82 = scmp.eq.s32.totalorder %s21, 0
      %p83 = por %p81, %p82
      %p84 = scmp.ne.s32.totalorder %s76, %s78
      %p85 = scmp.eq.s32.totalorder %s26, 1
      %p86 = por %p84, %p85
      %p87 = scmp.ne.s32.totalorder %s78, %s79
      %p88 = scmp.eq.s32.totalorder %s26, 0
      %p89 = por %p87, %p88
      %p90 = scmp.ne.s32.totalorder %s78, %s79
      %p91 = scmp.eq.s32.totalorder %s27, 1
      %p92 = por %p90, %p91
      %p94 = scmp.ne.s32.totalorder %s79, %s93
      %p95 = scmp.eq.s32.totalorder %s27, 0
      %p96 = por %p94, %p95
      %s98 = sadd.s32 %s97, 1
      %p101 = scmp.eq.s32.totalorder %s21, 1
      %p102 = scmp.ne.s32.totalorder %s97, %s99
      %p103 = scmp.eq.s32.totalorder %s21, 0
      %p104 = por %p102, %p103
      %p105 = scmp.ne.s32.totalorder %s97, %s99
      %p106 = scmp.eq.s32.totalorder %s26, 1
      %p107 = por %p105, %p106
      %p108 = scmp.ne.s32.totalorder %s99, %s100
      %p109 = scmp.eq.s32.totalorder %s26, 0
      %p110 = por %p108, %p109
      %p111 = scmp.ne.s32.totalorder %s99, %s100
      %p112 = scmp.eq.s32.totalorder %s27, 1
      %p113 = por %p111, %p112
      %p115 = scmp.ne.s32.totalorder %s100, %s114
      %p116 = scmp.eq.s32.totalorder %s27, 0
      %p117 = por %p115, %p116
      %s119 = sadd.s32 %s118, 1
      %p122 = scmp.eq.s32.totalorder %s21, 1
      %p123 = scmp.ne.s32.totalorder %s118, %s120
      %p124 = scmp.eq.s32.totalorder %s21, 0
      %p125 = por %p123, %p124
      %p126 = scmp.ne.s32.totalorder %s118, %s120
      %p127 = scmp.eq.s32.totalorder %s26, 1
      %p128 = por %p126, %p127
      %p129 = scmp.ne.s32.totalorder %s120, %s121
      %p130 = scmp.eq.s32.totalorder %s26, 0
      %p131 = por %p129, %p130
      %p132 = scmp.ne.s32.totalorder %s120, %s121
      %p133 = scmp.eq.s32.totalorder %s27, 1
      %p134 = por %p132, %p133
      %p136 = scmp.ne.s32.totalorder %s121, %s135
      %p137 = scmp.eq.s32.totalorder %s27, 0
      %p138 = por %p136, %p137
      %s140 = sadd.s32 %s139, 1
      %p143 = scmp.eq.s32.totalorder %s21, 1
      %p144 = scmp.ne.s32.totalorder %s139, %s141
      %p145 = scmp.eq.s32.totalorder %s21, 0
      %p146 = por %p144, %p145
      %p147 = scmp.ne.s32.totalorder %s139, %s141
      %p148 = scmp.eq.s32.totalorder %s26, 1
      %p149 = por %p147, %p148
      %p150 = scmp.ne.s32.totalorder %s141, %s142
      %p151 = scmp.eq.s32.totalorder %s26, 0
      %p152 = por %p150, %p151
      %p153 = scmp.ne.s32.totalorder %s141, %s142
      %p154 = scmp.eq.s32.totalorder %s27, 1
      %p155 = por %p153, %p154
      %p157 = scmp.ne.s32.totalorder %s142, %s156
      %p158 = scmp.eq.s32.totalorder %s27, 0
      %p159 = por %p157, %p158
      %s161 = sadd.s32 %s160, 1
      %p164 = scmp.eq.s32.totalorder %s21, 1
      %p165 = scmp.ne.s32.totalorder %s160, %s162
      %p166 = scmp.eq.s32.totalorder %s21, 0
      %p167 = por %p165, %p166
      %p168 = scmp.ne.s32.totalorder %s160, %s162
      %p169 = scmp.eq.s32.totalorder %s26, 1
      %p170 = por %p168, %p169
      %p171 = scmp.ne.s32.totalorder %s162, %s163
      %p172 = scmp.eq.s32.totalorder %s26, 0
      %p173 = por %p171, %p172
      %p174 = scmp.ne.s32.totalorder %s162, %s163
      %p175 = scmp.eq.s32.totalorder %s27, 1
      %p176 = por %p174, %p175
      %p178 = scmp.ne.s32.totalorder %s163, %s177
      %p179 = scmp.eq.s32.totalorder %s27, 0
      %p180 = por %p178, %p179
      %s182 = sadd.s32 %s181, 1
      %p185 = scmp.eq.s32.totalorder %s21, 1
      %p186 = scmp.ne.s32.totalorder %s181, %s183
      %p187 = scmp.eq.s32.totalorder %s21, 0
      %p188 = por %p186, %p187
      %p189 = scmp.ne.s32.totalorder %s181, %s183
      %p190 = scmp.eq.s32.totalorder %s26, 1
      %p191 = por %p189, %p190
      %p192 = scmp.ne.s32.totalorder %s183, %s184
      %p193 = scmp.eq.s32.totalorder %s26, 0
      %p194 = por %p192, %p193
      %p195 = scmp.ne.s32.totalorder %s183, %s184
      %p196 = scmp.eq.s32.totalorder %s27, 1
      %p197 = por %p195, %p196
      %p199 = scmp.ne.s32.totalorder %s184, %s198
      %p200 = scmp.eq.s32.totalorder %s27, 0
      %p201 = por %p199, %p200
      %s203 = sadd.s32 %s202, 1
      %p206 = scmp.eq.s32.totalorder %s21, 1
      %p207 = scmp.ne.s32.totalorder %s202, %s204
      %p208 = scmp.eq.s32.totalorder %s21, 0
      %p209 = por %p207, %p208
      %p210 = scmp.ne.s32.totalorder %s202, %s204
      %p211 = scmp.eq.s32.totalorder %s26, 1
      %p212 = por %p210, %p211
      %p213 = scmp.ne.s32.totalorder %s204, %s205
      %p214 = scmp.eq.s32.totalorder %s26, 0
      %p215 = por %p213, %p214
      %p216 = scmp.ne.s32.totalorder %s204, %s205
      %p217 = scmp.eq.s32.totalorder %s27, 1
      %p218 = por %p216, %p217
      %p220 = scmp.ne.s32.totalorder %s205, %s219
      %p221 = scmp.eq.s32.totalorder %s27, 0
      %p222 = por %p220, %p221
      %s224 = sadd.s32 %s223, 1
      %p227 = scmp.eq.s32.totalorder %s21, 1
      %p228 = scmp.ne.s32.totalorder %s223, %s225
      %p229 = scmp.eq.s32.totalorder %s21, 0
      %p230 = por %p228, %p229
      %p231 = scmp.ne.s32.totalorder %s223, %s225
      %p232 = scmp.eq.s32.totalorder %s26, 1
      %p233 = por %p231, %p232
      %p234 = scmp.ne.s32.totalorder %s225, %s226
      %p235 = scmp.eq.s32.totalorder %s26, 0
      %p236 = por %p234, %p235
      %p237 = scmp.ne.s32.totalorder %s225, %s226
      %p238 = scmp.eq.s32.totalorder %s27, 1
      %p239 = por %p237, %p238
      %p241 = scmp.ne.s32.totalorder %s226, %s240
      %p242 = scmp.eq.s32.totalorder %s27, 0
      %p243 = por %p241, %p242
      %s244 = ssub.s32 %s21, %s28
      %p245 = scmp.eq.s32.totalorder %s244, 0
      %s247 = sadd.s32 %s246, 1
      %s248 = scalar_select %p245, %s246, %s247
      %p251 = pneg %p245
      %p252 = scmp.eq.s32.totalorder %s21, 1
      %p253 = por %p251, %p252
      %p254 = scmp.ne.s32.totalorder %s246, %s249
      %p255 = scmp.eq.s32.totalorder %s21, 0
      %p256 = por %p254, %p255
      %p257 = scmp.ne.s32.totalorder %s246, %s249
      %p258 = scmp.eq.s32.totalorder %s26, 1
      %p259 = por %p257, %p258
      %p260 = scmp.ne.s32.totalorder %s249, %s250
      %p261 = scmp.eq.s32.totalorder %s26, 0
      %p262 = por %p260, %p261
      %p263 = scmp.ne.s32.totalorder %s249, %s250
      %p264 = scmp.eq.s32.totalorder %s27, 1
      %p265 = por %p263, %p264
      %p267 = scmp.ne.s32.totalorder %s250, %s266
      %p268 = scmp.eq.s32.totalorder %s27, 0
      %p269 = por %p267, %p268
      %s270 = ssub.s32 %s21, %s28
      %p271 = scmp.eq.s32.totalorder %s270, 0
      %s273 = sadd.s32 %s272, 1
      %s274 = scalar_select %p271, %s272, %s273
      %p277 = pneg %p271
      %p278 = scmp.eq.s32.totalorder %s21, 1
      %p279 = por %p277, %p278
      %p280 = scmp.ne.s32.totalorder %s272, %s275
      %p281 = scmp.eq.s32.totalorder %s21, 0
      %p282 = por %p280, %p281
      %p283 = scmp.ne.s32.totalorder %s272, %s275
      %p284 = scmp.eq.s32.totalorder %s26, 1
      %p285 = por %p283, %p284
      %p286 = scmp.ne.s32.totalorder %s275, %s276
      %p287 = scmp.eq.s32.totalorder %s26, 0
      %p288 = por %p286, %p287
      %p289 = scmp.ne.s32.totalorder %s275, %s276
      %p290 = scmp.eq.s32.totalorder %s27, 1
      %p291 = por %p289, %p290
      %p293 = scmp.ne.s32.totalorder %s276, %s292
      %p294 = scmp.eq.s32.totalorder %s27, 0
      %p295 = por %p293, %p294
      %p296 = scmp.le.s32.totalorder 1, %s21
      %p297 = scmp.lt.s32.totalorder %s21, 3
      %p298 = pnand %p296, %p297
      %p299 = pneg %p298
      // Predicated region
      $region9: #{tpu_custom_call.1} parent=5 // pred_check
        _
      $region10: #{tpu_custom_call.1} parent=5 // pred_check_branch
        %301 = sbr.rel (%p298) target = $region12
      $region11: #{tpu_custom_call.1} parent=5 // pred_region
        %s302 = ssub.s32 %s21, 1
        // Predicated region
        $region13: #{tpu_custom_call.1} parent=11 // pred_check
          %p303 = pneg %p68
        $region14: #{tpu_custom_call.1} parent=11 // pred_check_branch
          %305 = sbr.rel (%p303) target = $region16
        $region15: #{tpu_custom_call.1} parent=11 // pred_region
          _
        $region16: #{tpu_custom_call.1} parent=11 // pred_fallthru
          _
        // Predicated region
        $region17: #{tpu_custom_call.1} parent=11 // pred_check
          %p306 = pneg %p89
        $region18: #{tpu_custom_call.1} parent=11 // pred_check_branch
          %308 = sbr.rel (%p306) target = $region20
        $region19: #{tpu_custom_call.1} parent=11 // pred_region
          _
        $region20: #{tpu_custom_call.1} parent=11 // pred_fallthru
          _
        // Predicated region
        $region21: #{tpu_custom_call.1} parent=11 // pred_check
          %p309 = pneg %p110
        $region22: #{tpu_custom_call.1} parent=11 // pred_check_branch
          %311 = sbr.rel (%p309) target = $region24
        $region23: #{tpu_custom_call.1} parent=11 // pred_region
          _
        $region24: #{tpu_custom_call.1} parent=11 // pred_fallthru
          _
        // Predicated region
        $region25: #{tpu_custom_call.1} parent=11 // pred_check
          %p312 = pneg %p131
        $region26: #{tpu_custom_call.1} parent=11 // pred_check_branch
          %314 = sbr.rel (%p312) target = $region28
        $region27: #{tpu_custom_call.1} parent=11 // pred_region
          _
        $region28: #{tpu_custom_call.1} parent=11 // pred_fallthru
          _
        // Predicated region
        $region29: #{tpu_custom_call.1} parent=11 // pred_check
          %p315 = pneg %p152
        $region30: #{tpu_custom_call.1} parent=11 // pred_check_branch
          %317 = sbr.rel (%p315) target = $region32
        $region31: #{tpu_custom_call.1} parent=11 // pred_region
          _
        $region32: #{tpu_custom_call.1} parent=11 // pred_fallthru
          _
        // Predicated region
        $region33: #{tpu_custom_call.1} parent=11 // pred_check
          %p318 = pneg %p173
        $region34: #{tpu_custom_call.1} parent=11 // pred_check_branch
          %320 = sbr.rel (%p318) target = $region36
        $region35: #{tpu_custom_call.1} parent=11 // pred_region
          _
        $region36: #{tpu_custom_call.1} parent=11 // pred_fallthru
          _
        // Predicated region
        $region37: #{tpu_custom_call.1} parent=11 // pred_check
          %p321 = pneg %p194
        $region38: #{tpu_custom_call.1} parent=11 // pred_check_branch
          %323 = sbr.rel (%p321) target = $region40
        $region39: #{tpu_custom_call.1} parent=11 // pred_region
          _
        $region40: #{tpu_custom_call.1} parent=11 // pred_fallthru
          _
        // Predicated region
        $region41: #{tpu_custom_call.1} parent=11 // pred_check
          %p324 = pneg %p215
        $region42: #{tpu_custom_call.1} parent=11 // pred_check_branch
          %326 = sbr.rel (%p324) target = $region44
        $region43: #{tpu_custom_call.1} parent=11 // pred_region
          _
        $region44: #{tpu_custom_call.1} parent=11 // pred_fallthru
          _
        // Predicated region
        $region45: #{tpu_custom_call.1} parent=11 // pred_check
          %p327 = pneg %p236
        $region46: #{tpu_custom_call.1} parent=11 // pred_check_branch
          %329 = sbr.rel (%p327) target = $region48
        $region47: #{tpu_custom_call.1} parent=11 // pred_region
          _
        $region48: #{tpu_custom_call.1} parent=11 // pred_fallthru
          _
      $region12: #{tpu_custom_call.1} parent=5 // pred_fallthru
        _
      %p330 = scmp.lt.s32.totalorder %s21, 2
      // Predicated region
      $region49: #{tpu_custom_call.1} parent=5 // pred_check
        %p331 = pneg %p330
      $region50: #{tpu_custom_call.1} parent=5 // pred_check_branch
        %333 = sbr.rel (%p331) target = $region52
      $region51: #{tpu_custom_call.1} parent=5 // pred_region
        // Predicated region
        $region53: #{tpu_custom_call.1} parent=51 // pred_check
          %p334 = pneg %p41
        $region54: #{tpu_custom_call.1} parent=51 // pred_check_branch
          %336 = sbr.rel (%p334) target = $region56
        $region55: #{tpu_custom_call.1} parent=51 // pred_region
          %s337 = smul.u32 16, %s21
          %p338 = scmp.lt.s32.totalorder %s337, 31
          %s339 = scalar_select %p338, %s337, 31
          %s340 = smul.addr %s339, 7
          %s341 = smul.addr %s340, 8
          %s342 = scalar_lea.vmem %s0, %s341
          %s343 = smul.u32 16, %s21
        $region56: #{tpu_custom_call.1} parent=51 // pred_fallthru
          _
      $region52: #{tpu_custom_call.1} parent=5 // pred_fallthru
        _
      %p344 = scmp.le.s32.totalorder 1, %s21
      %p345 = scmp.lt.s32.totalorder %s21, 3
      %p346 = pnand %p344, %p345
      %p347 = pneg %p346
      // Predicated region
      $region57: #{tpu_custom_call.1} parent=5 // pred_check
        _
      $region58: #{tpu_custom_call.1} parent=5 // pred_check_branch
        %349 = sbr.rel (%p346) target = $region60
      $region59: #{tpu_custom_call.1} parent=5 // pred_region
        %s350 = ssub.s32 %s21, 1
        %s351 = smul.u32 16, %s26
        %p352 = scmp.lt.s32.totalorder %s351, 31
        %s353 = scalar_select %p352, %s351, 31
        %s354 = smul.addr %s353, 7
        %s355 = smul.addr %s354, 8
        %s356 = scalar_lea.vmem %s0, %s355
        %p357 = pneg %p47
        %p358 = pneg %p44
        %p359 = pneg %p68
        %p360 = pneg %p65
        %p361 = pneg %p89
        %p362 = pneg %p86
        %p363 = pneg %p110
        %p364 = pneg %p107
        %p365 = pneg %p131
        %p366 = pneg %p128
        %p367 = pneg %p152
        %p368 = pneg %p149
        %p369 = pneg %p173
        %p370 = pneg %p170
        %p371 = pneg %p194
        %p372 = pneg %p191
        %p373 = pneg %p215
        %p374 = pneg %p212
        %p375 = pneg %p236
        %p376 = pneg %p233
        %p377 = pneg %p262
        %p378 = pneg %p259
        %s379 = sand.u32 %s249, 1
        %s380 = scalar_lea.sflag [#allocation3], %s379
        %s381 = sand.u32 %s249, 1
        %s382 = smul.addr %s381, 896
        %s383 = scalar_lea.vmem [#allocation2], %s382
        %p384 = pneg %p288
        %p385 = pneg %p285
        %s386 = smul.u32 16, %s26
        %p387 = scmp.lt.s32.totalorder %s386, 31
        %s388 = scalar_select %p387, %s386, 31
        %s389 = smul.addr %s388, 8
        %s390 = scalar_lea.vmem %s11, %s389
        %s391 = smul.u32 16, %s26
        %p392 = scmp.lt.s32.totalorder %s391, 31
        %s393 = scalar_select %p392, %s391, 31
        %s394 = smul.addr %s393, 7
        %s395 = smul.addr %s394, 8
        %s396 = scalar_lea.vmem %s0, %s395
        %s397 = smul.u32 16, %s26
        %s398 = smul.u32 16, %s26
        %s399 = smul.u32 16, %s26
        %p400 = scmp.lt.s32.totalorder %s399, 31
        %s401 = scalar_select %p400, %s399, 31
        %s402 = smul.addr %s401, 8
        %s403 = scalar_lea.vmem %s11, %s402
        %s404 = smul.u32 16, %s26
        %v406 = vld [vmem:[%s396] sm:$0xff]
        %v407 = vld [vmem:[%s396 + $0x8] sm:$0xff]
        %v408 = vld [vmem:[%s396 + $0x10] sm:$0xff]
        %v409 = vld [vmem:[%s396 + $0x18] sm:$0xff]
        %v410 = vld [vmem:[%s396 + $0x20] sm:$0xff]
        %v411 = vld [vmem:[%s396 + $0x28] sm:$0xff]
        %v412 = vld [vmem:[%s396 + $0x30] sm:$0xff]
        %v413 = vld [vmem:[%s396 + $0x38] sm:$0xff]
        %v414 = vld [vmem:[%s396 + $0x40] sm:$0xff]
        %v415 = vld [vmem:[%s396 + $0x48] sm:$0xff]
        %v416 = vld [vmem:[%s396 + $0x50] sm:$0xff]
        %v417 = vld [vmem:[%s396 + $0x58] sm:$0xff]
        %v418 = vld [vmem:[%s396 + $0x60] sm:$0xff]
        %v419 = vld [vmem:[%s396 + $0x68] sm:$0xff]
        %v420 = vld [vmem:[%s396 + $0x70] sm:$0xff]
        %v421 = vld [vmem:[%s396 + $0x78] sm:$0xff]
        %v422 = vld [vmem:[%s396 + $0x80] sm:$0xff]
        %v423 = vld [vmem:[%s396 + $0x88] sm:$0xff]
        %v424 = vld [vmem:[%s396 + $0x90] sm:$0xff]
        %v425 = vld [vmem:[%s396 + $0x98] sm:$0xff]
        %v426 = vld [vmem:[%s396 + $0xa0] sm:$0xff]
        %v427 = vld [vmem:[%s396 + $0xa8] sm:$0xff]
        %v428 = vld [vmem:[%s396 + $0xb0] sm:$0xff]
        %v429 = vld [vmem:[%s396 + $0xb8] sm:$0xff]
        %v430 = vld [vmem:[%s396 + $0xc0] sm:$0xff]
        %v431 = vld [vmem:[%s396 + $0xc8] sm:$0xff]
        %v432 = vld [vmem:[%s396 + $0xd0] sm:$0xff]
        %v433 = vld [vmem:[%s396 + $0xd8] sm:$0xff]
        %v434 = vld [vmem:[%s396 + $0xe0] sm:$0xff]
        %v435 = vld [vmem:[%s396 + $0xe8] sm:$0xff]
        %v436 = vld [vmem:[%s396 + $0xf0] sm:$0xff]
        %v437 = vld [vmem:[%s396 + $0xf8] sm:$0xff]
        %v438 = vld [vmem:[%s396 + $0x100] sm:$0xff]
        %v439 = vld [vmem:[%s396 + $0x108] sm:$0xff]
        %v440 = vld [vmem:[%s396 + $0x110] sm:$0xff]
        %v441 = vld [vmem:[%s396 + $0x118] sm:$0xff]
        %v442 = vld [vmem:[%s396 + $0x120] sm:$0xff]
        %v443 = vld [vmem:[%s396 + $0x128] sm:$0xff]
        %v444 = vld [vmem:[%s396 + $0x130] sm:$0xff]
        %v445 = vld [vmem:[%s396 + $0x138] sm:$0xff]
        %v446 = vld [vmem:[%s396 + $0x140] sm:$0xff]
        %v447 = vld [vmem:[%s396 + $0x148] sm:$0xff]
        %v448 = vld [vmem:[%s396 + $0x150] sm:$0xff]
        %v449 = vld [vmem:[%s396 + $0x158] sm:$0xff]
        %v450 = vld [vmem:[%s396 + $0x160] sm:$0xff]
        %v451 = vld [vmem:[%s396 + $0x168] sm:$0xff]
        %v452 = vld [vmem:[%s396 + $0x170] sm:$0xff]
        %v453 = vld [vmem:[%s396 + $0x178] sm:$0xff]
        %v454 = vld [vmem:[%s396 + $0x180] sm:$0xff]
        %v455 = vld [vmem:[%s396 + $0x188] sm:$0xff]
        %v456 = vld [vmem:[%s396 + $0x190] sm:$0xff]
        %v457 = vld [vmem:[%s396 + $0x198] sm:$0xff]
        %v458 = vld [vmem:[%s396 + $0x1a0] sm:$0xff]
        %v459 = vld [vmem:[%s396 + $0x1a8] sm:$0xff]
        %v460 = vld [vmem:[%s396 + $0x1b0] sm:$0xff]
        %v461 = vld [vmem:[%s396 + $0x1b8] sm:$0xff]
        %v462 = vld [vmem:[%s396 + $0x1c0] sm:$0xff]
        %v463 = vld [vmem:[%s396 + $0x1c8] sm:$0xff]
        %v464 = vld [vmem:[%s396 + $0x1d0] sm:$0xff]
        %v465 = vld [vmem:[%s396 + $0x1d8] sm:$0xff]
        %v466 = vld [vmem:[%s396 + $0x1e0] sm:$0xff]
        %v467 = vld [vmem:[%s396 + $0x1e8] sm:$0xff]
        %v468 = vld [vmem:[%s396 + $0x1f0] sm:$0xff]
        %v469 = vld [vmem:[%s396 + $0x1f8] sm:$0xff]
        %v470 = vld [vmem:[%s396 + $0x200] sm:$0xff]
        %v471 = vld [vmem:[%s396 + $0x208] sm:$0xff]
        %v472 = vld [vmem:[%s396 + $0x210] sm:$0xff]
        %v473 = vld [vmem:[%s396 + $0x218] sm:$0xff]
        %v474 = vld [vmem:[%s396 + $0x220] sm:$0xff]
        %v475 = vld [vmem:[%s396 + $0x228] sm:$0xff]
        %v476 = vld [vmem:[%s396 + $0x230] sm:$0xff]
        %v477 = vld [vmem:[%s396 + $0x238] sm:$0xff]
        %v478 = vld [vmem:[%s396 + $0x240] sm:$0xff]
        %v479 = vld [vmem:[%s396 + $0x248] sm:$0xff]
        %v480 = vld [vmem:[%s396 + $0x250] sm:$0xff]
        %v481 = vld [vmem:[%s396 + $0x258] sm:$0xff]
        %v482 = vld [vmem:[%s396 + $0x260] sm:$0xff]
        %v483 = vld [vmem:[%s396 + $0x268] sm:$0xff]
        %v484 = vld [vmem:[%s396 + $0x270] sm:$0xff]
        %v485 = vld [vmem:[%s396 + $0x278] sm:$0xff]
        %v486 = vld [vmem:[%s396 + $0x280] sm:$0xff]
        %v487 = vld [vmem:[%s396 + $0x288] sm:$0xff]
        %v488 = vld [vmem:[%s396 + $0x290] sm:$0xff]
        %v489 = vld [vmem:[%s396 + $0x298] sm:$0xff]
        %v490 = vld [vmem:[%s396 + $0x2a0] sm:$0xff]
        %v491 = vld [vmem:[%s396 + $0x2a8] sm:$0xff]
        %v492 = vld [vmem:[%s396 + $0x2b0] sm:$0xff]
        %v493 = vld [vmem:[%s396 + $0x2b8] sm:$0xff]
        %v494 = vld [vmem:[%s396 + $0x2c0] sm:$0xff]
        %v495 = vld [vmem:[%s396 + $0x2c8] sm:$0xff]
        %v496 = vld [vmem:[%s396 + $0x2d0] sm:$0xff]
        %v497 = vld [vmem:[%s396 + $0x2d8] sm:$0xff]
        %v498 = vld [vmem:[%s396 + $0x2e0] sm:$0xff]
        %v499 = vld [vmem:[%s396 + $0x2e8] sm:$0xff]
        %v500 = vld [vmem:[%s396 + $0x2f0] sm:$0xff]
        %v501 = vld [vmem:[%s396 + $0x2f8] sm:$0xff]
        %v502 = vld [vmem:[%s396 + $0x300] sm:$0xff]
        %v503 = vld [vmem:[%s396 + $0x308] sm:$0xff]
        %v504 = vld [vmem:[%s396 + $0x310] sm:$0xff]
        %v505 = vld [vmem:[%s396 + $0x318] sm:$0xff]
        %v506 = vld [vmem:[%s396 + $0x320] sm:$0xff]
        %v507 = vld [vmem:[%s396 + $0x328] sm:$0xff]
        %v508 = vld [vmem:[%s396 + $0x330] sm:$0xff]
        %v509 = vld [vmem:[%s396 + $0x338] sm:$0xff]
        %v510 = vld [vmem:[%s396 + $0x340] sm:$0xff]
        %v511 = vld [vmem:[%s396 + $0x348] sm:$0xff]
        %v512 = vld [vmem:[%s396 + $0x350] sm:$0xff]
        %v513 = vld [vmem:[%s396 + $0x358] sm:$0xff]
        %v514 = vld [vmem:[%s396 + $0x360] sm:$0xff]
        %v515 = vld [vmem:[%s396 + $0x368] sm:$0xff]
        %v516 = vld [vmem:[%s396 + $0x370] sm:$0xff]
        %v517 = vld [vmem:[%s396 + $0x378] sm:$0xff]
        %v518 = vpack.c.bf16 %v413, %v406
        %v519 = vpack.c.bf16 %v414, %v407
        %v520 = vpack.c.bf16 %v415, %v408
        %v521 = vpack.c.bf16 %v416, %v409
        %v522 = vpack.c.bf16 %v417, %v410
        %v523 = vpack.c.bf16 %v418, %v411
        %v524 = vpack.c.bf16 %v419, %v412
        %v525 = vpack.c.bf16 %v427, %v420
        %v526 = vpack.c.bf16 %v428, %v421
        %v527 = vpack.c.bf16 %v429, %v422
        %v528 = vpack.c.bf16 %v430, %v423
        %v529 = vpack.c.bf16 %v431, %v424
        %v530 = vpack.c.bf16 %v432, %v425
        %v531 = vpack.c.bf16 %v433, %v426
        %v532 = vpack.c.bf16 %v441, %v434
        %v533 = vpack.c.bf16 %v442, %v435
        %v534 = vpack.c.bf16 %v443, %v436
        %v535 = vpack.c.bf16 %v444, %v437
        %v536 = vpack.c.bf16 %v445, %v438
        %v537 = vpack.c.bf16 %v446, %v439
        %v538 = vpack.c.bf16 %v447, %v440
        %v539 = vpack.c.bf16 %v455, %v448
        %v540 = vpack.c.bf16 %v456, %v449
        %v541 = vpack.c.bf16 %v457, %v450
        %v542 = vpack.c.bf16 %v458, %v451
        %v543 = vpack.c.bf16 %v459, %v452
        %v544 = vpack.c.bf16 %v460, %v453
        %v545 = vpack.c.bf16 %v461, %v454
        %v546 = vpack.c.bf16 %v469, %v462
        %v547 = vpack.c.bf16 %v470, %v463
        %v548 = vpack.c.bf16 %v471, %v464
        %v549 = vpack.c.bf16 %v472, %v465
        %v550 = vpack.c.bf16 %v473, %v466
        %v551 = vpack.c.bf16 %v474, %v467
        %v552 = vpack.c.bf16 %v475, %v468
        %v553 = vpack.c.bf16 %v483, %v476
        %v554 = vpack.c.bf16 %v484, %v477
        %v555 = vpack.c.bf16 %v485, %v478
        %v556 = vpack.c.bf16 %v486, %v479
        %v557 = vpack.c.bf16 %v487, %v480
        %v558 = vpack.c.bf16 %v488, %v481
        %v559 = vpack.c.bf16 %v489, %v482
        %v560 = vpack.c.bf16 %v497, %v490
        %v561 = vpack.c.bf16 %v498, %v491
        %v562 = vpack.c.bf16 %v499, %v492
        %v563 = vpack.c.bf16 %v500, %v493
        %v564 = vpack.c.bf16 %v501, %v494
        %v565 = vpack.c.bf16 %v502, %v495
        %v566 = vpack.c.bf16 %v503, %v496
        %v567 = vpack.c.bf16 %v511, %v504
        %v568 = vpack.c.bf16 %v512, %v505
        %v569 = vpack.c.bf16 %v513, %v506
        %v570 = vpack.c.bf16 %v514, %v507
        %v571 = vpack.c.bf16 %v515, %v508
        %v572 = vpack.c.bf16 %v516, %v509
        %v573 = vpack.c.bf16 %v517, %v510
        %v574 = vld [vmem:[%s1] sm:$0xff]
        %v575 = vld [vmem:[%s1 + $0x8] sm:$0xff]
        %v576 = vld [vmem:[%s1 + $0x10] sm:$0xff]
        %v577 = vld [vmem:[%s1 + $0x18] sm:$0xff]
        %v578 = vld [vmem:[%s1 + $0x20] sm:$0xff]
        %v579 = vld [vmem:[%s1 + $0x28] sm:$0xff]
        %v580 = vld [vmem:[%s1 + $0x30] sm:$0xff]
        %v581 = vld [vmem:[%s1 + $0x38] sm:$0xff]
        %v582 = vld [vmem:[%s1 + $0x40] sm:$0xff]
        %v583 = vld [vmem:[%s1 + $0x48] sm:$0xff]
        %v584 = vld [vmem:[%s1 + $0x50] sm:$0xff]
        %v585 = vld [vmem:[%s1 + $0x58] sm:$0xff]
        %v586 = vld [vmem:[%s1 + $0x60] sm:$0xff]
        %v587 = vld [vmem:[%s1 + $0x68] sm:$0xff]
        %v588 = vld [vmem:[%s1 + $0x70] sm:$0xff]
        %v589 = vld [vmem:[%s1 + $0x78] sm:$0xff]
        %v590 = vld [vmem:[%s1 + $0x80] sm:$0xff]
        %v591 = vld [vmem:[%s1 + $0x88] sm:$0xff]
        %v592 = vld [vmem:[%s1 + $0x90] sm:$0xff]
        %v593 = vld [vmem:[%s1 + $0x98] sm:$0xff]
        %v594 = vld [vmem:[%s1 + $0xa0] sm:$0xff]
        %v595 = vld [vmem:[%s1 + $0xa8] sm:$0xff]
        %v596 = vld [vmem:[%s1 + $0xb0] sm:$0xff]
        %v597 = vld [vmem:[%s1 + $0xb8] sm:$0xff]
        %v598 = vld [vmem:[%s1 + $0xc0] sm:$0xff]
        %v599 = vld [vmem:[%s1 + $0xc8] sm:$0xff]
        %v600 = vld [vmem:[%s1 + $0xd0] sm:$0xff]
        %v601 = vld [vmem:[%s1 + $0xd8] sm:$0xff]
        %v602 = vld [vmem:[%s1 + $0xe0] sm:$0xff]
        %v603 = vld [vmem:[%s1 + $0xe8] sm:$0xff]
        %v604 = vld [vmem:[%s1 + $0xf0] sm:$0xff]
        %v605 = vld [vmem:[%s1 + $0xf8] sm:$0xff]
        %v606 = vld [vmem:[%s1 + $0x100] sm:$0xff]
        %v607 = vld [vmem:[%s1 + $0x108] sm:$0xff]
        %v608 = vld [vmem:[%s1 + $0x110] sm:$0xff]
        %v609 = vld [vmem:[%s1 + $0x118] sm:$0xff]
        %v610 = vld [vmem:[%s1 + $0x120] sm:$0xff]
        %v611 = vld [vmem:[%s1 + $0x128] sm:$0xff]
        %v612 = vld [vmem:[%s1 + $0x130] sm:$0xff]
        %v613 = vld [vmem:[%s1 + $0x138] sm:$0xff]
        %v614 = vld [vmem:[%s1 + $0x140] sm:$0xff]
        %v615 = vld [vmem:[%s1 + $0x148] sm:$0xff]
        %v616 = vld [vmem:[%s1 + $0x150] sm:$0xff]
        %v617 = vld [vmem:[%s1 + $0x158] sm:$0xff]
        %v618 = vld [vmem:[%s1 + $0x160] sm:$0xff]
        %v619 = vld [vmem:[%s1 + $0x168] sm:$0xff]
        %v620 = vld [vmem:[%s1 + $0x170] sm:$0xff]
        %v621 = vld [vmem:[%s1 + $0x178] sm:$0xff]
        %v622 = vld [vmem:[%s1 + $0x180] sm:$0xff]
        %v623 = vld [vmem:[%s1 + $0x188] sm:$0xff]
        %v624 = vld [vmem:[%s1 + $0x190] sm:$0xff]
        %v625 = vld [vmem:[%s1 + $0x198] sm:$0xff]
        %v626 = vld [vmem:[%s1 + $0x1a0] sm:$0xff]
        %v627 = vld [vmem:[%s1 + $0x1a8] sm:$0xff]
        %v628 = vld [vmem:[%s1 + $0x1b0] sm:$0xff]
        %v629 = vld [vmem:[%s1 + $0x1b8] sm:$0xff]
        %v630 = vld [vmem:[%s1 + $0x1c0] sm:$0xff]
        %v631 = vld [vmem:[%s1 + $0x1c8] sm:$0xff]
        %v632 = vld [vmem:[%s1 + $0x1d0] sm:$0xff]
        %v633 = vld [vmem:[%s1 + $0x1d8] sm:$0xff]
        %v634 = vld [vmem:[%s1 + $0x1e0] sm:$0xff]
        %v635 = vld [vmem:[%s1 + $0x1e8] sm:$0xff]
        %v636 = vld [vmem:[%s1 + $0x1f0] sm:$0xff]
        %v637 = vld [vmem:[%s1 + $0x1f8] sm:$0xff]
        %v638 = vld [vmem:[%s1 + $0x200] sm:$0xff]
        %v639 = vld [vmem:[%s1 + $0x208] sm:$0xff]
        %v640 = vld [vmem:[%s1 + $0x210] sm:$0xff]
        %v641 = vld [vmem:[%s1 + $0x218] sm:$0xff]
        %v642 = vld [vmem:[%s1 + $0x220] sm:$0xff]
        %v643 = vld [vmem:[%s1 + $0x228] sm:$0xff]
        %v644 = vld [vmem:[%s1 + $0x230] sm:$0xff]
        %v645 = vld [vmem:[%s1 + $0x238] sm:$0xff]
        %v646 = vld [vmem:[%s1 + $0x240] sm:$0xff]
        %v647 = vld [vmem:[%s1 + $0x248] sm:$0xff]
        %v648 = vld [vmem:[%s1 + $0x250] sm:$0xff]
        %v649 = vld [vmem:[%s1 + $0x258] sm:$0xff]
        %v650 = vld [vmem:[%s1 + $0x260] sm:$0xff]
        %v651 = vld [vmem:[%s1 + $0x268] sm:$0xff]
        %v652 = vld [vmem:[%s1 + $0x270] sm:$0xff]
        %v653 = vld [vmem:[%s1 + $0x278] sm:$0xff]
        %v654 = vld [vmem:[%s1 + $0x280] sm:$0xff]
        %v655 = vld [vmem:[%s1 + $0x288] sm:$0xff]
        %v656 = vld [vmem:[%s1 + $0x290] sm:$0xff]
        %v657 = vld [vmem:[%s1 + $0x298] sm:$0xff]
        %v658 = vld [vmem:[%s1 + $0x2a0] sm:$0xff]
        %v659 = vld [vmem:[%s1 + $0x2a8] sm:$0xff]
        %v660 = vld [vmem:[%s1 + $0x2b0] sm:$0xff]
        %v661 = vld [vmem:[%s1 + $0x2b8] sm:$0xff]
        %v662 = vld [vmem:[%s1 + $0x2c0] sm:$0xff]
        %v663 = vld [vmem:[%s1 + $0x2c8] sm:$0xff]
        %v664 = vld [vmem:[%s1 + $0x2d0] sm:$0xff]
        %v665 = vld [vmem:[%s1 + $0x2d8] sm:$0xff]
        %v666 = vld [vmem:[%s1 + $0x2e0] sm:$0xff]
        %v667 = vld [vmem:[%s1 + $0x2e8] sm:$0xff]
        %v668 = vld [vmem:[%s1 + $0x2f0] sm:$0xff]
        %v669 = vld [vmem:[%s1 + $0x2f8] sm:$0xff]
        %v670 = vld [vmem:[%s1 + $0x300] sm:$0xff]
        %v671 = vld [vmem:[%s1 + $0x308] sm:$0xff]
        %v672 = vld [vmem:[%s1 + $0x310] sm:$0xff]
        %v673 = vld [vmem:[%s1 + $0x318] sm:$0xff]
        %v674 = vld [vmem:[%s1 + $0x320] sm:$0xff]
        %v675 = vld [vmem:[%s1 + $0x328] sm:$0xff]
        %v676 = vld [vmem:[%s1 + $0x330] sm:$0xff]
        %v677 = vld [vmem:[%s1 + $0x338] sm:$0xff]
        %v678 = vld [vmem:[%s1 + $0x340] sm:$0xff]
        %v679 = vld [vmem:[%s1 + $0x348] sm:$0xff]
        %v680 = vld [vmem:[%s1 + $0x350] sm:$0xff]
        %v681 = vld [vmem:[%s1 + $0x358] sm:$0xff]
        %v682 = vld [vmem:[%s1 + $0x360] sm:$0xff]
        %v683 = vld [vmem:[%s1 + $0x368] sm:$0xff]
        %v684 = vld [vmem:[%s1 + $0x370] sm:$0xff]
        %v685 = vld [vmem:[%s1 + $0x378] sm:$0xff]
        %v686 = vld [vmem:[%s1 + $0x380] sm:$0xff]
        %v687 = vld [vmem:[%s1 + $0x388] sm:$0xff]
        %v688 = vld [vmem:[%s1 + $0x390] sm:$0xff]
        %v689 = vld [vmem:[%s1 + $0x398] sm:$0xff]
        %v690 = vld [vmem:[%s1 + $0x3a0] sm:$0xff]
        %v691 = vld [vmem:[%s1 + $0x3a8] sm:$0xff]
        %v692 = vld [vmem:[%s1 + $0x3b0] sm:$0xff]
        %v693 = vld [vmem:[%s1 + $0x3b8] sm:$0xff]
        %v694 = vld [vmem:[%s1 + $0x3c0] sm:$0xff]
        %v695 = vld [vmem:[%s1 + $0x3c8] sm:$0xff]
        %v696 = vld [vmem:[%s1 + $0x3d0] sm:$0xff]
        %v697 = vld [vmem:[%s1 + $0x3d8] sm:$0xff]
        %v698 = vld [vmem:[%s1 + $0x3e0] sm:$0xff]
        %v699 = vld [vmem:[%s1 + $0x3e8] sm:$0xff]
        %v700 = vld [vmem:[%s1 + $0x3f0] sm:$0xff]
        %v701 = vld [vmem:[%s1 + $0x3f8] sm:$0xff]
        %v702 = vld [vmem:[%s1 + $0x400] sm:$0xff]
        %v703 = vld [vmem:[%s1 + $0x408] sm:$0xff]
        %v704 = vld [vmem:[%s1 + $0x410] sm:$0xff]
        %v705 = vld [vmem:[%s1 + $0x418] sm:$0xff]
        %v706 = vld [vmem:[%s1 + $0x420] sm:$0xff]
        %v707 = vld [vmem:[%s1 + $0x428] sm:$0xff]
        %v708 = vld [vmem:[%s1 + $0x430] sm:$0xff]
        %v709 = vld [vmem:[%s1 + $0x438] sm:$0xff]
        %v710 = vld [vmem:[%s1 + $0x440] sm:$0xff]
        %v711 = vld [vmem:[%s1 + $0x448] sm:$0xff]
        %v712 = vld [vmem:[%s1 + $0x450] sm:$0xff]
        %v713 = vld [vmem:[%s1 + $0x458] sm:$0xff]
        %v714 = vld [vmem:[%s1 + $0x460] sm:$0xff]
        %v715 = vld [vmem:[%s1 + $0x468] sm:$0xff]
        %v716 = vld [vmem:[%s1 + $0x470] sm:$0xff]
        %v717 = vld [vmem:[%s1 + $0x478] sm:$0xff]
        %v718 = vld [vmem:[%s1 + $0x480] sm:$0xff]
        %v719 = vld [vmem:[%s1 + $0x488] sm:$0xff]
        %v720 = vld [vmem:[%s1 + $0x490] sm:$0xff]
        %v721 = vld [vmem:[%s1 + $0x498] sm:$0xff]
        %v722 = vld [vmem:[%s1 + $0x4a0] sm:$0xff]
        %v723 = vld [vmem:[%s1 + $0x4a8] sm:$0xff]
        %v724 = vld [vmem:[%s1 + $0x4b0] sm:$0xff]
        %v725 = vld [vmem:[%s1 + $0x4b8] sm:$0xff]
        %v726 = vld [vmem:[%s1 + $0x4c0] sm:$0xff]
        %v727 = vld [vmem:[%s1 + $0x4c8] sm:$0xff]
        %v728 = vld [vmem:[%s1 + $0x4d0] sm:$0xff]
        %v729 = vld [vmem:[%s1 + $0x4d8] sm:$0xff]
        %v730 = vld [vmem:[%s1 + $0x4e0] sm:$0xff]
        %v731 = vld [vmem:[%s1 + $0x4e8] sm:$0xff]
        %v732 = vld [vmem:[%s1 + $0x4f0] sm:$0xff]
        %v733 = vld [vmem:[%s1 + $0x4f8] sm:$0xff]
        %v734 = vld [vmem:[%s1 + $0x500] sm:$0xff]
        %v735 = vld [vmem:[%s1 + $0x508] sm:$0xff]
        %v736 = vld [vmem:[%s1 + $0x510] sm:$0xff]
        %v737 = vld [vmem:[%s1 + $0x518] sm:$0xff]
        %v738 = vld [vmem:[%s1 + $0x520] sm:$0xff]
        %v739 = vld [vmem:[%s1 + $0x528] sm:$0xff]
        %v740 = vld [vmem:[%s1 + $0x530] sm:$0xff]
        %v741 = vld [vmem:[%s1 + $0x538] sm:$0xff]
        %v742 = vld [vmem:[%s1 + $0x540] sm:$0xff]
        %v743 = vld [vmem:[%s1 + $0x548] sm:$0xff]
        %v744 = vld [vmem:[%s1 + $0x550] sm:$0xff]
        %v745 = vld [vmem:[%s1 + $0x558] sm:$0xff]
        %v746 = vld [vmem:[%s1 + $0x560] sm:$0xff]
        %v747 = vld [vmem:[%s1 + $0x568] sm:$0xff]
        %v748 = vld [vmem:[%s1 + $0x570] sm:$0xff]
        %v749 = vld [vmem:[%s1 + $0x578] sm:$0xff]
        %v750 = vld [vmem:[%s1 + $0x580] sm:$0xff]
        %v751 = vld [vmem:[%s1 + $0x588] sm:$0xff]
        %v752 = vld [vmem:[%s1 + $0x590] sm:$0xff]
        %v753 = vld [vmem:[%s1 + $0x598] sm:$0xff]
        %v754 = vld [vmem:[%s1 + $0x5a0] sm:$0xff]
        %v755 = vld [vmem:[%s1 + $0x5a8] sm:$0xff]
        %v756 = vld [vmem:[%s1 + $0x5b0] sm:$0xff]
        %v757 = vld [vmem:[%s1 + $0x5b8] sm:$0xff]
        %v758 = vld [vmem:[%s1 + $0x5c0] sm:$0xff]
        %v759 = vld [vmem:[%s1 + $0x5c8] sm:$0xff]
        %v760 = vld [vmem:[%s1 + $0x5d0] sm:$0xff]
        %v761 = vld [vmem:[%s1 + $0x5d8] sm:$0xff]
        %v762 = vld [vmem:[%s1 + $0x5e0] sm:$0xff]
        %v763 = vld [vmem:[%s1 + $0x5e8] sm:$0xff]
        %v764 = vld [vmem:[%s1 + $0x5f0] sm:$0xff]
        %v765 = vld [vmem:[%s1 + $0x5f8] sm:$0xff]
        %v766 = vld [vmem:[%s1 + $0x600] sm:$0xff]
        %v767 = vld [vmem:[%s1 + $0x608] sm:$0xff]
        %v768 = vld [vmem:[%s1 + $0x610] sm:$0xff]
        %v769 = vld [vmem:[%s1 + $0x618] sm:$0xff]
        %v770 = vld [vmem:[%s1 + $0x620] sm:$0xff]
        %v771 = vld [vmem:[%s1 + $0x628] sm:$0xff]
        %v772 = vld [vmem:[%s1 + $0x630] sm:$0xff]
        %v773 = vld [vmem:[%s1 + $0x638] sm:$0xff]
        %v774 = vld [vmem:[%s1 + $0x640] sm:$0xff]
        %v775 = vld [vmem:[%s1 + $0x648] sm:$0xff]
        %v776 = vld [vmem:[%s1 + $0x650] sm:$0xff]
        %v777 = vld [vmem:[%s1 + $0x658] sm:$0xff]
        %v778 = vld [vmem:[%s1 + $0x660] sm:$0xff]
        %v779 = vld [vmem:[%s1 + $0x668] sm:$0xff]
        %v780 = vld [vmem:[%s1 + $0x670] sm:$0xff]
        %v781 = vld [vmem:[%s1 + $0x678] sm:$0xff]
        %v782 = vld [vmem:[%s1 + $0x680] sm:$0xff]
        %v783 = vld [vmem:[%s1 + $0x688] sm:$0xff]
        %v784 = vld [vmem:[%s1 + $0x690] sm:$0xff]
        %v785 = vld [vmem:[%s1 + $0x698] sm:$0xff]
        %v786 = vld [vmem:[%s1 + $0x6a0] sm:$0xff]
        %v787 = vld [vmem:[%s1 + $0x6a8] sm:$0xff]
        %v788 = vld [vmem:[%s1 + $0x6b0] sm:$0xff]
        %v789 = vld [vmem:[%s1 + $0x6b8] sm:$0xff]
        %v790 = vld [vmem:[%s1 + $0x6c0] sm:$0xff]
        %v791 = vld [vmem:[%s1 + $0x6c8] sm:$0xff]
        %v792 = vld [vmem:[%s1 + $0x6d0] sm:$0xff]
        %v793 = vld [vmem:[%s1 + $0x6d8] sm:$0xff]
        %v794 = vld [vmem:[%s1 + $0x6e0] sm:$0xff]
        %v795 = vld [vmem:[%s1 + $0x6e8] sm:$0xff]
        %v796 = vld [vmem:[%s1 + $0x6f0] sm:$0xff]
        %v797 = vld [vmem:[%s1 + $0x6f8] sm:$0xff]
        %v798 = vld [vmem:[%s2] sm:$0xf]
        %v800 = vlaneseq
        %v801 = vshrl.u32 %v800, 7
        %v802 = vsub.s32 0, %v801
        %v803 = vrot.slane %v798, %v802
        %v804 = vlaneseq
        %v805 = vshrl.u32 %v804, 7
        %v806 = vsub.s32 1, %v805
        %v807 = vrot.slane %v798, %v806
        %v808 = vlaneseq
        %v809 = vshrl.u32 %v808, 7
        %v810 = vsub.s32 2, %v809
        %v811 = vrot.slane %v798, %v810
        %v812 = vlaneseq
        %v813 = vshrl.u32 %v812, 7
        %v814 = vsub.s32 3, %v813
        %v815 = vrot.slane %v798, %v814
        %v1044 = vunpack.c.l.b16 %v574
        %v1045 = vunpack.c.h.b16 %v574
        %v1046 = vunpack.c.l.b16 %v575
        %v1047 = vunpack.c.h.b16 %v575
        %v1048 = vunpack.c.l.b16 %v576
        %v1049 = vunpack.c.h.b16 %v576
        %v1050 = vunpack.c.l.b16 %v577
        %v1051 = vunpack.c.h.b16 %v577
        %v1052 = vunpack.c.l.b16 %v578
        %v1053 = vunpack.c.h.b16 %v578
        %v1054 = vunpack.c.l.b16 %v579
        %v1055 = vunpack.c.h.b16 %v579
        %v1056 = vunpack.c.l.b16 %v580
        %v1057 = vunpack.c.h.b16 %v580
        %v1058 = vunpack.c.l.b16 %v581
        %v1059 = vunpack.c.h.b16 %v581
        %v1060 = vunpack.c.l.b16 %v582
        %v1061 = vunpack.c.h.b16 %v582
        %v1062 = vunpack.c.l.b16 %v583
        %v1063 = vunpack.c.h.b16 %v583
        %v1064 = vunpack.c.l.b16 %v584
        %v1065 = vunpack.c.h.b16 %v584
        %v1066 = vunpack.c.l.b16 %v585
        %v1067 = vunpack.c.h.b16 %v585
        %v1068 = vunpack.c.l.b16 %v586
        %v1069 = vunpack.c.h.b16 %v586
        %v1070 = vunpack.c.l.b16 %v587
        %v1071 = vunpack.c.h.b16 %v587
        %v1072 = vunpack.c.l.b16 %v588
        %v1073 = vunpack.c.h.b16 %v588
        %v1074 = vunpack.c.l.b16 %v589
        %v1075 = vunpack.c.h.b16 %v589
        %v1076 = vunpack.c.l.b16 %v590
        %v1077 = vunpack.c.h.b16 %v590
        %v1078 = vunpack.c.l.b16 %v591
        %v1079 = vunpack.c.h.b16 %v591
        %v1080 = vunpack.c.l.b16 %v592
        %v1081 = vunpack.c.h.b16 %v592
        %v1082 = vunpack.c.l.b16 %v593
        %v1083 = vunpack.c.h.b16 %v593
        %v1084 = vunpack.c.l.b16 %v594
        %v1085 = vunpack.c.h.b16 %v594
        %v1086 = vunpack.c.l.b16 %v595
        %v1087 = vunpack.c.h.b16 %v595
        %v1088 = vunpack.c.l.b16 %v596
        %v1089 = vunpack.c.h.b16 %v596
        %v1090 = vunpack.c.l.b16 %v597
        %v1091 = vunpack.c.h.b16 %v597
        %v1092 = vunpack.c.l.b16 %v598
        %v1093 = vunpack.c.h.b16 %v598
        %v1094 = vunpack.c.l.b16 %v599
        %v1095 = vunpack.c.h.b16 %v599
        %v1096 = vunpack.c.l.b16 %v600
        %v1097 = vunpack.c.h.b16 %v600
        %v1098 = vunpack.c.l.b16 %v601
        %v1099 = vunpack.c.h.b16 %v601
        %v1100 = vunpack.c.l.b16 %v602
        %v1101 = vunpack.c.h.b16 %v602
        %v1102 = vunpack.c.l.b16 %v603
        %v1103 = vunpack.c.h.b16 %v603
        %v1104 = vunpack.c.l.b16 %v604
        %v1105 = vunpack.c.h.b16 %v604
        %v1106 = vunpack.c.l.b16 %v605
        %v1107 = vunpack.c.h.b16 %v605
        %v1108 = vunpack.c.l.b16 %v606
        %v1109 = vunpack.c.h.b16 %v606
        %v1110 = vunpack.c.l.b16 %v607
        %v1111 = vunpack.c.h.b16 %v607
        %v1112 = vunpack.c.l.b16 %v608
        %v1113 = vunpack.c.h.b16 %v608
        %v1114 = vunpack.c.l.b16 %v609
        %v1115 = vunpack.c.h.b16 %v609
        %v1116 = vunpack.c.l.b16 %v610
        %v1117 = vunpack.c.h.b16 %v610
        %v1118 = vunpack.c.l.b16 %v611
        %v1119 = vunpack.c.h.b16 %v611
        %v1120 = vunpack.c.l.b16 %v612
        %v1121 = vunpack.c.h.b16 %v612
        %v1122 = vunpack.c.l.b16 %v613
        %v1123 = vunpack.c.h.b16 %v613
        %v1124 = vunpack.c.l.b16 %v614
        %v1125 = vunpack.c.h.b16 %v614
        %v1126 = vunpack.c.l.b16 %v615
        %v1127 = vunpack.c.h.b16 %v615
        %v1128 = vunpack.c.l.b16 %v616
        %v1129 = vunpack.c.h.b16 %v616
        %v1130 = vunpack.c.l.b16 %v617
        %v1131 = vunpack.c.h.b16 %v617
        %v1132 = vunpack.c.l.b16 %v618
        %v1133 = vunpack.c.h.b16 %v618
        %v1134 = vunpack.c.l.b16 %v619
        %v1135 = vunpack.c.h.b16 %v619
        %v1136 = vunpack.c.l.b16 %v620
        %v1137 = vunpack.c.h.b16 %v620
        %v1138 = vunpack.c.l.b16 %v621
        %v1139 = vunpack.c.h.b16 %v621
        %v1140 = vunpack.c.l.b16 %v622
        %v1141 = vunpack.c.h.b16 %v622
        %v1142 = vunpack.c.l.b16 %v623
        %v1143 = vunpack.c.h.b16 %v623
        %v1144 = vunpack.c.l.b16 %v624
        %v1145 = vunpack.c.h.b16 %v624
        %v1146 = vunpack.c.l.b16 %v625
        %v1147 = vunpack.c.h.b16 %v625
        %v1148 = vunpack.c.l.b16 %v626
        %v1149 = vunpack.c.h.b16 %v626
        %v1150 = vunpack.c.l.b16 %v627
        %v1151 = vunpack.c.h.b16 %v627
        %v1152 = vunpack.c.l.b16 %v628
        %v1153 = vunpack.c.h.b16 %v628
        %v1154 = vunpack.c.l.b16 %v629
        %v1155 = vunpack.c.h.b16 %v629
        %v1156 = vunpack.c.l.b16 %v630
        %v1157 = vunpack.c.h.b16 %v630
        %v1158 = vunpack.c.l.b16 %v631
        %v1159 = vunpack.c.h.b16 %v631
        %v1160 = vunpack.c.l.b16 %v632
        %v1161 = vunpack.c.h.b16 %v632
        %v1162 = vunpack.c.l.b16 %v633
        %v1163 = vunpack.c.h.b16 %v633
        %v1164 = vunpack.c.l.b16 %v634
        %v1165 = vunpack.c.h.b16 %v634
        %v1166 = vunpack.c.l.b16 %v635
        %v1167 = vunpack.c.h.b16 %v635
        %v1168 = vunpack.c.l.b16 %v636
        %v1169 = vunpack.c.h.b16 %v636
        %v1170 = vunpack.c.l.b16 %v637
        %v1171 = vunpack.c.h.b16 %v637
        %v1172 = vunpack.c.l.b16 %v638
        %v1173 = vunpack.c.h.b16 %v638
        %v1174 = vunpack.c.l.b16 %v639
        %v1175 = vunpack.c.h.b16 %v639
        %v1176 = vunpack.c.l.b16 %v640
        %v1177 = vunpack.c.h.b16 %v640
        %v1178 = vunpack.c.l.b16 %v641
        %v1179 = vunpack.c.h.b16 %v641
        %v1180 = vunpack.c.l.b16 %v642
        %v1181 = vunpack.c.h.b16 %v642
        %v1182 = vunpack.c.l.b16 %v643
        %v1183 = vunpack.c.h.b16 %v643
        %v1184 = vunpack.c.l.b16 %v644
        %v1185 = vunpack.c.h.b16 %v644
        %v1186 = vunpack.c.l.b16 %v645
        %v1187 = vunpack.c.h.b16 %v645
        %v1188 = vunpack.c.l.b16 %v646
        %v1189 = vunpack.c.h.b16 %v646
        %v1190 = vunpack.c.l.b16 %v647
        %v1191 = vunpack.c.h.b16 %v647
        %v1192 = vunpack.c.l.b16 %v648
        %v1193 = vunpack.c.h.b16 %v648
        %v1194 = vunpack.c.l.b16 %v649
        %v1195 = vunpack.c.h.b16 %v649
        %v1196 = vunpack.c.l.b16 %v650
        %v1197 = vunpack.c.h.b16 %v650
        %v1198 = vunpack.c.l.b16 %v651
        %v1199 = vunpack.c.h.b16 %v651
        %v1200 = vunpack.c.l.b16 %v652
        %v1201 = vunpack.c.h.b16 %v652
        %v1202 = vunpack.c.l.b16 %v653
        %v1203 = vunpack.c.h.b16 %v653
        %v1204 = vunpack.c.l.b16 %v654
        %v1205 = vunpack.c.h.b16 %v654
        %v1206 = vunpack.c.l.b16 %v655
        %v1207 = vunpack.c.h.b16 %v655
        %v1208 = vunpack.c.l.b16 %v656
        %v1209 = vunpack.c.h.b16 %v656
        %v1210 = vunpack.c.l.b16 %v657
        %v1211 = vunpack.c.h.b16 %v657
        %v1212 = vunpack.c.l.b16 %v658
        %v1213 = vunpack.c.h.b16 %v658
        %v1214 = vunpack.c.l.b16 %v659
        %v1215 = vunpack.c.h.b16 %v659
        %v1216 = vunpack.c.l.b16 %v660
        %v1217 = vunpack.c.h.b16 %v660
        %v1218 = vunpack.c.l.b16 %v661
        %v1219 = vunpack.c.h.b16 %v661
        %v1220 = vunpack.c.l.b16 %v662
        %v1221 = vunpack.c.h.b16 %v662
        %v1222 = vunpack.c.l.b16 %v663
        %v1223 = vunpack.c.h.b16 %v663
        %v1224 = vunpack.c.l.b16 %v664
        %v1225 = vunpack.c.h.b16 %v664
        %v1226 = vunpack.c.l.b16 %v665
        %v1227 = vunpack.c.h.b16 %v665
        %v1228 = vunpack.c.l.b16 %v666
        %v1229 = vunpack.c.h.b16 %v666
        %v1230 = vunpack.c.l.b16 %v667
        %v1231 = vunpack.c.h.b16 %v667
        %v1232 = vunpack.c.l.b16 %v668
        %v1233 = vunpack.c.h.b16 %v668
        %v1234 = vunpack.c.l.b16 %v669
        %v1235 = vunpack.c.h.b16 %v669
        %v1236 = vunpack.c.l.b16 %v670
        %v1237 = vunpack.c.h.b16 %v670
        %v1238 = vunpack.c.l.b16 %v671
        %v1239 = vunpack.c.h.b16 %v671
        %v1240 = vunpack.c.l.b16 %v672
        %v1241 = vunpack.c.h.b16 %v672
        %v1242 = vunpack.c.l.b16 %v673
        %v1243 = vunpack.c.h.b16 %v673
        %v1244 = vunpack.c.l.b16 %v674
        %v1245 = vunpack.c.h.b16 %v674
        %v1246 = vunpack.c.l.b16 %v675
        %v1247 = vunpack.c.h.b16 %v675
        %v1248 = vunpack.c.l.b16 %v676
        %v1249 = vunpack.c.h.b16 %v676
        %v1250 = vunpack.c.l.b16 %v677
        %v1251 = vunpack.c.h.b16 %v677
        %v1252 = vunpack.c.l.b16 %v678
        %v1253 = vunpack.c.h.b16 %v678
        %v1254 = vunpack.c.l.b16 %v679
        %v1255 = vunpack.c.h.b16 %v679
        %v1256 = vunpack.c.l.b16 %v680
        %v1257 = vunpack.c.h.b16 %v680
        %v1258 = vunpack.c.l.b16 %v681
        %v1259 = vunpack.c.h.b16 %v681
        %v1260 = vunpack.c.l.b16 %v682
        %v1261 = vunpack.c.h.b16 %v682
        %v1262 = vunpack.c.l.b16 %v683
        %v1263 = vunpack.c.h.b16 %v683
        %v1264 = vunpack.c.l.b16 %v684
        %v1265 = vunpack.c.h.b16 %v684
        %v1266 = vunpack.c.l.b16 %v685
        %v1267 = vunpack.c.h.b16 %v685
        %v1268 = vunpack.c.l.b16 %v686
        %v1269 = vunpack.c.h.b16 %v686
        %v1270 = vunpack.c.l.b16 %v687
        %v1271 = vunpack.c.h.b16 %v687
        %v1272 = vunpack.c.l.b16 %v688
        %v1273 = vunpack.c.h.b16 %v688
        %v1274 = vunpack.c.l.b16 %v689
        %v1275 = vunpack.c.h.b16 %v689
        %v1276 = vunpack.c.l.b16 %v690
        %v1277 = vunpack.c.h.b16 %v690
        %v1278 = vunpack.c.l.b16 %v691
        %v1279 = vunpack.c.h.b16 %v691
        %v1280 = vunpack.c.l.b16 %v692
        %v1281 = vunpack.c.h.b16 %v692
        %v1282 = vunpack.c.l.b16 %v693
        %v1283 = vunpack.c.h.b16 %v693
        %v1284 = vunpack.c.l.b16 %v694
        %v1285 = vunpack.c.h.b16 %v694
        %v1286 = vunpack.c.l.b16 %v695
        %v1287 = vunpack.c.h.b16 %v695
        %v1288 = vunpack.c.l.b16 %v696
        %v1289 = vunpack.c.h.b16 %v696
        %v1290 = vunpack.c.l.b16 %v697
        %v1291 = vunpack.c.h.b16 %v697
        %v1292 = vunpack.c.l.b16 %v698
        %v1293 = vunpack.c.h.b16 %v698
        %v1294 = vunpack.c.l.b16 %v699
        %v1295 = vunpack.c.h.b16 %v699
        %v1296 = vunpack.c.l.b16 %v700
        %v1297 = vunpack.c.h.b16 %v700
        %v1298 = vunpack.c.l.b16 %v701
        %v1299 = vunpack.c.h.b16 %v701
        %v1300 = vunpack.c.l.b16 %v702
        %v1301 = vunpack.c.h.b16 %v702
        %v1302 = vunpack.c.l.b16 %v703
        %v1303 = vunpack.c.h.b16 %v703
        %v1304 = vunpack.c.l.b16 %v704
        %v1305 = vunpack.c.h.b16 %v704
        %v1306 = vunpack.c.l.b16 %v705
        %v1307 = vunpack.c.h.b16 %v705
        %v1308 = vunpack.c.l.b16 %v706
        %v1309 = vunpack.c.h.b16 %v706
        %v1310 = vunpack.c.l.b16 %v707
        %v1311 = vunpack.c.h.b16 %v707
        %v1312 = vunpack.c.l.b16 %v708
        %v1313 = vunpack.c.h.b16 %v708
        %v1314 = vunpack.c.l.b16 %v709
        %v1315 = vunpack.c.h.b16 %v709
        %v1316 = vunpack.c.l.b16 %v710
        %v1317 = vunpack.c.h.b16 %v710
        %v1318 = vunpack.c.l.b16 %v711
        %v1319 = vunpack.c.h.b16 %v711
        %v1320 = vunpack.c.l.b16 %v712
        %v1321 = vunpack.c.h.b16 %v712
        %v1322 = vunpack.c.l.b16 %v713
        %v1323 = vunpack.c.h.b16 %v713
        %v1324 = vunpack.c.l.b16 %v714
        %v1325 = vunpack.c.h.b16 %v714
        %v1326 = vunpack.c.l.b16 %v715
        %v1327 = vunpack.c.h.b16 %v715
        %v1328 = vunpack.c.l.b16 %v716
        %v1329 = vunpack.c.h.b16 %v716
        %v1330 = vunpack.c.l.b16 %v717
        %v1331 = vunpack.c.h.b16 %v717
        %v1332 = vunpack.c.l.b16 %v718
        %v1333 = vunpack.c.h.b16 %v718
        %v1334 = vunpack.c.l.b16 %v719
        %v1335 = vunpack.c.h.b16 %v719
        %v1336 = vunpack.c.l.b16 %v720
        %v1337 = vunpack.c.h.b16 %v720
        %v1338 = vunpack.c.l.b16 %v721
        %v1339 = vunpack.c.h.b16 %v721
        %v1340 = vunpack.c.l.b16 %v722
        %v1341 = vunpack.c.h.b16 %v722
        %v1342 = vunpack.c.l.b16 %v723
        %v1343 = vunpack.c.h.b16 %v723
        %v1344 = vunpack.c.l.b16 %v724
        %v1345 = vunpack.c.h.b16 %v724
        %v1346 = vunpack.c.l.b16 %v725
        %v1347 = vunpack.c.h.b16 %v725
        %v1348 = vunpack.c.l.b16 %v726
        %v1349 = vunpack.c.h.b16 %v726
        %v1350 = vunpack.c.l.b16 %v727
        %v1351 = vunpack.c.h.b16 %v727
        %v1352 = vunpack.c.l.b16 %v728
        %v1353 = vunpack.c.h.b16 %v728
        %v1354 = vunpack.c.l.b16 %v729
        %v1355 = vunpack.c.h.b16 %v729
        %v1356 = vunpack.c.l.b16 %v730
        %v1357 = vunpack.c.h.b16 %v730
        %v1358 = vunpack.c.l.b16 %v731
        %v1359 = vunpack.c.h.b16 %v731
        %v1360 = vunpack.c.l.b16 %v732
        %v1361 = vunpack.c.h.b16 %v732
        %v1362 = vunpack.c.l.b16 %v733
        %v1363 = vunpack.c.h.b16 %v733
        %v1364 = vunpack.c.l.b16 %v734
        %v1365 = vunpack.c.h.b16 %v734
        %v1366 = vunpack.c.l.b16 %v735
        %v1367 = vunpack.c.h.b16 %v735
        %v1368 = vunpack.c.l.b16 %v736
        %v1369 = vunpack.c.h.b16 %v736
        %v1370 = vunpack.c.l.b16 %v737
        %v1371 = vunpack.c.h.b16 %v737
        %v1372 = vunpack.c.l.b16 %v738
        %v1373 = vunpack.c.h.b16 %v738
        %v1374 = vunpack.c.l.b16 %v739
        %v1375 = vunpack.c.h.b16 %v739
        %v1376 = vunpack.c.l.b16 %v740
        %v1377 = vunpack.c.h.b16 %v740
        %v1378 = vunpack.c.l.b16 %v741
        %v1379 = vunpack.c.h.b16 %v741
        %v1380 = vunpack.c.l.b16 %v742
        %v1381 = vunpack.c.h.b16 %v742
        %v1382 = vunpack.c.l.b16 %v743
        %v1383 = vunpack.c.h.b16 %v743
        %v1384 = vunpack.c.l.b16 %v744
        %v1385 = vunpack.c.h.b16 %v744
        %v1386 = vunpack.c.l.b16 %v745
        %v1387 = vunpack.c.h.b16 %v745
        %v1388 = vunpack.c.l.b16 %v746
        %v1389 = vunpack.c.h.b16 %v746
        %v1390 = vunpack.c.l.b16 %v747
        %v1391 = vunpack.c.h.b16 %v747
        %v1392 = vunpack.c.l.b16 %v748
        %v1393 = vunpack.c.h.b16 %v748
        %v1394 = vunpack.c.l.b16 %v749
        %v1395 = vunpack.c.h.b16 %v749
        %v1396 = vunpack.c.l.b16 %v750
        %v1397 = vunpack.c.h.b16 %v750
        %v1398 = vunpack.c.l.b16 %v751
        %v1399 = vunpack.c.h.b16 %v751
        %v1400 = vunpack.c.l.b16 %v752
        %v1401 = vunpack.c.h.b16 %v752
        %v1402 = vunpack.c.l.b16 %v753
        %v1403 = vunpack.c.h.b16 %v753
        %v1404 = vunpack.c.l.b16 %v754
        %v1405 = vunpack.c.h.b16 %v754
        %v1406 = vunpack.c.l.b16 %v755
        %v1407 = vunpack.c.h.b16 %v755
        %v1408 = vunpack.c.l.b16 %v756
        %v1409 = vunpack.c.h.b16 %v756
        %v1410 = vunpack.c.l.b16 %v757
        %v1411 = vunpack.c.h.b16 %v757
        %v1412 = vunpack.c.l.b16 %v758
        %v1413 = vunpack.c.h.b16 %v758
        %v1414 = vunpack.c.l.b16 %v759
        %v1415 = vunpack.c.h.b16 %v759
        %v1416 = vunpack.c.l.b16 %v760
        %v1417 = vunpack.c.h.b16 %v760
        %v1418 = vunpack.c.l.b16 %v761
        %v1419 = vunpack.c.h.b16 %v761
        %v1420 = vunpack.c.l.b16 %v762
        %v1421 = vunpack.c.h.b16 %v762
        %v1422 = vunpack.c.l.b16 %v763
        %v1423 = vunpack.c.h.b16 %v763
        %v1424 = vunpack.c.l.b16 %v764
        %v1425 = vunpack.c.h.b16 %v764
        %v1426 = vunpack.c.l.b16 %v765
        %v1427 = vunpack.c.h.b16 %v765
        %v1428 = vunpack.c.l.b16 %v766
        %v1429 = vunpack.c.h.b16 %v766
        %v1430 = vunpack.c.l.b16 %v767
        %v1431 = vunpack.c.h.b16 %v767
        %v1432 = vunpack.c.l.b16 %v768
        %v1433 = vunpack.c.h.b16 %v768
        %v1434 = vunpack.c.l.b16 %v769
        %v1435 = vunpack.c.h.b16 %v769
        %v1436 = vunpack.c.l.b16 %v770
        %v1437 = vunpack.c.h.b16 %v770
        %v1438 = vunpack.c.l.b16 %v771
        %v1439 = vunpack.c.h.b16 %v771
        %v1440 = vunpack.c.l.b16 %v772
        %v1441 = vunpack.c.h.b16 %v772
        %v1442 = vunpack.c.l.b16 %v773
        %v1443 = vunpack.c.h.b16 %v773
        %v1444 = vunpack.c.l.b16 %v774
        %v1445 = vunpack.c.h.b16 %v774
        %v1446 = vunpack.c.l.b16 %v775
        %v1447 = vunpack.c.h.b16 %v775
        %v1448 = vunpack.c.l.b16 %v776
        %v1449 = vunpack.c.h.b16 %v776
        %v1450 = vunpack.c.l.b16 %v777
        %v1451 = vunpack.c.h.b16 %v777
        %v1452 = vunpack.c.l.b16 %v778
        %v1453 = vunpack.c.h.b16 %v778
        %v1454 = vunpack.c.l.b16 %v779
        %v1455 = vunpack.c.h.b16 %v779
        %v1456 = vunpack.c.l.b16 %v780
        %v1457 = vunpack.c.h.b16 %v780
        %v1458 = vunpack.c.l.b16 %v781
        %v1459 = vunpack.c.h.b16 %v781
        %v1460 = vunpack.c.l.b16 %v782
        %v1461 = vunpack.c.h.b16 %v782
        %v1462 = vunpack.c.l.b16 %v783
        %v1463 = vunpack.c.h.b16 %v783
        %v1464 = vunpack.c.l.b16 %v784
        %v1465 = vunpack.c.h.b16 %v784
        %v1466 = vunpack.c.l.b16 %v785
        %v1467 = vunpack.c.h.b16 %v785
        %v1468 = vunpack.c.l.b16 %v786
        %v1469 = vunpack.c.h.b16 %v786
        %v1470 = vunpack.c.l.b16 %v787
        %v1471 = vunpack.c.h.b16 %v787
        %v1472 = vunpack.c.l.b16 %v788
        %v1473 = vunpack.c.h.b16 %v788
        %v1474 = vunpack.c.l.b16 %v789
        %v1475 = vunpack.c.h.b16 %v789
        %v1476 = vunpack.c.l.b16 %v790
        %v1477 = vunpack.c.h.b16 %v790
        %v1478 = vunpack.c.l.b16 %v791
        %v1479 = vunpack.c.h.b16 %v791
        %v1480 = vunpack.c.l.b16 %v792
        %v1481 = vunpack.c.h.b16 %v792
        %v1482 = vunpack.c.l.b16 %v793
        %v1483 = vunpack.c.h.b16 %v793
        %v1484 = vunpack.c.l.b16 %v794
        %v1485 = vunpack.c.h.b16 %v794
        %v1486 = vunpack.c.l.b16 %v795
        %v1487 = vunpack.c.h.b16 %v795
        %v1488 = vunpack.c.l.b16 %v796
        %v1489 = vunpack.c.h.b16 %v796
        %v1490 = vunpack.c.l.b16 %v797
        %v1491 = vunpack.c.h.b16 %v797
        %v1492 = vpack.c.b16 %v1048, %v1044
        %v1493 = vpack.c.b16 %v1049, %v1045
        %v1494 = vpack.c.b16 %v1050, %v1046
        %v1495 = vpack.c.b16 %v1051, %v1047
        %v1496 = vpack.c.b16 %v1056, %v1052
        %v1497 = vpack.c.b16 %v1057, %v1053
        %v1498 = vpack.c.b16 %v1058, %v1054
        %v1499 = vpack.c.b16 %v1059, %v1055
        %v1500 = vpack.c.b16 %v1064, %v1060
        %v1501 = vpack.c.b16 %v1065, %v1061
        %v1502 = vpack.c.b16 %v1066, %v1062
        %v1503 = vpack.c.b16 %v1067, %v1063
        %v1504 = vpack.c.b16 %v1072, %v1068
        %v1505 = vpack.c.b16 %v1073, %v1069
        %v1506 = vpack.c.b16 %v1074, %v1070
        %v1507 = vpack.c.b16 %v1075, %v1071
        %v1508 = vpack.c.b16 %v1080, %v1076
        %v1509 = vpack.c.b16 %v1081, %v1077
        %v1510 = vpack.c.b16 %v1082, %v1078
        %v1511 = vpack.c.b16 %v1083, %v1079
        %v1512 = vpack.c.b16 %v1088, %v1084
        %v1513 = vpack.c.b16 %v1089, %v1085
        %v1514 = vpack.c.b16 %v1090, %v1086
        %v1515 = vpack.c.b16 %v1091, %v1087
        %v1516 = vpack.c.b16 %v1096, %v1092
        %v1517 = vpack.c.b16 %v1097, %v1093
        %v1518 = vpack.c.b16 %v1098, %v1094
        %v1519 = vpack.c.b16 %v1099, %v1095
        %v1520 = vpack.c.b16 %v1104, %v1100
        %v1521 = vpack.c.b16 %v1105, %v1101
        %v1522 = vpack.c.b16 %v1106, %v1102
        %v1523 = vpack.c.b16 %v1107, %v1103
        %v1524 = vpack.c.b16 %v1112, %v1108
        %v1525 = vpack.c.b16 %v1113, %v1109
        %v1526 = vpack.c.b16 %v1114, %v1110
        %v1527 = vpack.c.b16 %v1115, %v1111
        %v1528 = vpack.c.b16 %v1120, %v1116
        %v1529 = vpack.c.b16 %v1121, %v1117
        %v1530 = vpack.c.b16 %v1122, %v1118
        %v1531 = vpack.c.b16 %v1123, %v1119
        %v1532 = vpack.c.b16 %v1128, %v1124
        %v1533 = vpack.c.b16 %v1129, %v1125
        %v1534 = vpack.c.b16 %v1130, %v1126
        %v1535 = vpack.c.b16 %v1131, %v1127
        %v1536 = vpack.c.b16 %v1136, %v1132
        %v1537 = vpack.c.b16 %v1137, %v1133
        %v1538 = vpack.c.b16 %v1138, %v1134
        %v1539 = vpack.c.b16 %v1139, %v1135
        %v1540 = vpack.c.b16 %v1144, %v1140
        %v1541 = vpack.c.b16 %v1145, %v1141
        %v1542 = vpack.c.b16 %v1146, %v1142
        %v1543 = vpack.c.b16 %v1147, %v1143
        %v1544 = vpack.c.b16 %v1152, %v1148
        %v1545 = vpack.c.b16 %v1153, %v1149
        %v1546 = vpack.c.b16 %v1154, %v1150
        %v1547 = vpack.c.b16 %v1155, %v1151
        %v1548 = vpack.c.b16 %v1160, %v1156
        %v1549 = vpack.c.b16 %v1161, %v1157
        %v1550 = vpack.c.b16 %v1162, %v1158
        %v1551 = vpack.c.b16 %v1163, %v1159
        %v1552 = vpack.c.b16 %v1168, %v1164
        %v1553 = vpack.c.b16 %v1169, %v1165
        %v1554 = vpack.c.b16 %v1170, %v1166
        %v1555 = vpack.c.b16 %v1171, %v1167
        %v1556 = vpack.c.b16 %v1176, %v1172
        %v1557 = vpack.c.b16 %v1177, %v1173
        %v1558 = vpack.c.b16 %v1178, %v1174
        %v1559 = vpack.c.b16 %v1179, %v1175
        %v1560 = vpack.c.b16 %v1184, %v1180
        %v1561 = vpack.c.b16 %v1185, %v1181
        %v1562 = vpack.c.b16 %v1186, %v1182
        %v1563 = vpack.c.b16 %v1187, %v1183
        %v1564 = vpack.c.b16 %v1192, %v1188
        %v1565 = vpack.c.b16 %v1193, %v1189
        %v1566 = vpack.c.b16 %v1194, %v1190
        %v1567 = vpack.c.b16 %v1195, %v1191
        %v1568 = vpack.c.b16 %v1200, %v1196
        %v1569 = vpack.c.b16 %v1201, %v1197
        %v1570 = vpack.c.b16 %v1202, %v1198
        %v1571 = vpack.c.b16 %v1203, %v1199
        %v1572 = vpack.c.b16 %v1208, %v1204
        %v1573 = vpack.c.b16 %v1209, %v1205
        %v1574 = vpack.c.b16 %v1210, %v1206
        %v1575 = vpack.c.b16 %v1211, %v1207
        %v1576 = vpack.c.b16 %v1216, %v1212
        %v1577 = vpack.c.b16 %v1217, %v1213
        %v1578 = vpack.c.b16 %v1218, %v1214
        %v1579 = vpack.c.b16 %v1219, %v1215
        %v1580 = vpack.c.b16 %v1224, %v1220
        %v1581 = vpack.c.b16 %v1225, %v1221
        %v1582 = vpack.c.b16 %v1226, %v1222
        %v1583 = vpack.c.b16 %v1227, %v1223
        %v1584 = vpack.c.b16 %v1232, %v1228
        %v1585 = vpack.c.b16 %v1233, %v1229
        %v1586 = vpack.c.b16 %v1234, %v1230
        %v1587 = vpack.c.b16 %v1235, %v1231
        %v1588 = vpack.c.b16 %v1240, %v1236
        %v1589 = vpack.c.b16 %v1241, %v1237
        %v1590 = vpack.c.b16 %v1242, %v1238
        %v1591 = vpack.c.b16 %v1243, %v1239
        %v1592 = vpack.c.b16 %v1248, %v1244
        %v1593 = vpack.c.b16 %v1249, %v1245
        %v1594 = vpack.c.b16 %v1250, %v1246
        %v1595 = vpack.c.b16 %v1251, %v1247
        %v1596 = vpack.c.b16 %v1256, %v1252
        %v1597 = vpack.c.b16 %v1257, %v1253
        %v1598 = vpack.c.b16 %v1258, %v1254
        %v1599 = vpack.c.b16 %v1259, %v1255
        %v1600 = vpack.c.b16 %v1264, %v1260
        %v1601 = vpack.c.b16 %v1265, %v1261
        %v1602 = vpack.c.b16 %v1266, %v1262
        %v1603 = vpack.c.b16 %v1267, %v1263
        %v1604 = vpack.c.b16 %v1272, %v1268
        %v1605 = vpack.c.b16 %v1273, %v1269
        %v1606 = vpack.c.b16 %v1274, %v1270
        %v1607 = vpack.c.b16 %v1275, %v1271
        %v1608 = vpack.c.b16 %v1280, %v1276
        %v1609 = vpack.c.b16 %v1281, %v1277
        %v1610 = vpack.c.b16 %v1282, %v1278
        %v1611 = vpack.c.b16 %v1283, %v1279
        %v1612 = vpack.c.b16 %v1288, %v1284
        %v1613 = vpack.c.b16 %v1289, %v1285
        %v1614 = vpack.c.b16 %v1290, %v1286
        %v1615 = vpack.c.b16 %v1291, %v1287
        %v1616 = vpack.c.b16 %v1296, %v1292
        %v1617 = vpack.c.b16 %v1297, %v1293
        %v1618 = vpack.c.b16 %v1298, %v1294
        %v1619 = vpack.c.b16 %v1299, %v1295
        %v1620 = vpack.c.b16 %v1304, %v1300
        %v1621 = vpack.c.b16 %v1305, %v1301
        %v1622 = vpack.c.b16 %v1306, %v1302
        %v1623 = vpack.c.b16 %v1307, %v1303
        %v1624 = vpack.c.b16 %v1312, %v1308
        %v1625 = vpack.c.b16 %v1313, %v1309
        %v1626 = vpack.c.b16 %v1314, %v1310
        %v1627 = vpack.c.b16 %v1315, %v1311
        %v1628 = vpack.c.b16 %v1320, %v1316
        %v1629 = vpack.c.b16 %v1321, %v1317
        %v1630 = vpack.c.b16 %v1322, %v1318
        %v1631 = vpack.c.b16 %v1323, %v1319
        %v1632 = vpack.c.b16 %v1328, %v1324
        %v1633 = vpack.c.b16 %v1329, %v1325
        %v1634 = vpack.c.b16 %v1330, %v1326
        %v1635 = vpack.c.b16 %v1331, %v1327
        %v1636 = vpack.c.b16 %v1336, %v1332
        %v1637 = vpack.c.b16 %v1337, %v1333
        %v1638 = vpack.c.b16 %v1338, %v1334
        %v1639 = vpack.c.b16 %v1339, %v1335
        %v1640 = vpack.c.b16 %v1344, %v1340
        %v1641 = vpack.c.b16 %v1345, %v1341
        %v1642 = vpack.c.b16 %v1346, %v1342
        %v1643 = vpack.c.b16 %v1347, %v1343
        %v1644 = vpack.c.b16 %v1352, %v1348
        %v1645 = vpack.c.b16 %v1353, %v1349
        %v1646 = vpack.c.b16 %v1354, %v1350
        %v1647 = vpack.c.b16 %v1355, %v1351
        %v1648 = vpack.c.b16 %v1360, %v1356
        %v1649 = vpack.c.b16 %v1361, %v1357
        %v1650 = vpack.c.b16 %v1362, %v1358
        %v1651 = vpack.c.b16 %v1363, %v1359
        %v1652 = vpack.c.b16 %v1368, %v1364
        %v1653 = vpack.c.b16 %v1369, %v1365
        %v1654 = vpack.c.b16 %v1370, %v1366
        %v1655 = vpack.c.b16 %v1371, %v1367
        %v1656 = vpack.c.b16 %v1376, %v1372
        %v1657 = vpack.c.b16 %v1377, %v1373
        %v1658 = vpack.c.b16 %v1378, %v1374
        %v1659 = vpack.c.b16 %v1379, %v1375
        %v1660 = vpack.c.b16 %v1384, %v1380
        %v1661 = vpack.c.b16 %v1385, %v1381
        %v1662 = vpack.c.b16 %v1386, %v1382
        %v1663 = vpack.c.b16 %v1387, %v1383
        %v1664 = vpack.c.b16 %v1392, %v1388
        %v1665 = vpack.c.b16 %v1393, %v1389
        %v1666 = vpack.c.b16 %v1394, %v1390
        %v1667 = vpack.c.b16 %v1395, %v1391
        %v1668 = vpack.c.b16 %v1400, %v1396
        %v1669 = vpack.c.b16 %v1401, %v1397
        %v1670 = vpack.c.b16 %v1402, %v1398
        %v1671 = vpack.c.b16 %v1403, %v1399
        %v1672 = vpack.c.b16 %v1408, %v1404
        %v1673 = vpack.c.b16 %v1409, %v1405
        %v1674 = vpack.c.b16 %v1410, %v1406
        %v1675 = vpack.c.b16 %v1411, %v1407
        %v1676 = vpack.c.b16 %v1416, %v1412
        %v1677 = vpack.c.b16 %v1417, %v1413
        %v1678 = vpack.c.b16 %v1418, %v1414
        %v1679 = vpack.c.b16 %v1419, %v1415
        %v1680 = vpack.c.b16 %v1424, %v1420
        %v1681 = vpack.c.b16 %v1425, %v1421
        %v1682 = vpack.c.b16 %v1426, %v1422
        %v1683 = vpack.c.b16 %v1427, %v1423
        %v1684 = vpack.c.b16 %v1432, %v1428
        %v1685 = vpack.c.b16 %v1433, %v1429
        %v1686 = vpack.c.b16 %v1434, %v1430
        %v1687 = vpack.c.b16 %v1435, %v1431
        %v1688 = vpack.c.b16 %v1440, %v1436
        %v1689 = vpack.c.b16 %v1441, %v1437
        %v1690 = vpack.c.b16 %v1442, %v1438
        %v1691 = vpack.c.b16 %v1443, %v1439
        %v1692 = vpack.c.b16 %v1448, %v1444
        %v1693 = vpack.c.b16 %v1449, %v1445
        %v1694 = vpack.c.b16 %v1450, %v1446
        %v1695 = vpack.c.b16 %v1451, %v1447
        %v1696 = vpack.c.b16 %v1456, %v1452
        %v1697 = vpack.c.b16 %v1457, %v1453
        %v1698 = vpack.c.b16 %v1458, %v1454
        %v1699 = vpack.c.b16 %v1459, %v1455
        %v1700 = vpack.c.b16 %v1464, %v1460
        %v1701 = vpack.c.b16 %v1465, %v1461
        %v1702 = vpack.c.b16 %v1466, %v1462
        %v1703 = vpack.c.b16 %v1467, %v1463
        %v1704 = vpack.c.b16 %v1472, %v1468
        %v1705 = vpack.c.b16 %v1473, %v1469
        %v1706 = vpack.c.b16 %v1474, %v1470
        %v1707 = vpack.c.b16 %v1475, %v1471
        %v1708 = vpack.c.b16 %v1480, %v1476
        %v1709 = vpack.c.b16 %v1481, %v1477
        %v1710 = vpack.c.b16 %v1482, %v1478
        %v1711 = vpack.c.b16 %v1483, %v1479
        %v1712 = vpack.c.b16 %v1488, %v1484
        %v1713 = vpack.c.b16 %v1489, %v1485
        %v1714 = vpack.c.b16 %v1490, %v1486
        %v1715 = vpack.c.b16 %v1491, %v1487
        %1940 = vmatprep.subr.bf16.mxu0 %v1493
        %1941 = vmatpush1.bf16.msra.mxu0 %v1492
        %1942 = vmatprep.subr.bf16.mxu0 %v1497
        %1943 = vmatpush1.bf16.msra.mxu0 %v1496
        %1944 = vmatprep.subr.bf16.mxu0 %v1501
        %1945 = vmatpush1.bf16.msra.mxu0 %v1500
        %1946 = vmatprep.subr.bf16.mxu0 %v1505
        %1947 = vmatpush1.bf16.msra.mxu0 %v1504
        %1948 = vmatprep.subr.bf16.mxu0 %v1509
        %1949 = vmatpush1.bf16.msra.mxu0 %v1508
        %1950 = vmatprep.subr.bf16.mxu0 %v1513
        %1951 = vmatpush1.bf16.msra.mxu0 %v1512
        %1952 = vmatprep.subr.bf16.mxu0 %v1517
        %1953 = vmatpush1.bf16.msra.mxu0 %v1516
        %1954 = vmatprep.subr.bf16.mxu0 %v1521
        %1955 = vmatpush1.bf16.msra.mxu0 %v1520
        %1956 = vmatprep.subr.bf16.mxu0 %v1525
        %1957 = vmatpush1.bf16.msra.mxu0 %v1524
        %1958 = vmatprep.subr.bf16.mxu0 %v1529
        %1959 = vmatpush1.bf16.msra.mxu0 %v1528
        %1960 = vmatprep.subr.bf16.mxu0 %v1533
        %1961 = vmatpush1.bf16.msra.mxu0 %v1532
        %1962 = vmatprep.subr.bf16.mxu0 %v1537
        %1963 = vmatpush1.bf16.msra.mxu0 %v1536
        %1964 = vmatprep.subr.bf16.mxu0 %v1541
        %1965 = vmatpush1.bf16.msra.mxu0 %v1540
        %1966 = vmatprep.subr.bf16.mxu0 %v1545
        %1967 = vmatpush1.bf16.msra.mxu0 %v1544
        %1968 = vmatprep.subr.bf16.mxu0 %v1549
        %1969 = vmatpush1.bf16.msra.mxu0 %v1548
        %1970 = vmatprep.subr.bf16.mxu0 %v1553
        %1971 = vmatpush1.bf16.msra.mxu0 %v1552
        %1972 = vmatprep.mubr.bf16.mxu0 %v519
        %1973 = vmatmul.mubr.bf16.gmra.mrb[0].mxu0 %v518
        %v1974 = vpop.f32.mrb[0].mxu0
        %v1975 = vadd.f32 %v803, %v1974
        %v1976 = vpop.f32.mrb[0].mxu0
        %v1977 = vadd.f32 %v807, %v1976
        %v1978 = vpop.f32.mrb[0].mxu0
        %v1979 = vadd.f32 %v803, %v1978
        %v1980 = vpop.f32.mrb[0].mxu0
        %v1981 = vadd.f32 %v807, %v1980
        %1982 = vmatprep.mubr.bf16.mxu0 %v526
        %1983 = vmatmul.mubr.bf16.gmra.mrb[0].mxu0 %v525
        %v1984 = vpop.f32.mrb[0].mxu0
        %v1985 = vadd.f32 %v803, %v1984
        %v1986 = vpop.f32.mrb[0].mxu0
        %v1987 = vadd.f32 %v807, %v1986
        %v1988 = vpop.f32.mrb[0].mxu0
        %v1989 = vadd.f32 %v803, %v1988
        %v1990 = vpop.f32.mrb[0].mxu0
        %v1991 = vadd.f32 %v807, %v1990
        %1992 = vmatprep.mubr.bf16.mxu0 %v533
        %1993 = vmatmul.mubr.bf16.gmra.mrb[0].mxu0 %v532
        %v1994 = vpop.f32.mrb[0].mxu0
        %v1995 = vadd.f32 %v803, %v1994
        %v1996 = vpop.f32.mrb[0].mxu0
        %v1997 = vadd.f32 %v807, %v1996
        %v1998 = vpop.f32.mrb[0].mxu0
        %v1999 = vadd.f32 %v803, %v1998
        %v2000 = vpop.f32.mrb[0].mxu0
        %v2001 = vadd.f32 %v807, %v2000
        %2002 = vmatprep.mubr.bf16.mxu0 %v540
        %2003 = vmatmul.mubr.bf16.gmra.mrb[0].mxu0 %v539
        %v2004 = vpop.f32.mrb[0].mxu0
        %v2005 = vadd.f32 %v803, %v2004
        %v2006 = vpop.f32.mrb[0].mxu0
        %v2007 = vadd.f32 %v807, %v2006
        %v2008 = vpop.f32.mrb[0].mxu0
        %v2009 = vadd.f32 %v803, %v2008
        %v2010 = vpop.f32.mrb[0].mxu0
        %v2011 = vadd.f32 %v807, %v2010
        %2012 = vmatprep.mubr.bf16.mxu0 %v547
        %2013 = vmatmul.mubr.bf16.gmra.mrb[0].mxu0 %v546
        %v2014 = vpop.f32.mrb[0].mxu0
        %v2015 = vadd.f32 %v803, %v2014
        %v2016 = vpop.f32.mrb[0].mxu0
        %v2017 = vadd.f32 %v807, %v2016
        %v2018 = vpop.f32.mrb[0].mxu0
        %v2019 = vadd.f32 %v803, %v2018
        %v2020 = vpop.f32.mrb[0].mxu0
        %v2021 = vadd.f32 %v807, %v2020
        %2022 = vmatprep.mubr.bf16.mxu0 %v554
        %2023 = vmatmul.mubr.bf16.gmra.mrb[0].mxu0 %v553
        %v2024 = vpop.f32.mrb[0].mxu0
        %v2025 = vadd.f32 %v803, %v2024
        %v2026 = vpop.f32.mrb[0].mxu0
        %v2027 = vadd.f32 %v807, %v2026
        %v2028 = vpop.f32.mrb[0].mxu0
        %v2029 = vadd.f32 %v803, %v2028
        %v2030 = vpop.f32.mrb[0].mxu0
        %v2031 = vadd.f32 %v807, %v2030
        %2032 = vmatprep.mubr.bf16.mxu0 %v561
        %2033 = vmatmul.mubr.bf16.gmra.mrb[0].mxu0 %v560
        %v2034 = vpop.f32.mrb[0].mxu0
        %v2035 = vadd.f32 %v803, %v2034
        %v2036 = vpop.f32.mrb[0].mxu0
        %v2037 = vadd.f32 %v807, %v2036
        %v2038 = vpop.f32.mrb[0].mxu0
        %v2039 = vadd.f32 %v803, %v2038
        %v2040 = vpop.f32.mrb[0].mxu0
        %v2041 = vadd.f32 %v807, %v2040
        %2042 = vmatprep.mubr.bf16.mxu0 %v568
        %2043 = vmatmul.mubr.bf16.gmra.mrb[0].mxu0 %v567
        %v2044 = vpop.f32.mrb[0].mxu0
        %v2045 = vadd.f32 %v803, %v2044
        %v2046 = vpop.f32.mrb[0].mxu0
        %v2047 = vadd.f32 %v807, %v2046
        %v2048 = vpop.f32.mrb[0].mxu0
        %v2049 = vadd.f32 %v803, %v2048
        %v2050 = vpop.f32.mrb[0].mxu0
        %v2051 = vadd.f32 %v807, %v2050
        %2052 = vdwg.mxu0
        %2053 = vmatprep.subr.bf16.mxu0 %v1557
        %2054 = vmatpush1.bf16.msra.mxu0 %v1556
        %2055 = vmatprep.subr.bf16.mxu0 %v1561
        %2056 = vmatpush1.bf16.msra.mxu0 %v1560
        %2057 = vmatprep.subr.bf16.mxu0 %v1565
        %2058 = vmatpush1.bf16.msra.mxu0 %v1564
        %2059 = vmatprep.subr.bf16.mxu0 %v1569
        %2060 = vmatpush1.bf16.msra.mxu0 %v1568
        %2061 = vmatprep.subr.bf16.mxu0 %v1573
        %2062 = vmatpush1.bf16.msra.mxu0 %v1572
        %2063 = vmatprep.subr.bf16.mxu0 %v1577
        %2064 = vmatpush1.bf16.msra.mxu0 %v1576
        %2065 = vmatprep.subr.bf16.mxu0 %v1581
        %2066 = vmatpush1.bf16.msra.mxu0 %v1580
        %2067 = vmatprep.subr.bf16.mxu0 %v1585
        %2068 = vmatpush1.bf16.msra.mxu0 %v1584
        %2069 = vmatprep.subr.bf16.mxu0 %v1589
        %2070 = vmatpush1.bf16.msra.mxu0 %v1588
        %2071 = vmatprep.subr.bf16.mxu0 %v1593
        %2072 = vmatpush1.bf16.msra.mxu0 %v1592
        %2073 = vmatprep.subr.bf16.mxu0 %v1597
        %2074 = vmatpush1.bf16.msra.mxu0 %v1596
        %2075 = vmatprep.subr.bf16.mxu0 %v1601
        %2076 = vmatpush1.bf16.msra.mxu0 %v1600
        %2077 = vmatprep.subr.bf16.mxu0 %v1605
        %2078 = vmatpush1.bf16.msra.mxu0 %v1604
        %2079 = vmatprep.subr.bf16.mxu0 %v1609
        %2080 = vmatpush1.bf16.msra.mxu0 %v1608
        %2081 = vmatprep.subr.bf16.mxu0 %v1613
        %2082 = vmatpush1.bf16.msra.mxu0 %v1612
        %2083 = vmatprep.subr.bf16.mxu0 %v1617
        %2084 = vmatpush1.bf16.msra.mxu0 %v1616
        %2085 = vmatprep.mubr.bf16.mxu0 %v521
        %2086 = vmatmul.mubr.bf16.gmra.mrb[0].mxu0 %v520
        %v2087 = vpop.f32.mrb[0].mxu0
        %v2088 = vadd.f32 %v1975, %v2087
        %v2089 = vpop.f32.mrb[0].mxu0
        %v2090 = vadd.f32 %v1977, %v2089
        %v2091 = vpop.f32.mrb[0].mxu0
        %v2092 = vadd.f32 %v1979, %v2091
        %v2093 = vpop.f32.mrb[0].mxu0
        %v2094 = vadd.f32 %v1981, %v2093
        %2095 = vmatprep.mubr.bf16.mxu0 %v528
        %2096 = vmatmul.mubr.bf16.gmra.mrb[0].mxu0 %v527
        %v2097 = vpop.f32.mrb[0].mxu0
        %v2098 = vadd.f32 %v1985, %v2097
        %v2099 = vpop.f32.mrb[0].mxu0
        %v2100 = vadd.f32 %v1987, %v2099
        %v2101 = vpop.f32.mrb[0].mxu0
        %v2102 = vadd.f32 %v1989, %v2101
        %v2103 = vpop.f32.mrb[0].mxu0
        %v2104 = vadd.f32 %v1991, %v2103
        %2105 = vmatprep.mubr.bf16.mxu0 %v535
        %2106 = vmatmul.mubr.bf16.gmra.mrb[0].mxu0 %v534
        %v2107 = vpop.f32.mrb[0].mxu0
        %v2108 = vadd.f32 %v1995, %v2107
        %v2109 = vpop.f32.mrb[0].mxu0
        %v2110 = vadd.f32 %v1997, %v2109
        %v2111 = vpop.f32.mrb[0].mxu0
        %v2112 = vadd.f32 %v1999, %v2111
        %v2113 = vpop.f32.mrb[0].mxu0
        %v2114 = vadd.f32 %v2001, %v2113
        %2115 = vmatprep.mubr.bf16.mxu0 %v542
        %2116 = vmatmul.mubr.bf16.gmra.mrb[0].mxu0 %v541
        %v2117 = vpop.f32.mrb[0].mxu0
        %v2118 = vadd.f32 %v2005, %v2117
        %v2119 = vpop.f32.mrb[0].mxu0
        %v2120 = vadd.f32 %v2007, %v2119
        %v2121 = vpop.f32.mrb[0].mxu0
        %v2122 = vadd.f32 %v2009, %v2121
        %v2123 = vpop.f32.mrb[0].mxu0
        %v2124 = vadd.f32 %v2011, %v2123
        %2125 = vmatprep.mubr.bf16.mxu0 %v549
        %2126 = vmatmul.mubr.bf16.gmra.mrb[0].mxu0 %v548
        %v2127 = vpop.f32.mrb[0].mxu0
        %v2128 = vadd.f32 %v2015, %v2127
        %v2129 = vpop.f32.mrb[0].mxu0
        %v2130 = vadd.f32 %v2017, %v2129
        %v2131 = vpop.f32.mrb[0].mxu0
        %v2132 = vadd.f32 %v2019, %v2131
        %v2133 = vpop.f32.mrb[0].mxu0
        %v2134 = vadd.f32 %v2021, %v2133
        %2135 = vmatprep.mubr.bf16.mxu0 %v556
        %2136 = vmatmul.mubr.bf16.gmra.mrb[0].mxu0 %v555
        %v2137 = vpop.f32.mrb[0].mxu0
        %v2138 = vadd.f32 %v2025, %v2137
        %v2139 = vpop.f32.mrb[0].mxu0
        %v2140 = vadd.f32 %v2027, %v2139
        %v2141 = vpop.f32.mrb[0].mxu0
        %v2142 = vadd.f32 %v2029, %v2141
        %v2143 = vpop.f32.mrb[0].mxu0
        %v2144 = vadd.f32 %v2031, %v2143
        %2145 = vmatprep.mubr.bf16.mxu0 %v563
        %2146 = vmatmul.mubr.bf16.gmra.mrb[0].mxu0 %v562
        %v2147 = vpop.f32.mrb[0].mxu0
        %v2148 = vadd.f32 %v2035, %v2147
        %v2149 = vpop.f32.mrb[0].mxu0
        %v2150 = vadd.f32 %v2037, %v2149
        %v2151 = vpop.f32.mrb[0].mxu0
        %v2152 = vadd.f32 %v2039, %v2151
        %v2153 = vpop.f32.mrb[0].mxu0
        %v2154 = vadd.f32 %v2041, %v2153
        %2155 = vmatprep.mubr.bf16.mxu0 %v570
        %2156 = vmatmul.mubr.bf16.gmra.mrb[0].mxu0 %v569
        %v2157 = vpop.f32.mrb[0].mxu0
        %v2158 = vadd.f32 %v2045, %v2157
        %v2159 = vpop.f32.mrb[0].mxu0
        %v2160 = vadd.f32 %v2047, %v2159
        %v2161 = vpop.f32.mrb[0].mxu0
        %v2162 = vadd.f32 %v2049, %v2161
        %v2163 = vpop.f32.mrb[0].mxu0
        %v2164 = vadd.f32 %v2051, %v2163
        %2165 = vdwg.mxu0
        %2166 = vmatprep.subr.bf16.mxu0 %v1621
        %2167 = vmatpush1.bf16.msra.mxu0 %v1620
        %2168 = vmatprep.subr.bf16.mxu0 %v1625
        %2169 = vmatpush1.bf16.msra.mxu0 %v1624
        %2170 = vmatprep.subr.bf16.mxu0 %v1629
        %2171 = vmatpush1.bf16.msra.mxu0 %v1628
        %2172 = vmatprep.subr.bf16.mxu0 %v1633
        %2173 = vmatpush1.bf16.msra.mxu0 %v1632
        %2174 = vmatprep.subr.bf16.mxu0 %v1637
        %2175 = vmatpush1.bf16.msra.mxu0 %v1636
        %2176 = vmatprep.subr.bf16.mxu0 %v1641
        %2177 = vmatpush1.bf16.msra.mxu0 %v1640
        %2178 = vmatprep.subr.bf16.mxu0 %v1645
        %2179 = vmatpush1.bf16.msra.mxu0 %v1644
        %2180 = vmatprep.subr.bf16.mxu0 %v1649
        %2181 = vmatpush1.bf16.msra.mxu0 %v1648
        %2182 = vmatprep.subr.bf16.mxu0 %v1653
        %2183 = vmatpush1.bf16.msra.mxu0 %v1652
        %2184 = vmatprep.subr.bf16.mxu0 %v1657
        %2185 = vmatpush1.bf16.msra.mxu0 %v1656
        %2186 = vmatprep.subr.bf16.mxu0 %v1661
        %2187 = vmatpush1.bf16.msra.mxu0 %v1660
        %2188 = vmatprep.subr.bf16.mxu0 %v1665
        %2189 = vmatpush1.bf16.msra.mxu0 %v1664
        %2190 = vmatprep.subr.bf16.mxu0 %v1669
        %2191 = vmatpush1.bf16.msra.mxu0 %v1668
        %2192 = vmatprep.subr.bf16.mxu0 %v1673
        %2193 = vmatpush1.bf16.msra.mxu0 %v1672
        %2194 = vmatprep.subr.bf16.mxu0 %v1677
        %2195 = vmatpush1.bf16.msra.mxu0 %v1676
        %2196 = vmatprep.subr.bf16.mxu0 %v1681
        %2197 = vmatpush1.bf16.msra.mxu0 %v1680
        %2198 = vmatprep.mubr.bf16.mxu0 %v523
        %2199 = vmatmul.mubr.bf16.gmra.mrb[0].mxu0 %v522
        %v2200 = vpop.f32.mrb[0].mxu0
        %v2201 = vadd.f32 %v2088, %v2200
        %v2202 = vpop.f32.mrb[0].mxu0
        %v2203 = vadd.f32 %v2090, %v2202
        %v2204 = vpop.f32.mrb[0].mxu0
        %v2205 = vadd.f32 %v2092, %v2204
        %v2206 = vpop.f32.mrb[0].mxu0
        %v2207 = vadd.f32 %v2094, %v2206
        %2208 = vmatprep.mubr.bf16.mxu0 %v530
        %2209 = vmatmul.mubr.bf16.gmra.mrb[0].mxu0 %v529
        %v2210 = vpop.f32.mrb[0].mxu0
        %v2211 = vadd.f32 %v2098, %v2210
        %v2212 = vpop.f32.mrb[0].mxu0
        %v2213 = vadd.f32 %v2100, %v2212
        %v2214 = vpop.f32.mrb[0].mxu0
        %v2215 = vadd.f32 %v2102, %v2214
        %v2216 = vpop.f32.mrb[0].mxu0
        %v2217 = vadd.f32 %v2104, %v2216
        %2218 = vmatprep.mubr.bf16.mxu0 %v537
        %2219 = vmatmul.mubr.bf16.gmra.mrb[0].mxu0 %v536
        %v2220 = vpop.f32.mrb[0].mxu0
        %v2221 = vadd.f32 %v2108, %v2220
        %v2222 = vpop.f32.mrb[0].mxu0
        %v2223 = vadd.f32 %v2110, %v2222
        %v2224 = vpop.f32.mrb[0].mxu0
        %v2225 = vadd.f32 %v2112, %v2224
        %v2226 = vpop.f32.mrb[0].mxu0
        %v2227 = vadd.f32 %v2114, %v2226
        %2228 = vmatprep.mubr.bf16.mxu0 %v544
        %2229 = vmatmul.mubr.bf16.gmra.mrb[0].mxu0 %v543
        %v2230 = vpop.f32.mrb[0].mxu0
        %v2231 = vadd.f32 %v2118, %v2230
        %v2232 = vpop.f32.mrb[0].mxu0
        %v2233 = vadd.f32 %v2120, %v2232
        %v2234 = vpop.f32.mrb[0].mxu0
        %v2235 = vadd.f32 %v2122, %v2234
        %v2236 = vpop.f32.mrb[0].mxu0
        %v2237 = vadd.f32 %v2124, %v2236
        %2238 = vmatprep.mubr.bf16.mxu0 %v551
        %2239 = vmatmul.mubr.bf16.gmra.mrb[0].mxu0 %v550
        %v2240 = vpop.f32.mrb[0].mxu0
        %v2241 = vadd.f32 %v2128, %v2240
        %v2242 = vpop.f32.mrb[0].mxu0
        %v2243 = vadd.f32 %v2130, %v2242
        %v2244 = vpop.f32.mrb[0].mxu0
        %v2245 = vadd.f32 %v2132, %v2244
        %v2246 = vpop.f32.mrb[0].mxu0
        %v2247 = vadd.f32 %v2134, %v2246
        %2248 = vmatprep.mubr.bf16.mxu0 %v558
        %2249 = vmatmul.mubr.bf16.gmra.mrb[0].mxu0 %v557
        %v2250 = vpop.f32.mrb[0].mxu0
        %v2251 = vadd.f32 %v2138, %v2250
        %v2252 = vpop.f32.mrb[0].mxu0
        %v2253 = vadd.f32 %v2140, %v2252
        %v2254 = vpop.f32.mrb[0].mxu0
        %v2255 = vadd.f32 %v2142, %v2254
        %v2256 = vpop.f32.mrb[0].mxu0
        %v2257 = vadd.f32 %v2144, %v2256
        %2258 = vmatprep.mubr.bf16.mxu0 %v565
        %2259 = vmatmul.mubr.bf16.gmra.mrb[0].mxu0 %v564
        %v2260 = vpop.f32.mrb[0].mxu0
        %v2261 = vadd.f32 %v2148, %v2260
        %v2262 = vpop.f32.mrb[0].mxu0
        %v2263 = vadd.f32 %v2150, %v2262
        %v2264 = vpop.f32.mrb[0].mxu0
        %v2265 = vadd.f32 %v2152, %v2264
        %v2266 = vpop.f32.mrb[0].mxu0
        %v2267 = vadd.f32 %v2154, %v2266
        %2268 = vmatprep.mubr.bf16.mxu0 %v572
        %2269 = vmatmul.mubr.bf16.gmra.mrb[0].mxu0 %v571
        %v2270 = vpop.f32.mrb[0].mxu0
        %v2271 = vadd.f32 %v2158, %v2270
        %v2272 = vpop.f32.mrb[0].mxu0
        %v2273 = vadd.f32 %v2160, %v2272
        %v2274 = vpop.f32.mrb[0].mxu0
        %v2275 = vadd.f32 %v2162, %v2274
        %v2276 = vpop.f32.mrb[0].mxu0
        %v2277 = vadd.f32 %v2164, %v2276
        %2278 = vdwg.mxu0
        %2279 = vmatprep.subr.bf16.mxu0 %v1685
        %2280 = vmatpush1.bf16.msra.mxu0 %v1684
        %2281 = vmatprep.subr.bf16.mxu0 %v1689
        %2282 = vmatpush1.bf16.msra.mxu0 %v1688
        %2283 = vmatprep.subr.bf16.mxu0 %v1693
        %2284 = vmatpush1.bf16.msra.mxu0 %v1692
        %2285 = vmatprep.subr.bf16.mxu0 %v1697
        %2286 = vmatpush1.bf16.msra.mxu0 %v1696
        %2287 = vmatprep.subr.bf16.mxu0 %v1701
        %2288 = vmatpush1.bf16.msra.mxu0 %v1700
        %2289 = vmatprep.subr.bf16.mxu0 %v1705
        %2290 = vmatpush1.bf16.msra.mxu0 %v1704
        %2291 = vmatprep.subr.bf16.mxu0 %v1709
        %2292 = vmatpush1.bf16.msra.mxu0 %v1708
        %2293 = vmatprep.subr.bf16.mxu0 %v1713
        %2294 = vmatpush1.bf16.msra.mxu0 %v1712
        %2295 = vmatprep.subr.bf16.mxu0 0
        %2296 = vmatpush1.bf16.msra.mxu0 0
        %2297 = vmatprep.subr.bf16.mxu0 0
        %2298 = vmatpush1.bf16.msra.mxu0 0
        %2299 = vmatprep.subr.bf16.mxu0 0
        %2300 = vmatpush1.bf16.msra.mxu0 0
        %2301 = vmatprep.subr.bf16.mxu0 0
        %2302 = vmatpush1.bf16.msra.mxu0 0
        %2303 = vmatprep.subr.bf16.mxu0 0
        %2304 = vmatpush1.bf16.msra.mxu0 0
        %2305 = vmatprep.subr.bf16.mxu0 0
        %2306 = vmatpush1.bf16.msra.mxu0 0
        %2307 = vmatprep.subr.bf16.mxu0 0
        %2308 = vmatpush1.bf16.msra.mxu0 0
        %2309 = vmatprep.subr.bf16.mxu0 0
        %2310 = vmatpush1.bf16.msra.mxu0 0
        %2311 = vmatprep.mubr.bf16.mxu0 0
        %2312 = vmatmul.mubr.bf16.gmra.mrb[0].mxu0 %v524
        %v2313 = vpop.f32.mrb[0].mxu0
        %v2314 = vadd.f32 %v2201, %v2313
        %v2315 = vpop.f32.mrb[0].mxu0
        %v2316 = vadd.f32 %v2203, %v2315
        %v2317 = vpop.f32.mrb[0].mxu0
        %v2318 = vadd.f32 %v2205, %v2317
        %v2319 = vpop.f32.mrb[0].mxu0
        %v2320 = vadd.f32 %v2207, %v2319
        %2321 = vmatprep.mubr.bf16.mxu0 0
        %2322 = vmatmul.mubr.bf16.gmra.mrb[0].mxu0 %v531
        %v2323 = vpop.f32.mrb[0].mxu0
        %v2324 = vadd.f32 %v2211, %v2323
        %v2325 = vpop.f32.mrb[0].mxu0
        %v2326 = vadd.f32 %v2213, %v2325
        %v2327 = vpop.f32.mrb[0].mxu0
        %v2328 = vadd.f32 %v2215, %v2327
        %v2329 = vpop.f32.mrb[0].mxu0
        %v2330 = vadd.f32 %v2217, %v2329
        %2331 = vmatprep.mubr.bf16.mxu0 0
        %2332 = vmatmul.mubr.bf16.gmra.mrb[0].mxu0 %v538
        %v2333 = vpop.f32.mrb[0].mxu0
        %v2334 = vadd.f32 %v2221, %v2333
        %v2335 = vpop.f32.mrb[0].mxu0
        %v2336 = vadd.f32 %v2223, %v2335
        %v2337 = vpop.f32.mrb[0].mxu0
        %v2338 = vadd.f32 %v2225, %v2337
        %v2339 = vpop.f32.mrb[0].mxu0
        %v2340 = vadd.f32 %v2227, %v2339
        %2341 = vmatprep.mubr.bf16.mxu0 0
        %2342 = vmatmul.mubr.bf16.gmra.mrb[0].mxu0 %v545
        %v2343 = vpop.f32.mrb[0].mxu0
        %v2344 = vadd.f32 %v2231, %v2343
        %v2345 = vpop.f32.mrb[0].mxu0
        %v2346 = vadd.f32 %v2233, %v2345
        %v2347 = vpop.f32.mrb[0].mxu0
        %v2348 = vadd.f32 %v2235, %v2347
        %v2349 = vpop.f32.mrb[0].mxu0
        %v2350 = vadd.f32 %v2237, %v2349
        %2351 = vmatprep.mubr.bf16.mxu0 0
        %2352 = vmatmul.mubr.bf16.gmra.mrb[0].mxu0 %v552
        %v2353 = vpop.f32.mrb[0].mxu0
        %v2354 = vadd.f32 %v2241, %v2353
        %v2355 = vpop.f32.mrb[0].mxu0
        %v2356 = vadd.f32 %v2243, %v2355
        %v2357 = vpop.f32.mrb[0].mxu0
        %v2358 = vadd.f32 %v2245, %v2357
        %v2359 = vpop.f32.mrb[0].mxu0
        %v2360 = vadd.f32 %v2247, %v2359
        %2361 = vmatprep.mubr.bf16.mxu0 0
        %2362 = vmatmul.mubr.bf16.gmra.mrb[0].mxu0 %v559
        %v2363 = vpop.f32.mrb[0].mxu0
        %v2364 = vadd.f32 %v2251, %v2363
        %v2365 = vpop.f32.mrb[0].mxu0
        %v2366 = vadd.f32 %v2253, %v2365
        %v2367 = vpop.f32.mrb[0].mxu0
        %v2368 = vadd.f32 %v2255, %v2367
        %v2369 = vpop.f32.mrb[0].mxu0
        %v2370 = vadd.f32 %v2257, %v2369
        %2371 = vmatprep.mubr.bf16.mxu0 0
        %2372 = vmatmul.mubr.bf16.gmra.mrb[0].mxu0 %v566
        %v2373 = vpop.f32.mrb[0].mxu0
        %v2374 = vadd.f32 %v2261, %v2373
        %v2375 = vpop.f32.mrb[0].mxu0
        %v2376 = vadd.f32 %v2263, %v2375
        %v2377 = vpop.f32.mrb[0].mxu0
        %v2378 = vadd.f32 %v2265, %v2377
        %v2379 = vpop.f32.mrb[0].mxu0
        %v2380 = vadd.f32 %v2267, %v2379
        %2381 = vmatprep.mubr.bf16.mxu0 0
        %2382 = vmatmul.mubr.bf16.gmra.mrb[0].mxu0 %v573
        %v2383 = vpop.f32.mrb[0].mxu0
        %v2384 = vadd.f32 %v2271, %v2383
        %v2385 = vpop.f32.mrb[0].mxu0
        %v2386 = vadd.f32 %v2273, %v2385
        %v2387 = vpop.f32.mrb[0].mxu0
        %v2388 = vadd.f32 %v2275, %v2387
        %v2389 = vpop.f32.mrb[0].mxu0
        %v2390 = vadd.f32 %v2277, %v2389
        %2391 = vdwg.mxu0
        %2392 = vmatprep.subr.bf16.mxu0 %v1495
        %2393 = vmatpush1.bf16.msra.mxu0 %v1494
        %2394 = vmatprep.subr.bf16.mxu0 %v1499
        %2395 = vmatpush1.bf16.msra.mxu0 %v1498
        %2396 = vmatprep.subr.bf16.mxu0 %v1503
        %2397 = vmatpush1.bf16.msra.mxu0 %v1502
        %2398 = vmatprep.subr.bf16.mxu0 %v1507
        %2399 = vmatpush1.bf16.msra.mxu0 %v1506
        %2400 = vmatprep.subr.bf16.mxu0 %v1511
        %2401 = vmatpush1.bf16.msra.mxu0 %v1510
        %2402 = vmatprep.subr.bf16.mxu0 %v1515
        %2403 = vmatpush1.bf16.msra.mxu0 %v1514
        %2404 = vmatprep.subr.bf16.mxu0 %v1519
        %2405 = vmatpush1.bf16.msra.mxu0 %v1518
        %2406 = vmatprep.subr.bf16.mxu0 %v1523
        %2407 = vmatpush1.bf16.msra.mxu0 %v1522
        %2408 = vmatprep.subr.bf16.mxu0 %v1527
        %2409 = vmatpush1.bf16.msra.mxu0 %v1526
        %2410 = vmatprep.subr.bf16.mxu0 %v1531
        %2411 = vmatpush1.bf16.msra.mxu0 %v1530
        %2412 = vmatprep.subr.bf16.mxu0 %v1535
        %2413 = vmatpush1.bf16.msra.mxu0 %v1534
        %2414 = vmatprep.subr.bf16.mxu0 %v1539
        %2415 = vmatpush1.bf16.msra.mxu0 %v1538
        %2416 = vmatprep.subr.bf16.mxu0 %v1543
        %2417 = vmatpush1.bf16.msra.mxu0 %v1542
        %2418 = vmatprep.subr.bf16.mxu0 %v1547
        %2419 = vmatpush1.bf16.msra.mxu0 %v1546
        %2420 = vmatprep.subr.bf16.mxu0 %v1551
        %2421 = vmatpush1.bf16.msra.mxu0 %v1550
        %2422 = vmatprep.subr.bf16.mxu0 %v1555
        %2423 = vmatpush1.bf16.msra.mxu0 %v1554
        %2424 = vmatprep.mubr.bf16.mxu0 %v519
        %2425 = vmatmul.mubr.bf16.gmra.mrb[0].mxu0 %v518
        %v2426 = vpop.f32.mrb[0].mxu0
        %v2427 = vadd.f32 %v811, %v2426
        %v2428 = vpop.f32.mrb[0].mxu0
        %v2429 = vadd.f32 %v815, %v2428
        %v2430 = vpop.f32.mrb[0].mxu0
        %v2431 = vadd.f32 %v811, %v2430
        %v2432 = vpop.f32.mrb[0].mxu0
        %v2433 = vadd.f32 %v815, %v2432
        %2434 = vmatprep.mubr.bf16.mxu0 %v526
        %2435 = vmatmul.mubr.bf16.gmra.mrb[0].mxu0 %v525
        %v2436 = vpop.f32.mrb[0].mxu0
        %v2437 = vadd.f32 %v811, %v2436
        %v2438 = vpop.f32.mrb[0].mxu0
        %v2439 = vadd.f32 %v815, %v2438
        %v2440 = vpop.f32.mrb[0].mxu0
        %v2441 = vadd.f32 %v811, %v2440
        %v2442 = vpop.f32.mrb[0].mxu0
        %v2443 = vadd.f32 %v815, %v2442
        %2444 = vmatprep.mubr.bf16.mxu0 %v533
        %2445 = vmatmul.mubr.bf16.gmra.mrb[0].mxu0 %v532
        %v2446 = vpop.f32.mrb[0].mxu0
        %v2447 = vadd.f32 %v811, %v2446
        %v2448 = vpop.f32.mrb[0].mxu0
        %v2449 = vadd.f32 %v815, %v2448
        %v2450 = vpop.f32.mrb[0].mxu0
        %v2451 = vadd.f32 %v811, %v2450
        %v2452 = vpop.f32.mrb[0].mxu0
        %v2453 = vadd.f32 %v815, %v2452
        %2454 = vmatprep.mubr.bf16.mxu0 %v540
        %2455 = vmatmul.mubr.bf16.gmra.mrb[0].mxu0 %v539
        %v2456 = vpop.f32.mrb[0].mxu0
        %v2457 = vadd.f32 %v811, %v2456
        %v2458 = vpop.f32.mrb[0].mxu0
        %v2459 = vadd.f32 %v815, %v2458
        %v2460 = vpop.f32.mrb[0].mxu0
        %v2461 = vadd.f32 %v811, %v2460
        %v2462 = vpop.f32.mrb[0].mxu0
        %v2463 = vadd.f32 %v815, %v2462
        %2464 = vmatprep.mubr.bf16.mxu0 %v547
        %2465 = vmatmul.mubr.bf16.gmra.mrb[0].mxu0 %v546
        %v2466 = vpop.f32.mrb[0].mxu0
        %v2467 = vadd.f32 %v811, %v2466
        %v2468 = vpop.f32.mrb[0].mxu0
        %v2469 = vadd.f32 %v815, %v2468
        %v2470 = vpop.f32.mrb[0].mxu0
        %v2471 = vadd.f32 %v811, %v2470
        %v2472 = vpop.f32.mrb[0].mxu0
        %v2473 = vadd.f32 %v815, %v2472
        %2474 = vmatprep.mubr.bf16.mxu0 %v554
        %2475 = vmatmul.mubr.bf16.gmra.mrb[0].mxu0 %v553
        %v2476 = vpop.f32.mrb[0].mxu0
        %v2477 = vadd.f32 %v811, %v2476
        %v2478 = vpop.f32.mrb[0].mxu0
        %v2479 = vadd.f32 %v815, %v2478
        %v2480 = vpop.f32.mrb[0].mxu0
        %v2481 = vadd.f32 %v811, %v2480
        %v2482 = vpop.f32.mrb[0].mxu0
        %v2483 = vadd.f32 %v815, %v2482
        %2484 = vmatprep.mubr.bf16.mxu0 %v561
        %2485 = vmatmul.mubr.bf16.gmra.mrb[0].mxu0 %v560
        %v2486 = vpop.f32.mrb[0].mxu0
        %v2487 = vadd.f32 %v811, %v2486
        %v2488 = vpop.f32.mrb[0].mxu0
        %v2489 = vadd.f32 %v815, %v2488
        %v2490 = vpop.f32.mrb[0].mxu0
        %v2491 = vadd.f32 %v811, %v2490
        %v2492 = vpop.f32.mrb[0].mxu0
        %v2493 = vadd.f32 %v815, %v2492
        %2494 = vmatprep.mubr.bf16.mxu0 %v568
        %2495 = vmatmul.mubr.bf16.gmra.mrb[0].mxu0 %v567
        %v2496 = vpop.f32.mrb[0].mxu0
        %v2497 = vadd.f32 %v811, %v2496
        %v2498 = vpop.f32.mrb[0].mxu0
        %v2499 = vadd.f32 %v815, %v2498
        %v2500 = vpop.f32.mrb[0].mxu0
        %v2501 = vadd.f32 %v811, %v2500
        %v2502 = vpop.f32.mrb[0].mxu0
        %v2503 = vadd.f32 %v815, %v2502
        %2504 = vdwg.mxu0
        %2505 = vmatprep.subr.bf16.mxu0 %v1559
        %2506 = vmatpush1.bf16.msra.mxu0 %v1558
        %2507 = vmatprep.subr.bf16.mxu0 %v1563
        %2508 = vmatpush1.bf16.msra.mxu0 %v1562
        %2509 = vmatprep.subr.bf16.mxu0 %v1567
        %2510 = vmatpush1.bf16.msra.mxu0 %v1566
        %2511 = vmatprep.subr.bf16.mxu0 %v1571
        %2512 = vmatpush1.bf16.msra.mxu0 %v1570
        %2513 = vmatprep.subr.bf16.mxu0 %v1575
        %2514 = vmatpush1.bf16.msra.mxu0 %v1574
        %2515 = vmatprep.subr.bf16.mxu0 %v1579
        %2516 = vmatpush1.bf16.msra.mxu0 %v1578
        %2517 = vmatprep.subr.bf16.mxu0 %v1583
        %2518 = vmatpush1.bf16.msra.mxu0 %v1582
        %2519 = vmatprep.subr.bf16.mxu0 %v1587
        %2520 = vmatpush1.bf16.msra.mxu0 %v1586
        %2521 = vmatprep.subr.bf16.mxu0 %v1591
        %2522 = vmatpush1.bf16.msra.mxu0 %v1590
        %2523 = vmatprep.subr.bf16.mxu0 %v1595
        %2524 = vmatpush1.bf16.msra.mxu0 %v1594
        %2525 = vmatprep.subr.bf16.mxu0 %v1599
        %2526 = vmatpush1.bf16.msra.mxu0 %v1598
        %2527 = vmatprep.subr.bf16.mxu0 %v1603
        %2528 = vmatpush1.bf16.msra.mxu0 %v1602
        %2529 = vmatprep.subr.bf16.mxu0 %v1607
        %2530 = vmatpush1.bf16.msra.mxu0 %v1606
        %2531 = vmatprep.subr.bf16.mxu0 %v1611
        %2532 = vmatpush1.bf16.msra.mxu0 %v1610
        %2533 = vmatprep.subr.bf16.mxu0 %v1615
        %2534 = vmatpush1.bf16.msra.mxu0 %v1614
        %2535 = vmatprep.subr.bf16.mxu0 %v1619
        %2536 = vmatpush1.bf16.msra.mxu0 %v1618
        %2537 = vmatprep.mubr.bf16.mxu0 %v521
        %2538 = vmatmul.mubr.bf16.gmra.mrb[0].mxu0 %v520
        %v2539 = vpop.f32.mrb[0].mxu0
        %v2540 = vadd.f32 %v2427, %v2539
        %v2541 = vpop.f32.mrb[0].mxu0
        %v2542 = vadd.f32 %v2429, %v2541
        %v2543 = vpop.f32.mrb[0].mxu0
        %v2544 = vadd.f32 %v2431, %v2543
        %v2545 = vpop.f32.mrb[0].mxu0
        %v2546 = vadd.f32 %v2433, %v2545
        %2547 = vmatprep.mubr.bf16.mxu0 %v528
        %2548 = vmatmul.mubr.bf16.gmra.mrb[0].mxu0 %v527
        %v2549 = vpop.f32.mrb[0].mxu0
        %v2550 = vadd.f32 %v2437, %v2549
        %v2551 = vpop.f32.mrb[0].mxu0
        %v2552 = vadd.f32 %v2439, %v2551
        %v2553 = vpop.f32.mrb[0].mxu0
        %v2554 = vadd.f32 %v2441, %v2553
        %v2555 = vpop.f32.mrb[0].mxu0
        %v2556 = vadd.f32 %v2443, %v2555
        %2557 = vmatprep.mubr.bf16.mxu0 %v535
        %2558 = vmatmul.mubr.bf16.gmra.mrb[0].mxu0 %v534
        %v2559 = vpop.f32.mrb[0].mxu0
        %v2560 = vadd.f32 %v2447, %v2559
        %v2561 = vpop.f32.mrb[0].mxu0
        %v2562 = vadd.f32 %v2449, %v2561
        %v2563 = vpop.f32.mrb[0].mxu0
        %v2564 = vadd.f32 %v2451, %v2563
        %v2565 = vpop.f32.mrb[0].mxu0
        %v2566 = vadd.f32 %v2453, %v2565
        %2567 = vmatprep.mubr.bf16.mxu0 %v542
        %2568 = vmatmul.mubr.bf16.gmra.mrb[0].mxu0 %v541
        %v2569 = vpop.f32.mrb[0].mxu0
        %v2570 = vadd.f32 %v2457, %v2569
        %v2571 = vpop.f32.mrb[0].mxu0
        %v2572 = vadd.f32 %v2459, %v2571
        %v2573 = vpop.f32.mrb[0].mxu0
        %v2574 = vadd.f32 %v2461, %v2573
        %v2575 = vpop.f32.mrb[0].mxu0
        %v2576 = vadd.f32 %v2463, %v2575
        %2577 = vmatprep.mubr.bf16.mxu0 %v549
        %2578 = vmatmul.mubr.bf16.gmra.mrb[0].mxu0 %v548
        %v2579 = vpop.f32.mrb[0].mxu0
        %v2580 = vadd.f32 %v2467, %v2579
        %v2581 = vpop.f32.mrb[0].mxu0
        %v2582 = vadd.f32 %v2469, %v2581
        %v2583 = vpop.f32.mrb[0].mxu0
        %v2584 = vadd.f32 %v2471, %v2583
        %v2585 = vpop.f32.mrb[0].mxu0
        %v2586 = vadd.f32 %v2473, %v2585
        %2587 = vmatprep.mubr.bf16.mxu0 %v556
        %2588 = vmatmul.mubr.bf16.gmra.mrb[0].mxu0 %v555
        %v2589 = vpop.f32.mrb[0].mxu0
        %v2590 = vadd.f32 %v2477, %v2589
        %v2591 = vpop.f32.mrb[0].mxu0
        %v2592 = vadd.f32 %v2479, %v2591
        %v2593 = vpop.f32.mrb[0].mxu0
        %v2594 = vadd.f32 %v2481, %v2593
        %v2595 = vpop.f32.mrb[0].mxu0
        %v2596 = vadd.f32 %v2483, %v2595
        %2597 = vmatprep.mubr.bf16.mxu0 %v563
        %2598 = vmatmul.mubr.bf16.gmra.mrb[0].mxu0 %v562
        %v2599 = vpop.f32.mrb[0].mxu0
        %v2600 = vadd.f32 %v2487, %v2599
        %v2601 = vpop.f32.mrb[0].mxu0
        %v2602 = vadd.f32 %v2489, %v2601
        %v2603 = vpop.f32.mrb[0].mxu0
        %v2604 = vadd.f32 %v2491, %v2603
        %v2605 = vpop.f32.mrb[0].mxu0
        %v2606 = vadd.f32 %v2493, %v2605
        %2607 = vmatprep.mubr.bf16.mxu0 %v570
        %2608 = vmatmul.mubr.bf16.gmra.mrb[0].mxu0 %v569
        %v2609 = vpop.f32.mrb[0].mxu0
        %v2610 = vadd.f32 %v2497, %v2609
        %v2611 = vpop.f32.mrb[0].mxu0
        %v2612 = vadd.f32 %v2499, %v2611
        %v2613 = vpop.f32.mrb[0].mxu0
        %v2614 = vadd.f32 %v2501, %v2613
        %v2615 = vpop.f32.mrb[0].mxu0
        %v2616 = vadd.f32 %v2503, %v2615
        %2617 = vdwg.mxu0
        %2618 = vmatprep.subr.bf16.mxu0 %v1623
        %2619 = vmatpush1.bf16.msra.mxu0 %v1622
        %2620 = vmatprep.subr.bf16.mxu0 %v1627
        %2621 = vmatpush1.bf16.msra.mxu0 %v1626
        %2622 = vmatprep.subr.bf16.mxu0 %v1631
        %2623 = vmatpush1.bf16.msra.mxu0 %v1630
        %2624 = vmatprep.subr.bf16.mxu0 %v1635
        %2625 = vmatpush1.bf16.msra.mxu0 %v1634
        %2626 = vmatprep.subr.bf16.mxu0 %v1639
        %2627 = vmatpush1.bf16.msra.mxu0 %v1638
        %2628 = vmatprep.subr.bf16.mxu0 %v1643
        %2629 = vmatpush1.bf16.msra.mxu0 %v1642
        %2630 = vmatprep.subr.bf16.mxu0 %v1647
        %2631 = vmatpush1.bf16.msra.mxu0 %v1646
        %2632 = vmatprep.subr.bf16.mxu0 %v1651
        %2633 = vmatpush1.bf16.msra.mxu0 %v1650
        %2634 = vmatprep.subr.bf16.mxu0 %v1655
        %2635 = vmatpush1.bf16.msra.mxu0 %v1654
        %2636 = vmatprep.subr.bf16.mxu0 %v1659
        %2637 = vmatpush1.bf16.msra.mxu0 %v1658
        %2638 = vmatprep.subr.bf16.mxu0 %v1663
        %2639 = vmatpush1.bf16.msra.mxu0 %v1662
        %2640 = vmatprep.subr.bf16.mxu0 %v1667
        %2641 = vmatpush1.bf16.msra.mxu0 %v1666
        %2642 = vmatprep.subr.bf16.mxu0 %v1671
        %2643 = vmatpush1.bf16.msra.mxu0 %v1670
        %2644 = vmatprep.subr.bf16.mxu0 %v1675
        %2645 = vmatpush1.bf16.msra.mxu0 %v1674
        %2646 = vmatprep.subr.bf16.mxu0 %v1679
        %2647 = vmatpush1.bf16.msra.mxu0 %v1678
        %2648 = vmatprep.subr.bf16.mxu0 %v1683
        %2649 = vmatpush1.bf16.msra.mxu0 %v1682
        %2650 = vmatprep.mubr.bf16.mxu0 %v523
        %2651 = vmatmul.mubr.bf16.gmra.mrb[0].mxu0 %v522
        %v2652 = vpop.f32.mrb[0].mxu0
        %v2653 = vadd.f32 %v2540, %v2652
        %v2654 = vpop.f32.mrb[0].mxu0
        %v2655 = vadd.f32 %v2542, %v2654
        %v2656 = vpop.f32.mrb[0].mxu0
        %v2657 = vadd.f32 %v2544, %v2656
        %v2658 = vpop.f32.mrb[0].mxu0
        %v2659 = vadd.f32 %v2546, %v2658
        %2660 = vmatprep.mubr.bf16.mxu0 %v530
        %2661 = vmatmul.mubr.bf16.gmra.mrb[0].mxu0 %v529
        %v2662 = vpop.f32.mrb[0].mxu0
        %v2663 = vadd.f32 %v2550, %v2662
        %v2664 = vpop.f32.mrb[0].mxu0
        %v2665 = vadd.f32 %v2552, %v2664
        %v2666 = vpop.f32.mrb[0].mxu0
        %v2667 = vadd.f32 %v2554, %v2666
        %v2668 = vpop.f32.mrb[0].mxu0
        %v2669 = vadd.f32 %v2556, %v2668
        %2670 = vmatprep.mubr.bf16.mxu0 %v537
        %2671 = vmatmul.mubr.bf16.gmra.mrb[0].mxu0 %v536
        %v2672 = vpop.f32.mrb[0].mxu0
        %v2673 = vadd.f32 %v2560, %v2672
        %v2674 = vpop.f32.mrb[0].mxu0
        %v2675 = vadd.f32 %v2562, %v2674
        %v2676 = vpop.f32.mrb[0].mxu0
        %v2677 = vadd.f32 %v2564, %v2676
        %v2678 = vpop.f32.mrb[0].mxu0
        %v2679 = vadd.f32 %v2566, %v2678
        %2680 = vmatprep.mubr.bf16.mxu0 %v544
        %2681 = vmatmul.mubr.bf16.gmra.mrb[0].mxu0 %v543
        %v2682 = vpop.f32.mrb[0].mxu0
        %v2683 = vadd.f32 %v2570, %v2682
        %v2684 = vpop.f32.mrb[0].mxu0
        %v2685 = vadd.f32 %v2572, %v2684
        %v2686 = vpop.f32.mrb[0].mxu0
        %v2687 = vadd.f32 %v2574, %v2686
        %v2688 = vpop.f32.mrb[0].mxu0
        %v2689 = vadd.f32 %v2576, %v2688
        %2690 = vmatprep.mubr.bf16.mxu0 %v551
        %2691 = vmatmul.mubr.bf16.gmra.mrb[0].mxu0 %v550
        %v2692 = vpop.f32.mrb[0].mxu0
        %v2693 = vadd.f32 %v2580, %v2692
        %v2694 = vpop.f32.mrb[0].mxu0
        %v2695 = vadd.f32 %v2582, %v2694
        %v2696 = vpop.f32.mrb[0].mxu0
        %v2697 = vadd.f32 %v2584, %v2696
        %v2698 = vpop.f32.mrb[0].mxu0
        %v2699 = vadd.f32 %v2586, %v2698
        %2700 = vmatprep.mubr.bf16.mxu0 %v558
        %2701 = vmatmul.mubr.bf16.gmra.mrb[0].mxu0 %v557
        %v2702 = vpop.f32.mrb[0].mxu0
        %v2703 = vadd.f32 %v2590, %v2702
        %v2704 = vpop.f32.mrb[0].mxu0
        %v2705 = vadd.f32 %v2592, %v2704
        %v2706 = vpop.f32.mrb[0].mxu0
        %v2707 = vadd.f32 %v2594, %v2706
        %v2708 = vpop.f32.mrb[0].mxu0
        %v2709 = vadd.f32 %v2596, %v2708
        %2710 = vmatprep.mubr.bf16.mxu0 %v565
        %2711 = vmatmul.mubr.bf16.gmra.mrb[0].mxu0 %v564
        %v2712 = vpop.f32.mrb[0].mxu0
        %v2713 = vadd.f32 %v2600, %v2712
        %v2714 = vpop.f32.mrb[0].mxu0
        %v2715 = vadd.f32 %v2602, %v2714
        %v2716 = vpop.f32.mrb[0].mxu0
        %v2717 = vadd.f32 %v2604, %v2716
        %v2718 = vpop.f32.mrb[0].mxu0
        %v2719 = vadd.f32 %v2606, %v2718
        %2720 = vmatprep.mubr.bf16.mxu0 %v572
        %2721 = vmatmul.mubr.bf16.gmra.mrb[0].mxu0 %v571
        %v2722 = vpop.f32.mrb[0].mxu0
        %v2723 = vadd.f32 %v2610, %v2722
        %v2724 = vpop.f32.mrb[0].mxu0
        %v2725 = vadd.f32 %v2612, %v2724
        %v2726 = vpop.f32.mrb[0].mxu0
        %v2727 = vadd.f32 %v2614, %v2726
        %v2728 = vpop.f32.mrb[0].mxu0
        %v2729 = vadd.f32 %v2616, %v2728
        %2730 = vdwg.mxu0
        %2731 = vmatprep.subr.bf16.mxu0 %v1687
        %2732 = vmatpush1.bf16.msra.mxu0 %v1686
        %2733 = vmatprep.subr.bf16.mxu0 %v1691
        %2734 = vmatpush1.bf16.msra.mxu0 %v1690
        %2735 = vmatprep.subr.bf16.mxu0 %v1695
        %2736 = vmatpush1.bf16.msra.mxu0 %v1694
        %2737 = vmatprep.subr.bf16.mxu0 %v1699
        %2738 = vmatpush1.bf16.msra.mxu0 %v1698
        %2739 = vmatprep.subr.bf16.mxu0 %v1703
        %2740 = vmatpush1.bf16.msra.mxu0 %v1702
        %2741 = vmatprep.subr.bf16.mxu0 %v1707
        %2742 = vmatpush1.bf16.msra.mxu0 %v1706
        %2743 = vmatprep.subr.bf16.mxu0 %v1711
        %2744 = vmatpush1.bf16.msra.mxu0 %v1710
        %2745 = vmatprep.subr.bf16.mxu0 %v1715
        %2746 = vmatpush1.bf16.msra.mxu0 %v1714
        %2747 = vmatprep.subr.bf16.mxu0 0
        %2748 = vmatpush1.bf16.msra.mxu0 0
        %2749 = vmatprep.subr.bf16.mxu0 0
        %2750 = vmatpush1.bf16.msra.mxu0 0
        %2751 = vmatprep.subr.bf16.mxu0 0
        %2752 = vmatpush1.bf16.msra.mxu0 0
        %2753 = vmatprep.subr.bf16.mxu0 0
        %2754 = vmatpush1.bf16.msra.mxu0 0
        %2755 = vmatprep.subr.bf16.mxu0 0
        %2756 = vmatpush1.bf16.msra.mxu0 0
        %2757 = vmatprep.subr.bf16.mxu0 0
        %2758 = vmatpush1.bf16.msra.mxu0 0
        %2759 = vmatprep.subr.bf16.mxu0 0
        %2760 = vmatpush1.bf16.msra.mxu0 0
        %2761 = vmatprep.subr.bf16.mxu0 0
        %2762 = vmatpush1.bf16.msra.mxu0 0
        %2763 = vmatprep.mubr.bf16.mxu0 0
        %2764 = vmatmul.mubr.bf16.gmra.mrb[0].mxu0 %v524
        %v2765 = vpop.f32.mrb[0].mxu0
        %v2766 = vadd.f32 %v2653, %v2765
        %v2767 = vpop.f32.mrb[0].mxu0
        %v2768 = vadd.f32 %v2655, %v2767
        %v2769 = vpop.f32.mrb[0].mxu0
        %v2770 = vadd.f32 %v2657, %v2769
        %v2771 = vpop.f32.mrb[0].mxu0
        %v2772 = vadd.f32 %v2659, %v2771
        %2773 = vmatprep.mubr.bf16.mxu0 0
        %2774 = vmatmul.mubr.bf16.gmra.mrb[0].mxu0 %v531
        %v2775 = vpop.f32.mrb[0].mxu0
        %v2776 = vadd.f32 %v2663, %v2775
        %v2777 = vpop.f32.mrb[0].mxu0
        %v2778 = vadd.f32 %v2665, %v2777
        %v2779 = vpop.f32.mrb[0].mxu0
        %v2780 = vadd.f32 %v2667, %v2779
        %v2781 = vpop.f32.mrb[0].mxu0
        %v2782 = vadd.f32 %v2669, %v2781
        %2783 = vmatprep.mubr.bf16.mxu0 0
        %2784 = vmatmul.mubr.bf16.gmra.mrb[0].mxu0 %v538
        %v2785 = vpop.f32.mrb[0].mxu0
        %v2786 = vadd.f32 %v2673, %v2785
        %v2787 = vpop.f32.mrb[0].mxu0
        %v2788 = vadd.f32 %v2675, %v2787
        %v2789 = vpop.f32.mrb[0].mxu0
        %v2790 = vadd.f32 %v2677, %v2789
        %v2791 = vpop.f32.mrb[0].mxu0
        %v2792 = vadd.f32 %v2679, %v2791
        %2793 = vmatprep.mubr.bf16.mxu0 0
        %2794 = vmatmul.mubr.bf16.gmra.mrb[0].mxu0 %v545
        %v2795 = vpop.f32.mrb[0].mxu0
        %v2796 = vadd.f32 %v2683, %v2795
        %v2797 = vpop.f32.mrb[0].mxu0
        %v2798 = vadd.f32 %v2685, %v2797
        %v2799 = vpop.f32.mrb[0].mxu0
        %v2800 = vadd.f32 %v2687, %v2799
        %v2801 = vpop.f32.mrb[0].mxu0
        %v2802 = vadd.f32 %v2689, %v2801
        %2803 = vmatprep.mubr.bf16.mxu0 0
        %2804 = vmatmul.mubr.bf16.gmra.mrb[0].mxu0 %v552
        %v2805 = vpop.f32.mrb[0].mxu0
        %v2806 = vadd.f32 %v2693, %v2805
        %v2807 = vpop.f32.mrb[0].mxu0
        %v2808 = vadd.f32 %v2695, %v2807
        %v2809 = vpop.f32.mrb[0].mxu0
        %v2810 = vadd.f32 %v2697, %v2809
        %v2811 = vpop.f32.mrb[0].mxu0
        %v2812 = vadd.f32 %v2699, %v2811
        %2813 = vmatprep.mubr.bf16.mxu0 0
        %2814 = vmatmul.mubr.bf16.gmra.mrb[0].mxu0 %v559
        %v2815 = vpop.f32.mrb[0].mxu0
        %v2816 = vadd.f32 %v2703, %v2815
        %v2817 = vpop.f32.mrb[0].mxu0
        %v2818 = vadd.f32 %v2705, %v2817
        %v2819 = vpop.f32.mrb[0].mxu0
        %v2820 = vadd.f32 %v2707, %v2819
        %v2821 = vpop.f32.mrb[0].mxu0
        %v2822 = vadd.f32 %v2709, %v2821
        %2823 = vmatprep.mubr.bf16.mxu0 0
        %2824 = vmatmul.mubr.bf16.gmra.mrb[0].mxu0 %v566
        %v2825 = vpop.f32.mrb[0].mxu0
        %v2826 = vadd.f32 %v2713, %v2825
        %v2827 = vpop.f32.mrb[0].mxu0
        %v2828 = vadd.f32 %v2715, %v2827
        %v2829 = vpop.f32.mrb[0].mxu0
        %v2830 = vadd.f32 %v2717, %v2829
        %v2831 = vpop.f32.mrb[0].mxu0
        %v2832 = vadd.f32 %v2719, %v2831
        %2833 = vmatprep.mubr.bf16.mxu0 0
        %2834 = vmatmul.mubr.bf16.gmra.mrb[0].mxu0 %v573
        %v2835 = vpop.f32.mrb[0].mxu0
        %v2836 = vadd.f32 %v2723, %v2835
        %v2837 = vpop.f32.mrb[0].mxu0
        %v2838 = vadd.f32 %v2725, %v2837
        %v2839 = vpop.f32.mrb[0].mxu0
        %v2840 = vadd.f32 %v2727, %v2839
        %v2841 = vpop.f32.mrb[0].mxu0
        %v2842 = vadd.f32 %v2729, %v2841
        %2843 = vdwg.mxu0
        %v2844 = vmax.f32 %v2314, 0.0
        %v2845 = vmax.f32 %v2316, 0.0
        %v2846 = vmax.f32 %v2766, 0.0
        %v2847 = vmax.f32 %v2768, 0.0
        %v2848 = vmax.f32 %v2318, 0.0
        %v2849 = vmax.f32 %v2320, 0.0
        %v2850 = vmax.f32 %v2770, 0.0
        %v2851 = vmax.f32 %v2772, 0.0
        %v2852 = vmax.f32 %v2324, 0.0
        %v2853 = vmax.f32 %v2326, 0.0
        %v2854 = vmax.f32 %v2776, 0.0
        %v2855 = vmax.f32 %v2778, 0.0
        %v2856 = vmax.f32 %v2328, 0.0
        %v2857 = vmax.f32 %v2330, 0.0
        %v2858 = vmax.f32 %v2780, 0.0
        %v2859 = vmax.f32 %v2782, 0.0
        %v2860 = vmax.f32 %v2334, 0.0
        %v2861 = vmax.f32 %v2336, 0.0
        %v2862 = vmax.f32 %v2786, 0.0
        %v2863 = vmax.f32 %v2788, 0.0
        %v2864 = vmax.f32 %v2338, 0.0
        %v2865 = vmax.f32 %v2340, 0.0
        %v2866 = vmax.f32 %v2790, 0.0
        %v2867 = vmax.f32 %v2792, 0.0
        %v2868 = vmax.f32 %v2344, 0.0
        %v2869 = vmax.f32 %v2346, 0.0
        %v2870 = vmax.f32 %v2796, 0.0
        %v2871 = vmax.f32 %v2798, 0.0
        %v2872 = vmax.f32 %v2348, 0.0
        %v2873 = vmax.f32 %v2350, 0.0
        %v2874 = vmax.f32 %v2800, 0.0
        %v2875 = vmax.f32 %v2802, 0.0
        %v2876 = vmax.f32 %v2354, 0.0
        %v2877 = vmax.f32 %v2356, 0.0
        %v2878 = vmax.f32 %v2806, 0.0
        %v2879 = vmax.f32 %v2808, 0.0
        %v2880 = vmax.f32 %v2358, 0.0
        %v2881 = vmax.f32 %v2360, 0.0
        %v2882 = vmax.f32 %v2810, 0.0
        %v2883 = vmax.f32 %v2812, 0.0
        %v2884 = vmax.f32 %v2364, 0.0
        %v2885 = vmax.f32 %v2366, 0.0
        %v2886 = vmax.f32 %v2816, 0.0
        %v2887 = vmax.f32 %v2818, 0.0
        %v2888 = vmax.f32 %v2368, 0.0
        %v2889 = vmax.f32 %v2370, 0.0
        %v2890 = vmax.f32 %v2820, 0.0
        %v2891 = vmax.f32 %v2822, 0.0
        %v2892 = vmax.f32 %v2374, 0.0
        %v2893 = vmax.f32 %v2376, 0.0
        %v2894 = vmax.f32 %v2826, 0.0
        %v2895 = vmax.f32 %v2828, 0.0
        %v2896 = vmax.f32 %v2378, 0.0
        %v2897 = vmax.f32 %v2380, 0.0
        %v2898 = vmax.f32 %v2830, 0.0
        %v2899 = vmax.f32 %v2832, 0.0
        %v2900 = vmax.f32 %v2384, 0.0
        %v2901 = vmax.f32 %v2386, 0.0
        %v2902 = vmax.f32 %v2836, 0.0
        %v2903 = vmax.f32 %v2838, 0.0
        %v2904 = vmax.f32 %v2388, 0.0
        %v2905 = vmax.f32 %v2390, 0.0
        %v2906 = vmax.f32 %v2840, 0.0
        %v2907 = vmax.f32 %v2842, 0.0
        %v2908 = vpack.c.bf16 %v2848, %v2844
        %v2909 = vpack.c.bf16 %v2849, %v2845
        %v2910 = vpack.c.bf16 %v2850, %v2846
        %v2911 = vpack.c.bf16 %v2851, %v2847
        %v2912 = vpack.c.bf16 %v2856, %v2852
        %v2913 = vpack.c.bf16 %v2857, %v2853
        %v2914 = vpack.c.bf16 %v2858, %v2854
        %v2915 = vpack.c.bf16 %v2859, %v2855
        %v2916 = vpack.c.bf16 %v2864, %v2860
        %v2917 = vpack.c.bf16 %v2865, %v2861
        %v2918 = vpack.c.bf16 %v2866, %v2862
        %v2919 = vpack.c.bf16 %v2867, %v2863
        %v2920 = vpack.c.bf16 %v2872, %v2868
        %v2921 = vpack.c.bf16 %v2873, %v2869
        %v2922 = vpack.c.bf16 %v2874, %v2870
        %v2923 = vpack.c.bf16 %v2875, %v2871
        %v2924 = vpack.c.bf16 %v2880, %v2876
        %v2925 = vpack.c.bf16 %v2881, %v2877
        %v2926 = vpack.c.bf16 %v2882, %v2878
        %v2927 = vpack.c.bf16 %v2883, %v2879
        %v2928 = vpack.c.bf16 %v2888, %v2884
        %v2929 = vpack.c.bf16 %v2889, %v2885
        %v2930 = vpack.c.bf16 %v2890, %v2886
        %v2931 = vpack.c.bf16 %v2891, %v2887
        %v2932 = vpack.c.bf16 %v2896, %v2892
        %v2933 = vpack.c.bf16 %v2897, %v2893
        %v2934 = vpack.c.bf16 %v2898, %v2894
        %v2935 = vpack.c.bf16 %v2899, %v2895
        %v2936 = vpack.c.bf16 %v2904, %v2900
        %v2937 = vpack.c.bf16 %v2905, %v2901
        %v2938 = vpack.c.bf16 %v2906, %v2902
        %v2939 = vpack.c.bf16 %v2907, %v2903
        %v2940 = vld [vmem:[%s3] sm:$0xf]
        %v2941 = vld [vmem:[%s3 + $0x4] sm:$0xf]
        %v2942 = vld [vmem:[%s3 + $0x8] sm:$0xf]
        %v2943 = vld [vmem:[%s3 + $0xc] sm:$0xf]
        %v2944 = vld [vmem:[%s3 + $0x10] sm:$0xf]
        %v2945 = vld [vmem:[%s3 + $0x14] sm:$0xf]
        %v2946 = vld [vmem:[%s3 + $0x18] sm:$0xf]
        %v2947 = vld [vmem:[%s3 + $0x1c] sm:$0xf]
        %v2948 = vld [vmem:[%s3 + $0x20] sm:$0xf]
        %v2949 = vld [vmem:[%s3 + $0x24] sm:$0xf]
        %v2950 = vld [vmem:[%s3 + $0x28] sm:$0xf]
        %v2951 = vld [vmem:[%s3 + $0x2c] sm:$0xf]
        %v2952 = vld [vmem:[%s3 + $0x30] sm:$0xf]
        %v2953 = vld [vmem:[%s3 + $0x34] sm:$0xf]
        %v2954 = vld [vmem:[%s3 + $0x38] sm:$0xf]
        %v2955 = vld [vmem:[%s3 + $0x3c] sm:$0xf]
        %v2956 = vld [vmem:[%s3 + $0x40] sm:$0xf]
        %v2957 = vld [vmem:[%s3 + $0x44] sm:$0xf]
        %v2958 = vld [vmem:[%s3 + $0x48] sm:$0xf]
        %v2959 = vld [vmem:[%s3 + $0x4c] sm:$0xf]
        %v2960 = vld [vmem:[%s3 + $0x50] sm:$0xf]
        %v2961 = vld [vmem:[%s3 + $0x54] sm:$0xf]
        %v2962 = vld [vmem:[%s3 + $0x58] sm:$0xf]
        %v2963 = vld [vmem:[%s3 + $0x5c] sm:$0xf]
        %v2964 = vld [vmem:[%s3 + $0x60] sm:$0xf]
        %v2965 = vld [vmem:[%s3 + $0x64] sm:$0xf]
        %v2966 = vld [vmem:[%s3 + $0x68] sm:$0xf]
        %v2967 = vld [vmem:[%s3 + $0x6c] sm:$0xf]
        %v2968 = vld [vmem:[%s3 + $0x70] sm:$0xf]
        %v2969 = vld [vmem:[%s3 + $0x74] sm:$0xf]
        %v2970 = vld [vmem:[%s3 + $0x78] sm:$0xf]
        %v2971 = vld [vmem:[%s3 + $0x7c] sm:$0xf]
        %v2972 = vld [vmem:[%s3 + $0x80] sm:$0xf]
        %v2973 = vld [vmem:[%s3 + $0x84] sm:$0xf]
        %v2974 = vld [vmem:[%s3 + $0x88] sm:$0xf]
        %v2975 = vld [vmem:[%s3 + $0x8c] sm:$0xf]
        %v2976 = vld [vmem:[%s3 + $0x90] sm:$0xf]
        %v2977 = vld [vmem:[%s3 + $0x94] sm:$0xf]
        %v2978 = vld [vmem:[%s3 + $0x98] sm:$0xf]
        %v2979 = vld [vmem:[%s3 + $0x9c] sm:$0xf]
        %v2980 = vld [vmem:[%s3 + $0xa0] sm:$0xf]
        %v2981 = vld [vmem:[%s3 + $0xa4] sm:$0xf]
        %v2982 = vld [vmem:[%s3 + $0xa8] sm:$0xf]
        %v2983 = vld [vmem:[%s3 + $0xac] sm:$0xf]
        %v2984 = vld [vmem:[%s3 + $0xb0] sm:$0xf]
        %v2985 = vld [vmem:[%s3 + $0xb4] sm:$0xf]
        %v2986 = vld [vmem:[%s3 + $0xb8] sm:$0xf]
        %v2987 = vld [vmem:[%s3 + $0xbc] sm:$0xf]
        %v2988 = vld [vmem:[%s3 + $0xc0] sm:$0xf]
        %v2989 = vld [vmem:[%s3 + $0xc4] sm:$0xf]
        %v2990 = vld [vmem:[%s4] sm:$0x1]
        %v2992 = vlaneseq
        %v2993 = vshrl.u32 %v2992, 7
        %v2994 = vsub.s32 0, %v2993
        %v2995 = vrot.slane %v2990, %v2994
        %v3047 = vunpack.c.l.b16 %v2940
        %v3048 = vunpack.c.l.b16 %v2941
        %v3049 = vunpack.c.l.b16 %v2942
        %v3050 = vunpack.c.l.b16 %v2943
        %v3051 = vunpack.c.l.b16 %v2944
        %v3052 = vunpack.c.l.b16 %v2945
        %v3053 = vunpack.c.l.b16 %v2946
        %v3054 = vunpack.c.l.b16 %v2947
        %v3055 = vunpack.c.l.b16 %v2948
        %v3056 = vunpack.c.l.b16 %v2949
        %v3057 = vunpack.c.l.b16 %v2950
        %v3058 = vunpack.c.l.b16 %v2951
        %v3059 = vunpack.c.l.b16 %v2952
        %v3060 = vunpack.c.l.b16 %v2953
        %v3061 = vunpack.c.l.b16 %v2954
        %v3062 = vunpack.c.l.b16 %v2955
        %v3063 = vunpack.c.l.b16 %v2956
        %v3064 = vunpack.c.l.b16 %v2957
        %v3065 = vunpack.c.l.b16 %v2958
        %v3066 = vunpack.c.l.b16 %v2959
        %v3067 = vunpack.c.l.b16 %v2960
        %v3068 = vunpack.c.l.b16 %v2961
        %v3069 = vunpack.c.l.b16 %v2962
        %v3070 = vunpack.c.l.b16 %v2963
        %v3071 = vunpack.c.l.b16 %v2964
        %v3072 = vunpack.c.l.b16 %v2965
        %v3073 = vunpack.c.l.b16 %v2966
        %v3074 = vunpack.c.l.b16 %v2967
        %v3075 = vunpack.c.l.b16 %v2968
        %v3076 = vunpack.c.l.b16 %v2969
        %v3077 = vunpack.c.l.b16 %v2970
        %v3078 = vunpack.c.l.b16 %v2971
        %v3079 = vunpack.c.l.b16 %v2972
        %v3080 = vunpack.c.l.b16 %v2973
        %v3081 = vunpack.c.l.b16 %v2974
        %v3082 = vunpack.c.l.b16 %v2975
        %v3083 = vunpack.c.l.b16 %v2976
        %v3084 = vunpack.c.l.b16 %v2977
        %v3085 = vunpack.c.l.b16 %v2978
        %v3086 = vunpack.c.l.b16 %v2979
        %v3087 = vunpack.c.l.b16 %v2980
        %v3088 = vunpack.c.l.b16 %v2981
        %v3089 = vunpack.c.l.b16 %v2982
        %v3090 = vunpack.c.l.b16 %v2983
        %v3091 = vunpack.c.l.b16 %v2984
        %v3092 = vunpack.c.l.b16 %v2985
        %v3093 = vunpack.c.l.b16 %v2986
        %v3094 = vunpack.c.l.b16 %v2987
        %v3095 = vunpack.c.l.b16 %v2988
        %v3096 = vunpack.c.l.b16 %v2989
        %v3097 = vpack.c.b16 %v3048, %v3047
        %v3098 = vpack.c.b16 %v3050, %v3049
        %v3099 = vpack.c.b16 %v3052, %v3051
        %v3100 = vpack.c.b16 %v3054, %v3053
        %v3101 = vpack.c.b16 %v3056, %v3055
        %v3102 = vpack.c.b16 %v3058, %v3057
        %v3103 = vpack.c.b16 %v3060, %v3059
        %v3104 = vpack.c.b16 %v3062, %v3061
        %v3105 = vpack.c.b16 %v3064, %v3063
        %v3106 = vpack.c.b16 %v3066, %v3065
        %v3107 = vpack.c.b16 %v3068, %v3067
        %v3108 = vpack.c.b16 %v3070, %v3069
        %v3109 = vpack.c.b16 %v3072, %v3071
        %v3110 = vpack.c.b16 %v3074, %v3073
        %v3111 = vpack.c.b16 %v3076, %v3075
        %v3112 = vpack.c.b16 %v3078, %v3077
        %v3113 = vpack.c.b16 %v3080, %v3079
        %v3114 = vpack.c.b16 %v3082, %v3081
        %v3115 = vpack.c.b16 %v3084, %v3083
        %v3116 = vpack.c.b16 %v3086, %v3085
        %v3117 = vpack.c.b16 %v3088, %v3087
        %v3118 = vpack.c.b16 %v3090, %v3089
        %v3119 = vpack.c.b16 %v3092, %v3091
        %v3120 = vpack.c.b16 %v3094, %v3093
        %v3121 = vpack.c.b16 %v3096, %v3095
        %vm3147 = vcmask 130048
        %v3149 = vsel %vm3147, %v2911, 0
        %v3152 = vsel %vm3147, %v2915, 0
        %v3155 = vsel %vm3147, %v2919, 0
        %v3158 = vsel %vm3147, %v2923, 0
        %v3161 = vsel %vm3147, %v2927, 0
        %v3164 = vsel %vm3147, %v2931, 0
        %v3167 = vsel %vm3147, %v2935, 0
        %v3170 = vsel %vm3147, %v2939, 0
        %3172 = vmatprep.subr.bf16.mxu0 0
        %3173 = vmatpush1.bf16.msra.mxu0 %v3097
        %3174 = vmatprep.subr.bf16.mxu0 0
        %3175 = vmatpush1.bf16.msra.mxu0 %v3098
        %3176 = vmatprep.subr.bf16.mxu0 0
        %3177 = vmatpush1.bf16.msra.mxu0 %v3099
        %3178 = vmatprep.subr.bf16.mxu0 0
        %3179 = vmatpush1.bf16.msra.mxu0 %v3100
        %3180 = vmatprep.subr.bf16.mxu0 0
        %3181 = vmatpush1.bf16.msra.mxu0 %v3101
        %3182 = vmatprep.subr.bf16.mxu0 0
        %3183 = vmatpush1.bf16.msra.mxu0 %v3102
        %3184 = vmatprep.subr.bf16.mxu0 0
        %3185 = vmatpush1.bf16.msra.mxu0 %v3103
        %3186 = vmatprep.subr.bf16.mxu0 0
        %3187 = vmatpush1.bf16.msra.mxu0 %v3104
        %3188 = vmatprep.subr.bf16.mxu0 0
        %3189 = vmatpush1.bf16.msra.mxu0 %v3105
        %3190 = vmatprep.subr.bf16.mxu0 0
        %3191 = vmatpush1.bf16.msra.mxu0 %v3106
        %3192 = vmatprep.subr.bf16.mxu0 0
        %3193 = vmatpush1.bf16.msra.mxu0 %v3107
        %3194 = vmatprep.subr.bf16.mxu0 0
        %3195 = vmatpush1.bf16.msra.mxu0 %v3108
        %3196 = vmatprep.subr.bf16.mxu0 0
        %3197 = vmatpush1.bf16.msra.mxu0 %v3109
        %3198 = vmatprep.subr.bf16.mxu0 0
        %3199 = vmatpush1.bf16.msra.mxu0 %v3110
        %3200 = vmatprep.subr.bf16.mxu0 0
        %3201 = vmatpush1.bf16.msra.mxu0 %v3111
        %3202 = vmatprep.subr.bf16.mxu0 0
        %3203 = vmatpush1.bf16.msra.mxu0 %v3112
        %3204 = vmatprep.mubr.bf16.mxu0 %v2909
        %3205 = vmatmul.mubr.bf16.gmra.mrb[0].mxu0 %v2908
        %v3206 = vpop.f32.mrb[0].mxu0
        %v3207 = vadd.f32 %v2995, %v3206
        %v3208 = vpop.f32.mrb[0].mxu0
        %v3209 = vpop.f32.mrb[0].mxu0
        %v3210 = vadd.f32 %v2995, %v3209
        %v3211 = vpop.f32.mrb[0].mxu0
        %3212 = vmatprep.mubr.bf16.mxu0 %v2913
        %3213 = vmatmul.mubr.bf16.gmra.mrb[0].mxu0 %v2912
        %v3214 = vpop.f32.mrb[0].mxu0
        %v3215 = vadd.f32 %v2995, %v3214
        %v3216 = vpop.f32.mrb[0].mxu0
        %v3217 = vpop.f32.mrb[0].mxu0
        %v3218 = vadd.f32 %v2995, %v3217
        %v3219 = vpop.f32.mrb[0].mxu0
        %3220 = vmatprep.mubr.bf16.mxu0 %v2917
        %3221 = vmatmul.mubr.bf16.gmra.mrb[0].mxu0 %v2916
        %v3222 = vpop.f32.mrb[0].mxu0
        %v3223 = vadd.f32 %v2995, %v3222
        %v3224 = vpop.f32.mrb[0].mxu0
        %v3225 = vpop.f32.mrb[0].mxu0
        %v3226 = vadd.f32 %v2995, %v3225
        %v3227 = vpop.f32.mrb[0].mxu0
        %3228 = vmatprep.mubr.bf16.mxu0 %v2921
        %3229 = vmatmul.mubr.bf16.gmra.mrb[0].mxu0 %v2920
        %v3230 = vpop.f32.mrb[0].mxu0
        %v3231 = vadd.f32 %v2995, %v3230
        %v3232 = vpop.f32.mrb[0].mxu0
        %v3233 = vpop.f32.mrb[0].mxu0
        %v3234 = vadd.f32 %v2995, %v3233
        %v3235 = vpop.f32.mrb[0].mxu0
        %3236 = vmatprep.mubr.bf16.mxu0 %v2925
        %3237 = vmatmul.mubr.bf16.gmra.mrb[0].mxu0 %v2924
        %v3238 = vpop.f32.mrb[0].mxu0
        %v3239 = vadd.f32 %v2995, %v3238
        %v3240 = vpop.f32.mrb[0].mxu0
        %v3241 = vpop.f32.mrb[0].mxu0
        %v3242 = vadd.f32 %v2995, %v3241
        %v3243 = vpop.f32.mrb[0].mxu0
        %3244 = vmatprep.mubr.bf16.mxu0 %v2929
        %3245 = vmatmul.mubr.bf16.gmra.mrb[0].mxu0 %v2928
        %v3246 = vpop.f32.mrb[0].mxu0
        %v3247 = vadd.f32 %v2995, %v3246
        %v3248 = vpop.f32.mrb[0].mxu0
        %v3249 = vpop.f32.mrb[0].mxu0
        %v3250 = vadd.f32 %v2995, %v3249
        %v3251 = vpop.f32.mrb[0].mxu0
        %3252 = vmatprep.mubr.bf16.mxu0 %v2933
        %3253 = vmatmul.mubr.bf16.gmra.mrb[0].mxu0 %v2932
        %v3254 = vpop.f32.mrb[0].mxu0
        %v3255 = vadd.f32 %v2995, %v3254
        %v3256 = vpop.f32.mrb[0].mxu0
        %v3257 = vpop.f32.mrb[0].mxu0
        %v3258 = vadd.f32 %v2995, %v3257
        %v3259 = vpop.f32.mrb[0].mxu0
        %3260 = vmatprep.mubr.bf16.mxu0 %v2937
        %3261 = vmatmul.mubr.bf16.gmra.mrb[0].mxu0 %v2936
        %v3262 = vpop.f32.mrb[0].mxu0
        %v3263 = vadd.f32 %v2995, %v3262
        %v3264 = vpop.f32.mrb[0].mxu0
        %v3265 = vpop.f32.mrb[0].mxu0
        %v3266 = vadd.f32 %v2995, %v3265
        %v3267 = vpop.f32.mrb[0].mxu0
        %3268 = vdwg.mxu0
        %3269 = vmatprep.subr.bf16.mxu0 0
        %3270 = vmatpush1.bf16.msra.mxu0 %v3113
        %3271 = vmatprep.subr.bf16.mxu0 0
        %3272 = vmatpush1.bf16.msra.mxu0 %v3114
        %3273 = vmatprep.subr.bf16.mxu0 0
        %3274 = vmatpush1.bf16.msra.mxu0 %v3115
        %3275 = vmatprep.subr.bf16.mxu0 0
        %3276 = vmatpush1.bf16.msra.mxu0 %v3116
        %3277 = vmatprep.subr.bf16.mxu0 0
        %3278 = vmatpush1.bf16.msra.mxu0 %v3117
        %3279 = vmatprep.subr.bf16.mxu0 0
        %3280 = vmatpush1.bf16.msra.mxu0 %v3118
        %3281 = vmatprep.subr.bf16.mxu0 0
        %3282 = vmatpush1.bf16.msra.mxu0 %v3119
        %3283 = vmatprep.subr.bf16.mxu0 0
        %3284 = vmatpush1.bf16.msra.mxu0 %v3120
        %3285 = vmatprep.subr.bf16.mxu0 0
        %3286 = vmatpush1.bf16.msra.mxu0 %v3121
        %3287 = vmatprep.subr.bf16.mxu0 0
        %3288 = vmatpush1.bf16.msra.mxu0 0
        %3289 = vmatprep.subr.bf16.mxu0 0
        %3290 = vmatpush1.bf16.msra.mxu0 0
        %3291 = vmatprep.subr.bf16.mxu0 0
        %3292 = vmatpush1.bf16.msra.mxu0 0
        %3293 = vmatprep.subr.bf16.mxu0 0
        %3294 = vmatpush1.bf16.msra.mxu0 0
        %3295 = vmatprep.subr.bf16.mxu0 0
        %3296 = vmatpush1.bf16.msra.mxu0 0
        %3297 = vmatprep.subr.bf16.mxu0 0
        %3298 = vmatpush1.bf16.msra.mxu0 0
        %3299 = vmatprep.subr.bf16.mxu0 0
        %3300 = vmatpush1.bf16.msra.mxu0 0
        %3301 = vmatprep.mubr.bf16.mxu0 %v3149
        %3302 = vmatmul.mubr.bf16.gmra.mrb[0].mxu0 %v2910
        %v3303 = vpop.f32.mrb[0].mxu0
        %v3304 = vadd.f32 %v3207, %v3303
        %v3305 = vpop.f32.mrb[0].mxu0
        %v3306 = vpop.f32.mrb[0].mxu0
        %v3307 = vadd.f32 %v3210, %v3306
        %v3308 = vpop.f32.mrb[0].mxu0
        %3309 = vmatprep.mubr.bf16.mxu0 %v3152
        %3310 = vmatmul.mubr.bf16.gmra.mrb[0].mxu0 %v2914
        %v3311 = vpop.f32.mrb[0].mxu0
        %v3312 = vadd.f32 %v3215, %v3311
        %v3313 = vpop.f32.mrb[0].mxu0
        %v3314 = vpop.f32.mrb[0].mxu0
        %v3315 = vadd.f32 %v3218, %v3314
        %v3316 = vpop.f32.mrb[0].mxu0
        %3317 = vmatprep.mubr.bf16.mxu0 %v3155
        %3318 = vmatmul.mubr.bf16.gmra.mrb[0].mxu0 %v2918
        %v3319 = vpop.f32.mrb[0].mxu0
        %v3320 = vadd.f32 %v3223, %v3319
        %v3321 = vpop.f32.mrb[0].mxu0
        %v3322 = vpop.f32.mrb[0].mxu0
        %v3323 = vadd.f32 %v3226, %v3322
        %v3324 = vpop.f32.mrb[0].mxu0
        %3325 = vmatprep.mubr.bf16.mxu0 %v3158
        %3326 = vmatmul.mubr.bf16.gmra.mrb[0].mxu0 %v2922
        %v3327 = vpop.f32.mrb[0].mxu0
        %v3328 = vadd.f32 %v3231, %v3327
        %v3329 = vpop.f32.mrb[0].mxu0
        %v3330 = vpop.f32.mrb[0].mxu0
        %v3331 = vadd.f32 %v3234, %v3330
        %v3332 = vpop.f32.mrb[0].mxu0
        %3333 = vmatprep.mubr.bf16.mxu0 %v3161
        %3334 = vmatmul.mubr.bf16.gmra.mrb[0].mxu0 %v2926
        %v3335 = vpop.f32.mrb[0].mxu0
        %v3336 = vadd.f32 %v3239, %v3335
        %v3337 = vpop.f32.mrb[0].mxu0
        %v3338 = vpop.f32.mrb[0].mxu0
        %v3339 = vadd.f32 %v3242, %v3338
        %v3340 = vpop.f32.mrb[0].mxu0
        %3341 = vmatprep.mubr.bf16.mxu0 %v3164
        %3342 = vmatmul.mubr.bf16.gmra.mrb[0].mxu0 %v2930
        %v3343 = vpop.f32.mrb[0].mxu0
        %v3344 = vadd.f32 %v3247, %v3343
        %v3345 = vpop.f32.mrb[0].mxu0
        %v3346 = vpop.f32.mrb[0].mxu0
        %v3347 = vadd.f32 %v3250, %v3346
        %v3348 = vpop.f32.mrb[0].mxu0
        %3349 = vmatprep.mubr.bf16.mxu0 %v3167
        %3350 = vmatmul.mubr.bf16.gmra.mrb[0].mxu0 %v2934
        %v3351 = vpop.f32.mrb[0].mxu0
        %v3352 = vadd.f32 %v3255, %v3351
        %v3353 = vpop.f32.mrb[0].mxu0
        %v3354 = vpop.f32.mrb[0].mxu0
        %v3355 = vadd.f32 %v3258, %v3354
        %v3356 = vpop.f32.mrb[0].mxu0
        %3357 = vmatprep.mubr.bf16.mxu0 %v3170
        %3358 = vmatmul.mubr.bf16.gmra.mrb[0].mxu0 %v2938
        %v3359 = vpop.f32.mrb[0].mxu0
        %v3360 = vadd.f32 %v3263, %v3359
        %v3361 = vpop.f32.mrb[0].mxu0
        %v3362 = vpop.f32.mrb[0].mxu0
        %v3363 = vadd.f32 %v3266, %v3362
        %v3364 = vpop.f32.mrb[0].mxu0
        %3365 = vdwg.mxu0
        %v3366 = vld [vmem:[%s9] sm:$0x1]
        %v3368 = vlaneseq
        %v3369 = vshrl.u32 %v3368, 7
        %v3370 = vsub.s32 0, %v3369
        %v3371 = vrot.slane %v3366, %v3370
        %3389 = vrot.lane.b32.xlu0 %v3304, 108
        %v3390 = vpop.permute.xlu0 %3389
        %3391 = vrot.lane.b32.xlu0 %v3307, 108
        %v3392 = vpop.permute.xlu0 %3391
        %3393 = vrot.lane.b32.xlu0 %v3312, 108
        %v3394 = vpop.permute.xlu0 %3393
        %3395 = vrot.lane.b32.xlu0 %v3315, 108
        %v3396 = vpop.permute.xlu0 %3395
        %3397 = vrot.lane.b32.xlu0 %v3320, 108
        %v3398 = vpop.permute.xlu0 %3397
        %3399 = vrot.lane.b32.xlu0 %v3323, 108
        %v3400 = vpop.permute.xlu0 %3399
        %3401 = vrot.lane.b32.xlu0 %v3328, 108
        %v3402 = vpop.permute.xlu0 %3401
        %3403 = vrot.lane.b32.xlu0 %v3331, 108
        %v3404 = vpop.permute.xlu0 %3403
        %3405 = vrot.lane.b32.xlu0 %v3336, 108
        %v3406 = vpop.permute.xlu0 %3405
        %3407 = vrot.lane.b32.xlu0 %v3339, 108
        %v3408 = vpop.permute.xlu0 %3407
        %3409 = vrot.lane.b32.xlu0 %v3344, 108
        %v3410 = vpop.permute.xlu0 %3409
        %3411 = vrot.lane.b32.xlu0 %v3347, 108
        %v3412 = vpop.permute.xlu0 %3411
        %3413 = vrot.lane.b32.xlu0 %v3352, 108
        %v3414 = vpop.permute.xlu0 %3413
        %3415 = vrot.lane.b32.xlu0 %v3355, 108
        %v3416 = vpop.permute.xlu0 %3415
        %3417 = vrot.lane.b32.xlu0 %v3360, 108
        %v3418 = vpop.permute.xlu0 %3417
        %3419 = vrot.lane.b32.xlu0 %v3363, 108
        %v3420 = vpop.permute.xlu0 %3419
        %v3437 = vmul.f32 %v3371, %v3390
        %v3438 = vmul.f32 %v3371, %v3392
        %v3439 = vmul.f32 %v3371, %v3394
        %v3440 = vmul.f32 %v3371, %v3396
        %v3441 = vmul.f32 %v3371, %v3398
        %v3442 = vmul.f32 %v3371, %v3400
        %v3443 = vmul.f32 %v3371, %v3402
        %v3444 = vmul.f32 %v3371, %v3404
        %v3445 = vmul.f32 %v3371, %v3406
        %v3446 = vmul.f32 %v3371, %v3408
        %v3447 = vmul.f32 %v3371, %v3410
        %v3448 = vmul.f32 %v3371, %v3412
        %v3449 = vmul.f32 %v3371, %v3414
        %v3450 = vmul.f32 %v3371, %v3416
        %v3451 = vmul.f32 %v3371, %v3418
        %v3452 = vmul.f32 %v3371, %v3420
        %v3453 = vadd.f32 %v3304, %v3437
        %v3454 = vadd.f32 %v3307, %v3438
        %v3455 = vadd.f32 %v3312, %v3439
        %v3456 = vadd.f32 %v3315, %v3440
        %v3457 = vadd.f32 %v3320, %v3441
        %v3458 = vadd.f32 %v3323, %v3442
        %v3459 = vadd.f32 %v3328, %v3443
        %v3460 = vadd.f32 %v3331, %v3444
        %v3461 = vadd.f32 %v3336, %v3445
        %v3462 = vadd.f32 %v3339, %v3446
        %v3463 = vadd.f32 %v3344, %v3447
        %v3464 = vadd.f32 %v3347, %v3448
        %v3465 = vadd.f32 %v3352, %v3449
        %v3466 = vadd.f32 %v3355, %v3450
        %v3467 = vadd.f32 %v3360, %v3451
        %v3468 = vadd.f32 %v3363, %v3452
        %v3469 = vpack.c.bf16 %v3454, %v3453
        %v3470 = vpack.c.bf16 %v3456, %v3455
        %v3471 = vpack.c.bf16 %v3458, %v3457
        %v3472 = vpack.c.bf16 %v3460, %v3459
        %v3473 = vpack.c.bf16 %v3462, %v3461
        %v3474 = vpack.c.bf16 %v3464, %v3463
        %v3475 = vpack.c.bf16 %v3466, %v3465
        %v3476 = vpack.c.bf16 %v3468, %v3467
        %v3477 = vld [vmem:[%s5] sm:$0xff]
        %v3478 = vld [vmem:[%s5 + $0x8] sm:$0xff]
        %v3479 = vld [vmem:[%s5 + $0x10] sm:$0xff]
        %v3480 = vld [vmem:[%s5 + $0x18] sm:$0xff]
        %v3481 = vld [vmem:[%s5 + $0x20] sm:$0x33]
        %v3482 = vld [vmem:[%s5 + $0x28] sm:$0x33]
        %v3483 = vld [vmem:[%s6] sm:$0xf]
        %v3485 = vlaneseq
        %v3486 = vshrl.u32 %v3485, 7
        %v3487 = vsub.s32 0, %v3486
        %v3488 = vrot.slane %v3483, %v3487
        %v3489 = vlaneseq
        %v3490 = vshrl.u32 %v3489, 7
        %v3491 = vsub.s32 1, %v3490
        %v3492 = vrot.slane %v3483, %v3491
        %v3493 = vlaneseq
        %v3494 = vshrl.u32 %v3493, 7
        %v3495 = vsub.s32 2, %v3494
        %v3496 = vrot.slane %v3483, %v3495
        %v3497 = vlaneseq
        %v3498 = vshrl.u32 %v3497, 7
        %v3499 = vsub.s32 3, %v3498
        %v3500 = vrot.slane %v3483, %v3499
        %v3511 = vunpack.c.l.b16 %v3477
        %v3512 = vunpack.c.h.b16 %v3477
        %v3513 = vunpack.c.l.b16 %v3478
        %v3514 = vunpack.c.h.b16 %v3478
        %v3515 = vunpack.c.l.b16 %v3479
        %v3516 = vunpack.c.h.b16 %v3479
        %v3517 = vunpack.c.l.b16 %v3480
        %v3518 = vunpack.c.h.b16 %v3480
        %v3519 = vunpack.c.l.b16 %v3481
        %v3520 = vunpack.c.h.b16 %v3481
        %v3521 = vunpack.c.l.b16 %v3482
        %v3522 = vunpack.c.h.b16 %v3482
        %v3523 = vpack.c.b16 %v3515, %v3511
        %v3524 = vpack.c.b16 %v3516, %v3512
        %v3525 = vpack.c.b16 %v3517, %v3513
        %v3526 = vpack.c.b16 %v3518, %v3514
        %v3527 = vpack.c.b16 %v3519, %v3519
        %v3528 = vpack.c.b16 %v3520, %v3520
        %v3529 = vpack.c.b16 %v3521, %v3521
        %v3530 = vpack.c.b16 %v3522, %v3522
        %vm3535 = vcmask 162816
        %v3537 = vsel %vm3535, %v3469, 0
        %v3540 = vsel %vm3535, %v3470, 0
        %v3543 = vsel %vm3535, %v3471, 0
        %v3546 = vsel %vm3535, %v3472, 0
        %v3549 = vsel %vm3535, %v3473, 0
        %v3552 = vsel %vm3535, %v3474, 0
        %v3555 = vsel %vm3535, %v3475, 0
        %v3558 = vsel %vm3535, %v3476, 0
        %vm3560 = vcmask 1041408
        %v3562 = vsel %vm3560, %v3527, 0
        %v3565 = vsel %vm3560, %v3528, 0
        %v3568 = vsel %vm3560, %v3529, 0
        %v3571 = vsel %vm3560, %v3530, 0
        %3573 = vmatprep.subr.bf16.mxu0 %v3524
        %3574 = vmatpush1.bf16.msra.mxu0 %v3523
        %3575 = vmatprep.subr.bf16.mxu0 %v3565
        %3576 = vmatpush1.bf16.msra.mxu0 %v3562
        %3577 = vmatprep.subr.bf16.mxu0 0
        %3578 = vmatpush1.bf16.msra.mxu0 0
        %3579 = vmatprep.subr.bf16.mxu0 0
        %3580 = vmatpush1.bf16.msra.mxu0 0
        %3581 = vmatprep.subr.bf16.mxu0 0
        %3582 = vmatpush1.bf16.msra.mxu0 0
        %3583 = vmatprep.subr.bf16.mxu0 0
        %3584 = vmatpush1.bf16.msra.mxu0 0
        %3585 = vmatprep.subr.bf16.mxu0 0
        %3586 = vmatpush1.bf16.msra.mxu0 0
        %3587 = vmatprep.subr.bf16.mxu0 0
        %3588 = vmatpush1.bf16.msra.mxu0 0
        %3589 = vmatprep.subr.bf16.mxu0 0
        %3590 = vmatpush1.bf16.msra.mxu0 0
        %3591 = vmatprep.subr.bf16.mxu0 0
        %3592 = vmatpush1.bf16.msra.mxu0 0
        %3593 = vmatprep.subr.bf16.mxu0 0
        %3594 = vmatpush1.bf16.msra.mxu0 0
        %3595 = vmatprep.subr.bf16.mxu0 0
        %3596 = vmatpush1.bf16.msra.mxu0 0
        %3597 = vmatprep.subr.bf16.mxu0 0
        %3598 = vmatpush1.bf16.msra.mxu0 0
        %3599 = vmatprep.subr.bf16.mxu0 0
        %3600 = vmatpush1.bf16.msra.mxu0 0
        %3601 = vmatprep.subr.bf16.mxu0 0
        %3602 = vmatpush1.bf16.msra.mxu0 0
        %3603 = vmatprep.subr.bf16.mxu0 0
        %3604 = vmatpush1.bf16.msra.mxu0 0
        %3605 = vmatprep.mubr.bf16.mxu0 0
        %3606 = vmatmul.mubr.bf16.gmra.mrb[0].mxu0 %v3537
        %v3607 = vpop.f32.mrb[0].mxu0
        %v3608 = vadd.f32 %v3488, %v3607
        %v3609 = vpop.f32.mrb[0].mxu0
        %v3610 = vadd.f32 %v3492, %v3609
        %v3611 = vpop.f32.mrb[0].mxu0
        %v3612 = vadd.f32 %v3488, %v3611
        %v3613 = vpop.f32.mrb[0].mxu0
        %v3614 = vadd.f32 %v3492, %v3613
        %3615 = vmatprep.mubr.bf16.mxu0 0
        %3616 = vmatmul.mubr.bf16.gmra.mrb[0].mxu0 %v3540
        %v3617 = vpop.f32.mrb[0].mxu0
        %v3618 = vadd.f32 %v3488, %v3617
        %v3619 = vpop.f32.mrb[0].mxu0
        %v3620 = vadd.f32 %v3492, %v3619
        %v3621 = vpop.f32.mrb[0].mxu0
        %v3622 = vadd.f32 %v3488, %v3621
        %v3623 = vpop.f32.mrb[0].mxu0
        %v3624 = vadd.f32 %v3492, %v3623
        %3625 = vmatprep.mubr.bf16.mxu0 0
        %3626 = vmatmul.mubr.bf16.gmra.mrb[0].mxu0 %v3543
        %v3627 = vpop.f32.mrb[0].mxu0
        %v3628 = vadd.f32 %v3488, %v3627
        %v3629 = vpop.f32.mrb[0].mxu0
        %v3630 = vadd.f32 %v3492, %v3629
        %v3631 = vpop.f32.mrb[0].mxu0
        %v3632 = vadd.f32 %v3488, %v3631
        %v3633 = vpop.f32.mrb[0].mxu0
        %v3634 = vadd.f32 %v3492, %v3633
        %3635 = vmatprep.mubr.bf16.mxu0 0
        %3636 = vmatmul.mubr.bf16.gmra.mrb[0].mxu0 %v3546
        %v3637 = vpop.f32.mrb[0].mxu0
        %v3638 = vadd.f32 %v3488, %v3637
        %v3639 = vpop.f32.mrb[0].mxu0
        %v3640 = vadd.f32 %v3492, %v3639
        %v3641 = vpop.f32.mrb[0].mxu0
        %v3642 = vadd.f32 %v3488, %v3641
        %v3643 = vpop.f32.mrb[0].mxu0
        %v3644 = vadd.f32 %v3492, %v3643
        %3645 = vmatprep.mubr.bf16.mxu0 0
        %3646 = vmatmul.mubr.bf16.gmra.mrb[0].mxu0 %v3549
        %v3647 = vpop.f32.mrb[0].mxu0
        %v3648 = vadd.f32 %v3488, %v3647
        %v3649 = vpop.f32.mrb[0].mxu0
        %v3650 = vadd.f32 %v3492, %v3649
        %v3651 = vpop.f32.mrb[0].mxu0
        %v3652 = vadd.f32 %v3488, %v3651
        %v3653 = vpop.f32.mrb[0].mxu0
        %v3654 = vadd.f32 %v3492, %v3653
        %3655 = vmatprep.mubr.bf16.mxu0 0
        %3656 = vmatmul.mubr.bf16.gmra.mrb[0].mxu0 %v3552
        %v3657 = vpop.f32.mrb[0].mxu0
        %v3658 = vadd.f32 %v3488, %v3657
        %v3659 = vpop.f32.mrb[0].mxu0
        %v3660 = vadd.f32 %v3492, %v3659
        %v3661 = vpop.f32.mrb[0].mxu0
        %v3662 = vadd.f32 %v3488, %v3661
        %v3663 = vpop.f32.mrb[0].mxu0
        %v3664 = vadd.f32 %v3492, %v3663
        %3665 = vmatprep.mubr.bf16.mxu0 0
        %3666 = vmatmul.mubr.bf16.gmra.mrb[0].mxu0 %v3555
        %v3667 = vpop.f32.mrb[0].mxu0
        %v3668 = vadd.f32 %v3488, %v3667
        %v3669 = vpop.f32.mrb[0].mxu0
        %v3670 = vadd.f32 %v3492, %v3669
        %v3671 = vpop.f32.mrb[0].mxu0
        %v3672 = vadd.f32 %v3488, %v3671
        %v3673 = vpop.f32.mrb[0].mxu0
        %v3674 = vadd.f32 %v3492, %v3673
        %3675 = vmatprep.mubr.bf16.mxu0 0
        %3676 = vmatmul.mubr.bf16.gmra.mrb[0].mxu0 %v3558
        %v3677 = vpop.f32.mrb[0].mxu0
        %v3678 = vadd.f32 %v3488, %v3677
        %v3679 = vpop.f32.mrb[0].mxu0
        %v3680 = vadd.f32 %v3492, %v3679
        %v3681 = vpop.f32.mrb[0].mxu0
        %v3682 = vadd.f32 %v3488, %v3681
        %v3683 = vpop.f32.mrb[0].mxu0
        %v3684 = vadd.f32 %v3492, %v3683
        %3685 = vdwg.mxu0
        %3686 = vmatprep.subr.bf16.mxu0 %v3526
        %3687 = vmatpush1.bf16.msra.mxu0 %v3525
        %3688 = vmatprep.subr.bf16.mxu0 %v3571
        %3689 = vmatpush1.bf16.msra.mxu0 %v3568
        %3690 = vmatprep.subr.bf16.mxu0 0
        %3691 = vmatpush1.bf16.msra.mxu0 0
        %3692 = vmatprep.subr.bf16.mxu0 0
        %3693 = vmatpush1.bf16.msra.mxu0 0
        %3694 = vmatprep.subr.bf16.mxu0 0
        %3695 = vmatpush1.bf16.msra.mxu0 0
        %3696 = vmatprep.subr.bf16.mxu0 0
        %3697 = vmatpush1.bf16.msra.mxu0 0
        %3698 = vmatprep.subr.bf16.mxu0 0
        %3699 = vmatpush1.bf16.msra.mxu0 0
        %3700 = vmatprep.subr.bf16.mxu0 0
        %3701 = vmatpush1.bf16.msra.mxu0 0
        %3702 = vmatprep.subr.bf16.mxu0 0
        %3703 = vmatpush1.bf16.msra.mxu0 0
        %3704 = vmatprep.subr.bf16.mxu0 0
        %3705 = vmatpush1.bf16.msra.mxu0 0
        %3706 = vmatprep.subr.bf16.mxu0 0
        %3707 = vmatpush1.bf16.msra.mxu0 0
        %3708 = vmatprep.subr.bf16.mxu0 0
        %3709 = vmatpush1.bf16.msra.mxu0 0
        %3710 = vmatprep.subr.bf16.mxu0 0
        %3711 = vmatpush1.bf16.msra.mxu0 0
        %3712 = vmatprep.subr.bf16.mxu0 0
        %3713 = vmatpush1.bf16.msra.mxu0 0
        %3714 = vmatprep.subr.bf16.mxu0 0
        %3715 = vmatpush1.bf16.msra.mxu0 0
        %3716 = vmatprep.subr.bf16.mxu0 0
        %3717 = vmatpush1.bf16.msra.mxu0 0
        %3718 = vmatprep.mubr.bf16.mxu0 0
        %3719 = vmatmul.mubr.bf16.gmra.mrb[0].mxu0 %v3537
        %v3720 = vpop.f32.mrb[0].mxu0
        %v3721 = vadd.f32 %v3496, %v3720
        %v3722 = vpop.f32.mrb[0].mxu0
        %v3723 = vadd.f32 %v3500, %v3722
        %v3724 = vpop.f32.mrb[0].mxu0
        %v3725 = vadd.f32 %v3496, %v3724
        %v3726 = vpop.f32.mrb[0].mxu0
        %v3727 = vadd.f32 %v3500, %v3726
        %3728 = vmatprep.mubr.bf16.mxu0 0
        %3729 = vmatmul.mubr.bf16.gmra.mrb[0].mxu0 %v3540
        %v3730 = vpop.f32.mrb[0].mxu0
        %v3731 = vadd.f32 %v3496, %v3730
        %v3732 = vpop.f32.mrb[0].mxu0
        %v3733 = vadd.f32 %v3500, %v3732
        %v3734 = vpop.f32.mrb[0].mxu0
        %v3735 = vadd.f32 %v3496, %v3734
        %v3736 = vpop.f32.mrb[0].mxu0
        %v3737 = vadd.f32 %v3500, %v3736
        %3738 = vmatprep.mubr.bf16.mxu0 0
        %3739 = vmatmul.mubr.bf16.gmra.mrb[0].mxu0 %v3543
        %v3740 = vpop.f32.mrb[0].mxu0
        %v3741 = vadd.f32 %v3496, %v3740
        %v3742 = vpop.f32.mrb[0].mxu0
        %v3743 = vadd.f32 %v3500, %v3742
        %v3744 = vpop.f32.mrb[0].mxu0
        %v3745 = vadd.f32 %v3496, %v3744
        %v3746 = vpop.f32.mrb[0].mxu0
        %v3747 = vadd.f32 %v3500, %v3746
        %3748 = vmatprep.mubr.bf16.mxu0 0
        %3749 = vmatmul.mubr.bf16.gmra.mrb[0].mxu0 %v3546
        %v3750 = vpop.f32.mrb[0].mxu0
        %v3751 = vadd.f32 %v3496, %v3750
        %v3752 = vpop.f32.mrb[0].mxu0
        %v3753 = vadd.f32 %v3500, %v3752
        %v3754 = vpop.f32.mrb[0].mxu0
        %v3755 = vadd.f32 %v3496, %v3754
        %v3756 = vpop.f32.mrb[0].mxu0
        %v3757 = vadd.f32 %v3500, %v3756
        %3758 = vmatprep.mubr.bf16.mxu0 0
        %3759 = vmatmul.mubr.bf16.gmra.mrb[0].mxu0 %v3549
        %v3760 = vpop.f32.mrb[0].mxu0
        %v3761 = vadd.f32 %v3496, %v3760
        %v3762 = vpop.f32.mrb[0].mxu0
        %v3763 = vadd.f32 %v3500, %v3762
        %v3764 = vpop.f32.mrb[0].mxu0
        %v3765 = vadd.f32 %v3496, %v3764
        %v3766 = vpop.f32.mrb[0].mxu0
        %v3767 = vadd.f32 %v3500, %v3766
        %3768 = vmatprep.mubr.bf16.mxu0 0
        %3769 = vmatmul.mubr.bf16.gmra.mrb[0].mxu0 %v3552
        %v3770 = vpop.f32.mrb[0].mxu0
        %v3771 = vadd.f32 %v3496, %v3770
        %v3772 = vpop.f32.mrb[0].mxu0
        %v3773 = vadd.f32 %v3500, %v3772
        %v3774 = vpop.f32.mrb[0].mxu0
        %v3775 = vadd.f32 %v3496, %v3774
        %v3776 = vpop.f32.mrb[0].mxu0
        %v3777 = vadd.f32 %v3500, %v3776
        %3778 = vmatprep.mubr.bf16.mxu0 0
        %3779 = vmatmul.mubr.bf16.gmra.mrb[0].mxu0 %v3555
        %v3780 = vpop.f32.mrb[0].mxu0
        %v3781 = vadd.f32 %v3496, %v3780
        %v3782 = vpop.f32.mrb[0].mxu0
        %v3783 = vadd.f32 %v3500, %v3782
        %v3784 = vpop.f32.mrb[0].mxu0
        %v3785 = vadd.f32 %v3496, %v3784
        %v3786 = vpop.f32.mrb[0].mxu0
        %v3787 = vadd.f32 %v3500, %v3786
        %3788 = vmatprep.mubr.bf16.mxu0 0
        %3789 = vmatmul.mubr.bf16.gmra.mrb[0].mxu0 %v3558
        %v3790 = vpop.f32.mrb[0].mxu0
        %v3791 = vadd.f32 %v3496, %v3790
        %v3792 = vpop.f32.mrb[0].mxu0
        %v3793 = vadd.f32 %v3500, %v3792
        %v3794 = vpop.f32.mrb[0].mxu0
        %v3795 = vadd.f32 %v3496, %v3794
        %v3796 = vpop.f32.mrb[0].mxu0
        %v3797 = vadd.f32 %v3500, %v3796
        %3798 = vdwg.mxu0
        %v3799 = vmax.f32 %v3608, 0.0
        %v3800 = vmax.f32 %v3610, 0.0
        %v3801 = vmax.f32 %v3721, 0.0
        %v3802 = vmax.f32 %v3723, 0.0
        %v3803 = vmax.f32 %v3612, 0.0
        %v3804 = vmax.f32 %v3614, 0.0
        %v3805 = vmax.f32 %v3725, 0.0
        %v3806 = vmax.f32 %v3727, 0.0
        %v3807 = vmax.f32 %v3618, 0.0
        %v3808 = vmax.f32 %v3620, 0.0
        %v3809 = vmax.f32 %v3731, 0.0
        %v3810 = vmax.f32 %v3733, 0.0
        %v3811 = vmax.f32 %v3622, 0.0
        %v3812 = vmax.f32 %v3624, 0.0
        %v3813 = vmax.f32 %v3735, 0.0
        %v3814 = vmax.f32 %v3737, 0.0
        %v3815 = vmax.f32 %v3628, 0.0
        %v3816 = vmax.f32 %v3630, 0.0
        %v3817 = vmax.f32 %v3741, 0.0
        %v3818 = vmax.f32 %v3743, 0.0
        %v3819 = vmax.f32 %v3632, 0.0
        %v3820 = vmax.f32 %v3634, 0.0
        %v3821 = vmax.f32 %v3745, 0.0
        %v3822 = vmax.f32 %v3747, 0.0
        %v3823 = vmax.f32 %v3638, 0.0
        %v3824 = vmax.f32 %v3640, 0.0
        %v3825 = vmax.f32 %v3751, 0.0
        %v3826 = vmax.f32 %v3753, 0.0
        %v3827 = vmax.f32 %v3642, 0.0
        %v3828 = vmax.f32 %v3644, 0.0
        %v3829 = vmax.f32 %v3755, 0.0
        %v3830 = vmax.f32 %v3757, 0.0
        %v3831 = vmax.f32 %v3648, 0.0
        %v3832 = vmax.f32 %v3650, 0.0
        %v3833 = vmax.f32 %v3761, 0.0
        %v3834 = vmax.f32 %v3763, 0.0
        %v3835 = vmax.f32 %v3652, 0.0
        %v3836 = vmax.f32 %v3654, 0.0
        %v3837 = vmax.f32 %v3765, 0.0
        %v3838 = vmax.f32 %v3767, 0.0
        %v3839 = vmax.f32 %v3658, 0.0
        %v3840 = vmax.f32 %v3660, 0.0
        %v3841 = vmax.f32 %v3771, 0.0
        %v3842 = vmax.f32 %v3773, 0.0
        %v3843 = vmax.f32 %v3662, 0.0
        %v3844 = vmax.f32 %v3664, 0.0
        %v3845 = vmax.f32 %v3775, 0.0
        %v3846 = vmax.f32 %v3777, 0.0
        %v3847 = vmax.f32 %v3668, 0.0
        %v3848 = vmax.f32 %v3670, 0.0
        %v3849 = vmax.f32 %v3781, 0.0
        %v3850 = vmax.f32 %v3783, 0.0
        %v3851 = vmax.f32 %v3672, 0.0
        %v3852 = vmax.f32 %v3674, 0.0
        %v3853 = vmax.f32 %v3785, 0.0
        %v3854 = vmax.f32 %v3787, 0.0
        %v3855 = vmax.f32 %v3678, 0.0
        %v3856 = vmax.f32 %v3680, 0.0
        %v3857 = vmax.f32 %v3791, 0.0
        %v3858 = vmax.f32 %v3793, 0.0
        %v3859 = vmax.f32 %v3682, 0.0
        %v3860 = vmax.f32 %v3684, 0.0
        %v3861 = vmax.f32 %v3795, 0.0
        %v3862 = vmax.f32 %v3797, 0.0
        %v3863 = vpack.c.bf16 %v3803, %v3799
        %v3864 = vpack.c.bf16 %v3804, %v3800
        %v3865 = vpack.c.bf16 %v3805, %v3801
        %v3866 = vpack.c.bf16 %v3806, %v3802
        %v3867 = vpack.c.bf16 %v3811, %v3807
        %v3868 = vpack.c.bf16 %v3812, %v3808
        %v3869 = vpack.c.bf16 %v3813, %v3809
        %v3870 = vpack.c.bf16 %v3814, %v3810
        %v3871 = vpack.c.bf16 %v3819, %v3815
        %v3872 = vpack.c.bf16 %v3820, %v3816
        %v3873 = vpack.c.bf16 %v3821, %v3817
        %v3874 = vpack.c.bf16 %v3822, %v3818
        %v3875 = vpack.c.bf16 %v3827, %v3823
        %v3876 = vpack.c.bf16 %v3828, %v3824
        %v3877 = vpack.c.bf16 %v3829, %v3825
        %v3878 = vpack.c.bf16 %v3830, %v3826
        %v3879 = vpack.c.bf16 %v3835, %v3831
        %v3880 = vpack.c.bf16 %v3836, %v3832
        %v3881 = vpack.c.bf16 %v3837, %v3833
        %v3882 = vpack.c.bf16 %v3838, %v3834
        %v3883 = vpack.c.bf16 %v3843, %v3839
        %v3884 = vpack.c.bf16 %v3844, %v3840
        %v3885 = vpack.c.bf16 %v3845, %v3841
        %v3886 = vpack.c.bf16 %v3846, %v3842
        %v3887 = vpack.c.bf16 %v3851, %v3847
        %v3888 = vpack.c.bf16 %v3852, %v3848
        %v3889 = vpack.c.bf16 %v3853, %v3849
        %v3890 = vpack.c.bf16 %v3854, %v3850
        %v3891 = vpack.c.bf16 %v3859, %v3855
        %v3892 = vpack.c.bf16 %v3860, %v3856
        %v3893 = vpack.c.bf16 %v3861, %v3857
        %v3894 = vpack.c.bf16 %v3862, %v3858
        %v3895 = vld [vmem:[%s7] sm:$0xff]
        %v3896 = vld [vmem:[%s7 + $0x8] sm:$0xff]
        %v3897 = vld [vmem:[%s7 + $0x10] sm:$0xff]
        %v3898 = vld [vmem:[%s7 + $0x18] sm:$0xf]
        %v3899 = vld [vmem:[%s7 + $0x1c] sm:$0xff]
        %v3900 = vld [vmem:[%s7 + $0x24] sm:$0xff]
        %v3901 = vld [vmem:[%s7 + $0x2c] sm:$0xff]
        %v3902 = vld [vmem:[%s7 + $0x34] sm:$0xf]
        %v3903 = vld [vmem:[%s7 + $0x38] sm:$0xff]
        %v3904 = vld [vmem:[%s7 + $0x40] sm:$0xff]
        %v3905 = vld [vmem:[%s7 + $0x48] sm:$0xff]
        %v3906 = vld [vmem:[%s7 + $0x50] sm:$0xf]
        %v3907 = vld [vmem:[%s7 + $0x54] sm:$0xff]
        %v3908 = vld [vmem:[%s7 + $0x5c] sm:$0xff]
        %v3909 = vld [vmem:[%s7 + $0x64] sm:$0xff]
        %v3910 = vld [vmem:[%s7 + $0x6c] sm:$0xf]
        %v3911 = vld [vmem:[%s7 + $0x70] sm:$0xff]
        %v3912 = vld [vmem:[%s7 + $0x78] sm:$0xff]
        %v3913 = vld [vmem:[%s7 + $0x80] sm:$0xff]
        %v3914 = vld [vmem:[%s7 + $0x88] sm:$0xf]
        %v3915 = vld [vmem:[%s7 + $0x8c] sm:$0xff]
        %v3916 = vld [vmem:[%s7 + $0x94] sm:$0xff]
        %v3917 = vld [vmem:[%s7 + $0x9c] sm:$0xff]
        %v3918 = vld [vmem:[%s7 + $0xa4] sm:$0xf]
        %v3919 = vld [vmem:[%s7 + $0xa8] sm:$0xff]
        %v3920 = vld [vmem:[%s7 + $0xb0] sm:$0xff]
        %v3921 = vld [vmem:[%s7 + $0xb8] sm:$0xff]
        %v3922 = vld [vmem:[%s7 + $0xc0] sm:$0xf]
        %v3923 = vld [vmem:[%s7 + $0xc4] sm:$0xff]
        %v3924 = vld [vmem:[%s7 + $0xcc] sm:$0xff]
        %v3925 = vld [vmem:[%s7 + $0xd4] sm:$0xff]
        %v3926 = vld [vmem:[%s7 + $0xdc] sm:$0xf]
        %v3927 = vld [vmem:[%s7 + $0xe0] sm:$0xff]
        %v3928 = vld [vmem:[%s7 + $0xe8] sm:$0xff]
        %v3929 = vld [vmem:[%s7 + $0xf0] sm:$0xff]
        %v3930 = vld [vmem:[%s7 + $0xf8] sm:$0xf]
        %v3931 = vld [vmem:[%s7 + $0xfc] sm:$0xff]
        %v3932 = vld [vmem:[%s7 + $0x104] sm:$0xff]
        %v3933 = vld [vmem:[%s7 + $0x10c] sm:$0xff]
        %v3934 = vld [vmem:[%s7 + $0x114] sm:$0xf]
        %v3935 = vld [vmem:[%s7 + $0x118] sm:$0xff]
        %v3936 = vld [vmem:[%s7 + $0x120] sm:$0xff]
        %v3937 = vld [vmem:[%s7 + $0x128] sm:$0xff]
        %v3938 = vld [vmem:[%s7 + $0x130] sm:$0xf]
        %v3939 = vld [vmem:[%s7 + $0x134] sm:$0xff]
        %v3940 = vld [vmem:[%s7 + $0x13c] sm:$0xff]
        %v3941 = vld [vmem:[%s7 + $0x144] sm:$0xff]
        %v3942 = vld [vmem:[%s7 + $0x14c] sm:$0xf]
        %v3943 = vld [vmem:[%s7 + $0x150] sm:$0xff]
        %v3944 = vld [vmem:[%s7 + $0x158] sm:$0xff]
        %v3945 = vld [vmem:[%s7 + $0x160] sm:$0xff]
        %v3946 = vld [vmem:[%s7 + $0x168] sm:$0xf]
        %v3947 = vld [vmem:[%s7 + $0x16c] sm:$0xff]
        %v3948 = vld [vmem:[%s7 + $0x174] sm:$0xff]
        %v3949 = vld [vmem:[%s7 + $0x17c] sm:$0xff]
        %v3950 = vld [vmem:[%s7 + $0x184] sm:$0xf]
        %v3951 = vld [vmem:[%s7 + $0x188] sm:$0xff]
        %v3952 = vld [vmem:[%s7 + $0x190] sm:$0xff]
        %v3953 = vld [vmem:[%s7 + $0x198] sm:$0xff]
        %v3954 = vld [vmem:[%s7 + $0x1a0] sm:$0xf]
        %v3955 = vld [vmem:[%s7 + $0x1a4] sm:$0xff]
        %v3956 = vld [vmem:[%s7 + $0x1ac] sm:$0xff]
        %v3957 = vld [vmem:[%s7 + $0x1b4] sm:$0xff]
        %v3958 = vld [vmem:[%s7 + $0x1bc] sm:$0xf]
        %v3959 = vld [vmem:[%s7 + $0x1c0] sm:$0xff]
        %v3960 = vld [vmem:[%s7 + $0x1c8] sm:$0xff]
        %v3961 = vld [vmem:[%s7 + $0x1d0] sm:$0xff]
        %v3962 = vld [vmem:[%s7 + $0x1d8] sm:$0xf]
        %v3963 = vld [vmem:[%s7 + $0x1dc] sm:$0xff]
        %v3964 = vld [vmem:[%s7 + $0x1e4] sm:$0xff]
        %v3965 = vld [vmem:[%s7 + $0x1ec] sm:$0xff]
        %v3966 = vld [vmem:[%s7 + $0x1f4] sm:$0xf]
        %v3967 = vld [vmem:[%s7 + $0x1f8] sm:$0xff]
        %v3968 = vld [vmem:[%s7 + $0x200] sm:$0xff]
        %v3969 = vld [vmem:[%s7 + $0x208] sm:$0xff]
        %v3970 = vld [vmem:[%s7 + $0x210] sm:$0xf]
        %v3971 = vld [vmem:[%s7 + $0x214] sm:$0xff]
        %v3972 = vld [vmem:[%s7 + $0x21c] sm:$0xff]
        %v3973 = vld [vmem:[%s7 + $0x224] sm:$0xff]
        %v3974 = vld [vmem:[%s7 + $0x22c] sm:$0xf]
        %v3975 = vld [vmem:[%s7 + $0x230] sm:$0xff]
        %v3976 = vld [vmem:[%s7 + $0x238] sm:$0xff]
        %v3977 = vld [vmem:[%s7 + $0x240] sm:$0xff]
        %v3978 = vld [vmem:[%s7 + $0x248] sm:$0xf]
        %v3979 = vld [vmem:[%s7 + $0x24c] sm:$0xff]
        %v3980 = vld [vmem:[%s7 + $0x254] sm:$0xff]
        %v3981 = vld [vmem:[%s7 + $0x25c] sm:$0xff]
        %v3982 = vld [vmem:[%s7 + $0x264] sm:$0xf]
        %v3983 = vld [vmem:[%s7 + $0x268] sm:$0xff]
        %v3984 = vld [vmem:[%s7 + $0x270] sm:$0xff]
        %v3985 = vld [vmem:[%s7 + $0x278] sm:$0xff]
        %v3986 = vld [vmem:[%s7 + $0x280] sm:$0xf]
        %v3987 = vld [vmem:[%s7 + $0x284] sm:$0xff]
        %v3988 = vld [vmem:[%s7 + $0x28c] sm:$0xff]
        %v3989 = vld [vmem:[%s7 + $0x294] sm:$0xff]
        %v3990 = vld [vmem:[%s7 + $0x29c] sm:$0xf]
        %v3991 = vld [vmem:[%s7 + $0x2a0] sm:$0xff]
        %v3992 = vld [vmem:[%s7 + $0x2a8] sm:$0xff]
        %v3993 = vld [vmem:[%s7 + $0x2b0] sm:$0xff]
        %v3994 = vld [vmem:[%s7 + $0x2b8] sm:$0xf]
        %v3995 = vld [vmem:[%s7 + $0x2bc] sm:$0xff]
        %v3996 = vld [vmem:[%s7 + $0x2c4] sm:$0xff]
        %v3997 = vld [vmem:[%s7 + $0x2cc] sm:$0xff]
        %v3998 = vld [vmem:[%s7 + $0x2d4] sm:$0xf]
        %v3999 = vld [vmem:[%s7 + $0x2d8] sm:$0xff]
        %v4000 = vld [vmem:[%s7 + $0x2e0] sm:$0xff]
        %v4001 = vld [vmem:[%s7 + $0x2e8] sm:$0xff]
        %v4002 = vld [vmem:[%s7 + $0x2f0] sm:$0xf]
        %v4003 = vld [vmem:[%s7 + $0x2f4] sm:$0xff]
        %v4004 = vld [vmem:[%s7 + $0x2fc] sm:$0xff]
        %v4005 = vld [vmem:[%s7 + $0x304] sm:$0xff]
        %v4006 = vld [vmem:[%s7 + $0x30c] sm:$0xf]
        %v4007 = vld [vmem:[%s7 + $0x310] sm:$0xff]
        %v4008 = vld [vmem:[%s7 + $0x318] sm:$0xff]
        %v4009 = vld [vmem:[%s7 + $0x320] sm:$0xff]
        %v4010 = vld [vmem:[%s7 + $0x328] sm:$0xf]
        %v4011 = vld [vmem:[%s7 + $0x32c] sm:$0xff]
        %v4012 = vld [vmem:[%s7 + $0x334] sm:$0xff]
        %v4013 = vld [vmem:[%s7 + $0x33c] sm:$0xff]
        %v4014 = vld [vmem:[%s7 + $0x344] sm:$0xf]
        %v4015 = vld [vmem:[%s7 + $0x348] sm:$0xff]
        %v4016 = vld [vmem:[%s7 + $0x350] sm:$0xff]
        %v4017 = vld [vmem:[%s7 + $0x358] sm:$0xff]
        %v4018 = vld [vmem:[%s7 + $0x360] sm:$0xf]
        %v4019 = vld [vmem:[%s7 + $0x364] sm:$0xff]
        %v4020 = vld [vmem:[%s7 + $0x36c] sm:$0xff]
        %v4021 = vld [vmem:[%s7 + $0x374] sm:$0xff]
        %v4022 = vld [vmem:[%s7 + $0x37c] sm:$0xf]
        %v4023 = vld [vmem:[%s7 + $0x380] sm:$0xff]
        %v4024 = vld [vmem:[%s7 + $0x388] sm:$0xff]
        %v4025 = vld [vmem:[%s7 + $0x390] sm:$0xff]
        %v4026 = vld [vmem:[%s7 + $0x398] sm:$0xf]
        %v4027 = vld [vmem:[%s7 + $0x39c] sm:$0xff]
        %v4028 = vld [vmem:[%s7 + $0x3a4] sm:$0xff]
        %v4029 = vld [vmem:[%s7 + $0x3ac] sm:$0xff]
        %v4030 = vld [vmem:[%s7 + $0x3b4] sm:$0xf]
        %v4031 = vld [vmem:[%s7 + $0x3b8] sm:$0xff]
        %v4032 = vld [vmem:[%s7 + $0x3c0] sm:$0xff]
        %v4033 = vld [vmem:[%s7 + $0x3c8] sm:$0xff]
        %v4034 = vld [vmem:[%s7 + $0x3d0] sm:$0xf]
        %v4035 = vld [vmem:[%s7 + $0x3d4] sm:$0xff]
        %v4036 = vld [vmem:[%s7 + $0x3dc] sm:$0xff]
        %v4037 = vld [vmem:[%s7 + $0x3e4] sm:$0xff]
        %v4038 = vld [vmem:[%s7 + $0x3ec] sm:$0xf]
        %v4039 = vld [vmem:[%s7 + $0x3f0] sm:$0xff]
        %v4040 = vld [vmem:[%s7 + $0x3f8] sm:$0xff]
        %v4041 = vld [vmem:[%s7 + $0x400] sm:$0xff]
        %v4042 = vld [vmem:[%s7 + $0x408] sm:$0xf]
        %v4043 = vld [vmem:[%s7 + $0x40c] sm:$0xff]
        %v4044 = vld [vmem:[%s7 + $0x414] sm:$0xff]
        %v4045 = vld [vmem:[%s7 + $0x41c] sm:$0xff]
        %v4046 = vld [vmem:[%s7 + $0x424] sm:$0xf]
        %v4047 = vld [vmem:[%s7 + $0x428] sm:$0xff]
        %v4048 = vld [vmem:[%s7 + $0x430] sm:$0xff]
        %v4049 = vld [vmem:[%s7 + $0x438] sm:$0xff]
        %v4050 = vld [vmem:[%s7 + $0x440] sm:$0xf]
        %v4051 = vld [vmem:[%s7 + $0x444] sm:$0xff]
        %v4052 = vld [vmem:[%s7 + $0x44c] sm:$0xff]
        %v4053 = vld [vmem:[%s7 + $0x454] sm:$0xff]
        %v4054 = vld [vmem:[%s7 + $0x45c] sm:$0xf]
        %v4055 = vld [vmem:[%s7 + $0x460] sm:$0xff]
        %v4056 = vld [vmem:[%s7 + $0x468] sm:$0xff]
        %v4057 = vld [vmem:[%s7 + $0x470] sm:$0xff]
        %v4058 = vld [vmem:[%s7 + $0x478] sm:$0xf]
        %v4059 = vld [vmem:[%s7 + $0x47c] sm:$0xff]
        %v4060 = vld [vmem:[%s7 + $0x484] sm:$0xff]
        %v4061 = vld [vmem:[%s7 + $0x48c] sm:$0xff]
        %v4062 = vld [vmem:[%s7 + $0x494] sm:$0xf]
        %v4063 = vld [vmem:[%s7 + $0x498] sm:$0xff]
        %v4064 = vld [vmem:[%s7 + $0x4a0] sm:$0xff]
        %v4065 = vld [vmem:[%s7 + $0x4a8] sm:$0xff]
        %v4066 = vld [vmem:[%s7 + $0x4b0] sm:$0xf]
        %v4067 = vld [vmem:[%s7 + $0x4b4] sm:$0xff]
        %v4068 = vld [vmem:[%s7 + $0x4bc] sm:$0xff]
        %v4069 = vld [vmem:[%s7 + $0x4c4] sm:$0xff]
        %v4070 = vld [vmem:[%s7 + $0x4cc] sm:$0xf]
        %v4071 = vld [vmem:[%s7 + $0x4d0] sm:$0xff]
        %v4072 = vld [vmem:[%s7 + $0x4d8] sm:$0xff]
        %v4073 = vld [vmem:[%s7 + $0x4e0] sm:$0xff]
        %v4074 = vld [vmem:[%s7 + $0x4e8] sm:$0xf]
        %v4075 = vld [vmem:[%s7 + $0x4ec] sm:$0xff]
        %v4076 = vld [vmem:[%s7 + $0x4f4] sm:$0xff]
        %v4077 = vld [vmem:[%s7 + $0x4fc] sm:$0xff]
        %v4078 = vld [vmem:[%s7 + $0x504] sm:$0xf]
        %v4079 = vld [vmem:[%s7 + $0x508] sm:$0xff]
        %v4080 = vld [vmem:[%s7 + $0x510] sm:$0xff]
        %v4081 = vld [vmem:[%s7 + $0x518] sm:$0xff]
        %v4082 = vld [vmem:[%s7 + $0x520] sm:$0xf]
        %v4083 = vld [vmem:[%s7 + $0x524] sm:$0xff]
        %v4084 = vld [vmem:[%s7 + $0x52c] sm:$0xff]
        %v4085 = vld [vmem:[%s7 + $0x534] sm:$0xff]
        %v4086 = vld [vmem:[%s7 + $0x53c] sm:$0xf]
        %v4087 = vld [vmem:[%s7 + $0x540] sm:$0xff]
        %v4088 = vld [vmem:[%s7 + $0x548] sm:$0xff]
        %v4089 = vld [vmem:[%s7 + $0x550] sm:$0xff]
        %v4090 = vld [vmem:[%s7 + $0x558] sm:$0xf]
        %v4091 = vld [vmem:[%s7 + $0x55c] sm:$0xff]
        %v4092 = vld [vmem:[%s7 + $0x564] sm:$0xff]
        %v4093 = vld [vmem:[%s7 + $0x56c] sm:$0xff]
        %v4094 = vld [vmem:[%s7 + $0x574] sm:$0xf]
        %v4095 = vld [vmem:[%s8] sm:$0xff]
        %v4097 = vlaneseq
        %v4098 = vshrl.u32 %v4097, 7
        %v4099 = vsub.s32 0, %v4098
        %v4100 = vrot.slane %v4095, %v4099
        %v4101 = vlaneseq
        %v4102 = vshrl.u32 %v4101, 7
        %v4103 = vsub.s32 1, %v4102
        %v4104 = vrot.slane %v4095, %v4103
        %v4105 = vlaneseq
        %v4106 = vshrl.u32 %v4105, 7
        %v4107 = vsub.s32 2, %v4106
        %v4108 = vrot.slane %v4095, %v4107
        %v4109 = vlaneseq
        %v4110 = vshrl.u32 %v4109, 7
        %v4111 = vsub.s32 3, %v4110
        %v4112 = vrot.slane %v4095, %v4111
        %v4113 = vlaneseq
        %v4114 = vshrl.u32 %v4113, 7
        %v4115 = vsub.s32 4, %v4114
        %v4116 = vrot.slane %v4095, %v4115
        %v4117 = vlaneseq
        %v4118 = vshrl.u32 %v4117, 7
        %v4119 = vsub.s32 5, %v4118
        %v4120 = vrot.slane %v4095, %v4119
        %v4121 = vlaneseq
        %v4122 = vshrl.u32 %v4121, 7
        %v4123 = vsub.s32 6, %v4122
        %v4124 = vrot.slane %v4095, %v4123
        %v4332 = vunpack.c.l.b16 %v3895
        %v4333 = vunpack.c.h.b16 %v3895
        %v4334 = vunpack.c.l.b16 %v3896
        %v4335 = vunpack.c.h.b16 %v3896
        %v4336 = vunpack.c.l.b16 %v3897
        %v4337 = vunpack.c.h.b16 %v3897
        %v4338 = vunpack.c.l.b16 %v3898
        %v4339 = vunpack.c.l.b16 %v3899
        %v4340 = vunpack.c.h.b16 %v3899
        %v4341 = vunpack.c.l.b16 %v3900
        %v4342 = vunpack.c.h.b16 %v3900
        %v4343 = vunpack.c.l.b16 %v3901
        %v4344 = vunpack.c.h.b16 %v3901
        %v4345 = vunpack.c.l.b16 %v3902
        %v4346 = vunpack.c.l.b16 %v3903
        %v4347 = vunpack.c.h.b16 %v3903
        %v4348 = vunpack.c.l.b16 %v3904
        %v4349 = vunpack.c.h.b16 %v3904
        %v4350 = vunpack.c.l.b16 %v3905
        %v4351 = vunpack.c.h.b16 %v3905
        %v4352 = vunpack.c.l.b16 %v3906
        %v4353 = vunpack.c.l.b16 %v3907
        %v4354 = vunpack.c.h.b16 %v3907
        %v4355 = vunpack.c.l.b16 %v3908
        %v4356 = vunpack.c.h.b16 %v3908
        %v4357 = vunpack.c.l.b16 %v3909
        %v4358 = vunpack.c.h.b16 %v3909
        %v4359 = vunpack.c.l.b16 %v3910
        %v4360 = vunpack.c.l.b16 %v3911
        %v4361 = vunpack.c.h.b16 %v3911
        %v4362 = vunpack.c.l.b16 %v3912
        %v4363 = vunpack.c.h.b16 %v3912
        %v4364 = vunpack.c.l.b16 %v3913
        %v4365 = vunpack.c.h.b16 %v3913
        %v4366 = vunpack.c.l.b16 %v3914
        %v4367 = vunpack.c.l.b16 %v3915
        %v4368 = vunpack.c.h.b16 %v3915
        %v4369 = vunpack.c.l.b16 %v3916
        %v4370 = vunpack.c.h.b16 %v3916
        %v4371 = vunpack.c.l.b16 %v3917
        %v4372 = vunpack.c.h.b16 %v3917
        %v4373 = vunpack.c.l.b16 %v3918
        %v4374 = vunpack.c.l.b16 %v3919
        %v4375 = vunpack.c.h.b16 %v3919
        %v4376 = vunpack.c.l.b16 %v3920
        %v4377 = vunpack.c.h.b16 %v3920
        %v4378 = vunpack.c.l.b16 %v3921
        %v4379 = vunpack.c.h.b16 %v3921
        %v4380 = vunpack.c.l.b16 %v3922
        %v4381 = vunpack.c.l.b16 %v3923
        %v4382 = vunpack.c.h.b16 %v3923
        %v4383 = vunpack.c.l.b16 %v3924
        %v4384 = vunpack.c.h.b16 %v3924
        %v4385 = vunpack.c.l.b16 %v3925
        %v4386 = vunpack.c.h.b16 %v3925
        %v4387 = vunpack.c.l.b16 %v3926
        %v4388 = vunpack.c.l.b16 %v3927
        %v4389 = vunpack.c.h.b16 %v3927
        %v4390 = vunpack.c.l.b16 %v3928
        %v4391 = vunpack.c.h.b16 %v3928
        %v4392 = vunpack.c.l.b16 %v3929
        %v4393 = vunpack.c.h.b16 %v3929
        %v4394 = vunpack.c.l.b16 %v3930
        %v4395 = vunpack.c.l.b16 %v3931
        %v4396 = vunpack.c.h.b16 %v3931
        %v4397 = vunpack.c.l.b16 %v3932
        %v4398 = vunpack.c.h.b16 %v3932
        %v4399 = vunpack.c.l.b16 %v3933
        %v4400 = vunpack.c.h.b16 %v3933
        %v4401 = vunpack.c.l.b16 %v3934
        %v4402 = vunpack.c.l.b16 %v3935
        %v4403 = vunpack.c.h.b16 %v3935
        %v4404 = vunpack.c.l.b16 %v3936
        %v4405 = vunpack.c.h.b16 %v3936
        %v4406 = vunpack.c.l.b16 %v3937
        %v4407 = vunpack.c.h.b16 %v3937
        %v4408 = vunpack.c.l.b16 %v3938
        %v4409 = vunpack.c.l.b16 %v3939
        %v4410 = vunpack.c.h.b16 %v3939
        %v4411 = vunpack.c.l.b16 %v3940
        %v4412 = vunpack.c.h.b16 %v3940
        %v4413 = vunpack.c.l.b16 %v3941
        %v4414 = vunpack.c.h.b16 %v3941
        %v4415 = vunpack.c.l.b16 %v3942
        %v4416 = vunpack.c.l.b16 %v3943
        %v4417 = vunpack.c.h.b16 %v3943
        %v4418 = vunpack.c.l.b16 %v3944
        %v4419 = vunpack.c.h.b16 %v3944
        %v4420 = vunpack.c.l.b16 %v3945
        %v4421 = vunpack.c.h.b16 %v3945
        %v4422 = vunpack.c.l.b16 %v3946
        %v4423 = vunpack.c.l.b16 %v3947
        %v4424 = vunpack.c.h.b16 %v3947
        %v4425 = vunpack.c.l.b16 %v3948
        %v4426 = vunpack.c.h.b16 %v3948
        %v4427 = vunpack.c.l.b16 %v3949
        %v4428 = vunpack.c.h.b16 %v3949
        %v4429 = vunpack.c.l.b16 %v3950
        %v4430 = vunpack.c.l.b16 %v3951
        %v4431 = vunpack.c.h.b16 %v3951
        %v4432 = vunpack.c.l.b16 %v3952
        %v4433 = vunpack.c.h.b16 %v3952
        %v4434 = vunpack.c.l.b16 %v3953
        %v4435 = vunpack.c.h.b16 %v3953
        %v4436 = vunpack.c.l.b16 %v3954
        %v4437 = vunpack.c.l.b16 %v3955
        %v4438 = vunpack.c.h.b16 %v3955
        %v4439 = vunpack.c.l.b16 %v3956
        %v4440 = vunpack.c.h.b16 %v3956
        %v4441 = vunpack.c.l.b16 %v3957
        %v4442 = vunpack.c.h.b16 %v3957
        %v4443 = vunpack.c.l.b16 %v3958
        %v4444 = vunpack.c.l.b16 %v3959
        %v4445 = vunpack.c.h.b16 %v3959
        %v4446 = vunpack.c.l.b16 %v3960
        %v4447 = vunpack.c.h.b16 %v3960
        %v4448 = vunpack.c.l.b16 %v3961
        %v4449 = vunpack.c.h.b16 %v3961
        %v4450 = vunpack.c.l.b16 %v3962
        %v4451 = vunpack.c.l.b16 %v3963
        %v4452 = vunpack.c.h.b16 %v3963
        %v4453 = vunpack.c.l.b16 %v3964
        %v4454 = vunpack.c.h.b16 %v3964
        %v4455 = vunpack.c.l.b16 %v3965
        %v4456 = vunpack.c.h.b16 %v3965
        %v4457 = vunpack.c.l.b16 %v3966
        %v4458 = vunpack.c.l.b16 %v3967
        %v4459 = vunpack.c.h.b16 %v3967
        %v4460 = vunpack.c.l.b16 %v3968
        %v4461 = vunpack.c.h.b16 %v3968
        %v4462 = vunpack.c.l.b16 %v3969
        %v4463 = vunpack.c.h.b16 %v3969
        %v4464 = vunpack.c.l.b16 %v3970
        %v4465 = vunpack.c.l.b16 %v3971
        %v4466 = vunpack.c.h.b16 %v3971
        %v4467 = vunpack.c.l.b16 %v3972
        %v4468 = vunpack.c.h.b16 %v3972
        %v4469 = vunpack.c.l.b16 %v3973
        %v4470 = vunpack.c.h.b16 %v3973
        %v4471 = vunpack.c.l.b16 %v3974
        %v4472 = vunpack.c.l.b16 %v3975
        %v4473 = vunpack.c.h.b16 %v3975
        %v4474 = vunpack.c.l.b16 %v3976
        %v4475 = vunpack.c.h.b16 %v3976
        %v4476 = vunpack.c.l.b16 %v3977
        %v4477 = vunpack.c.h.b16 %v3977
        %v4478 = vunpack.c.l.b16 %v3978
        %v4479 = vunpack.c.l.b16 %v3979
        %v4480 = vunpack.c.h.b16 %v3979
        %v4481 = vunpack.c.l.b16 %v3980
        %v4482 = vunpack.c.h.b16 %v3980
        %v4483 = vunpack.c.l.b16 %v3981
        %v4484 = vunpack.c.h.b16 %v3981
        %v4485 = vunpack.c.l.b16 %v3982
        %v4486 = vunpack.c.l.b16 %v3983
        %v4487 = vunpack.c.h.b16 %v3983
        %v4488 = vunpack.c.l.b16 %v3984
        %v4489 = vunpack.c.h.b16 %v3984
        %v4490 = vunpack.c.l.b16 %v3985
        %v4491 = vunpack.c.h.b16 %v3985
        %v4492 = vunpack.c.l.b16 %v3986
        %v4493 = vunpack.c.l.b16 %v3987
        %v4494 = vunpack.c.h.b16 %v3987
        %v4495 = vunpack.c.l.b16 %v3988
        %v4496 = vunpack.c.h.b16 %v3988
        %v4497 = vunpack.c.l.b16 %v3989
        %v4498 = vunpack.c.h.b16 %v3989
        %v4499 = vunpack.c.l.b16 %v3990
        %v4500 = vunpack.c.l.b16 %v3991
        %v4501 = vunpack.c.h.b16 %v3991
        %v4502 = vunpack.c.l.b16 %v3992
        %v4503 = vunpack.c.h.b16 %v3992
        %v4504 = vunpack.c.l.b16 %v3993
        %v4505 = vunpack.c.h.b16 %v3993
        %v4506 = vunpack.c.l.b16 %v3994
        %v4507 = vunpack.c.l.b16 %v3995
        %v4508 = vunpack.c.h.b16 %v3995
        %v4509 = vunpack.c.l.b16 %v3996
        %v4510 = vunpack.c.h.b16 %v3996
        %v4511 = vunpack.c.l.b16 %v3997
        %v4512 = vunpack.c.h.b16 %v3997
        %v4513 = vunpack.c.l.b16 %v3998
        %v4514 = vunpack.c.l.b16 %v3999
        %v4515 = vunpack.c.h.b16 %v3999
        %v4516 = vunpack.c.l.b16 %v4000
        %v4517 = vunpack.c.h.b16 %v4000
        %v4518 = vunpack.c.l.b16 %v4001
        %v4519 = vunpack.c.h.b16 %v4001
        %v4520 = vunpack.c.l.b16 %v4002
        %v4521 = vunpack.c.l.b16 %v4003
        %v4522 = vunpack.c.h.b16 %v4003
        %v4523 = vunpack.c.l.b16 %v4004
        %v4524 = vunpack.c.h.b16 %v4004
        %v4525 = vunpack.c.l.b16 %v4005
        %v4526 = vunpack.c.h.b16 %v4005
        %v4527 = vunpack.c.l.b16 %v4006
        %v4528 = vunpack.c.l.b16 %v4007
        %v4529 = vunpack.c.h.b16 %v4007
        %v4530 = vunpack.c.l.b16 %v4008
        %v4531 = vunpack.c.h.b16 %v4008
        %v4532 = vunpack.c.l.b16 %v4009
        %v4533 = vunpack.c.h.b16 %v4009
        %v4534 = vunpack.c.l.b16 %v4010
        %v4535 = vunpack.c.l.b16 %v4011
        %v4536 = vunpack.c.h.b16 %v4011
        %v4537 = vunpack.c.l.b16 %v4012
        %v4538 = vunpack.c.h.b16 %v4012
        %v4539 = vunpack.c.l.b16 %v4013
        %v4540 = vunpack.c.h.b16 %v4013
        %v4541 = vunpack.c.l.b16 %v4014
        %v4542 = vunpack.c.l.b16 %v4015
        %v4543 = vunpack.c.h.b16 %v4015
        %v4544 = vunpack.c.l.b16 %v4016
        %v4545 = vunpack.c.h.b16 %v4016
        %v4546 = vunpack.c.l.b16 %v4017
        %v4547 = vunpack.c.h.b16 %v4017
        %v4548 = vunpack.c.l.b16 %v4018
        %v4549 = vunpack.c.l.b16 %v4019
        %v4550 = vunpack.c.h.b16 %v4019
        %v4551 = vunpack.c.l.b16 %v4020
        %v4552 = vunpack.c.h.b16 %v4020
        %v4553 = vunpack.c.l.b16 %v4021
        %v4554 = vunpack.c.h.b16 %v4021
        %v4555 = vunpack.c.l.b16 %v4022
        %v4556 = vunpack.c.l.b16 %v4023
        %v4557 = vunpack.c.h.b16 %v4023
        %v4558 = vunpack.c.l.b16 %v4024
        %v4559 = vunpack.c.h.b16 %v4024
        %v4560 = vunpack.c.l.b16 %v4025
        %v4561 = vunpack.c.h.b16 %v4025
        %v4562 = vunpack.c.l.b16 %v4026
        %v4563 = vunpack.c.l.b16 %v4027
        %v4564 = vunpack.c.h.b16 %v4027
        %v4565 = vunpack.c.l.b16 %v4028
        %v4566 = vunpack.c.h.b16 %v4028
        %v4567 = vunpack.c.l.b16 %v4029
        %v4568 = vunpack.c.h.b16 %v4029
        %v4569 = vunpack.c.l.b16 %v4030
        %v4570 = vunpack.c.l.b16 %v4031
        %v4571 = vunpack.c.h.b16 %v4031
        %v4572 = vunpack.c.l.b16 %v4032
        %v4573 = vunpack.c.h.b16 %v4032
        %v4574 = vunpack.c.l.b16 %v4033
        %v4575 = vunpack.c.h.b16 %v4033
        %v4576 = vunpack.c.l.b16 %v4034
        %v4577 = vunpack.c.l.b16 %v4035
        %v4578 = vunpack.c.h.b16 %v4035
        %v4579 = vunpack.c.l.b16 %v4036
        %v4580 = vunpack.c.h.b16 %v4036
        %v4581 = vunpack.c.l.b16 %v4037
        %v4582 = vunpack.c.h.b16 %v4037
        %v4583 = vunpack.c.l.b16 %v4038
        %v4584 = vunpack.c.l.b16 %v4039
        %v4585 = vunpack.c.h.b16 %v4039
        %v4586 = vunpack.c.l.b16 %v4040
        %v4587 = vunpack.c.h.b16 %v4040
        %v4588 = vunpack.c.l.b16 %v4041
        %v4589 = vunpack.c.h.b16 %v4041
        %v4590 = vunpack.c.l.b16 %v4042
        %v4591 = vunpack.c.l.b16 %v4043
        %v4592 = vunpack.c.h.b16 %v4043
        %v4593 = vunpack.c.l.b16 %v4044
        %v4594 = vunpack.c.h.b16 %v4044
        %v4595 = vunpack.c.l.b16 %v4045
        %v4596 = vunpack.c.h.b16 %v4045
        %v4597 = vunpack.c.l.b16 %v4046
        %v4598 = vunpack.c.l.b16 %v4047
        %v4599 = vunpack.c.h.b16 %v4047
        %v4600 = vunpack.c.l.b16 %v4048
        %v4601 = vunpack.c.h.b16 %v4048
        %v4602 = vunpack.c.l.b16 %v4049
        %v4603 = vunpack.c.h.b16 %v4049
        %v4604 = vunpack.c.l.b16 %v4050
        %v4605 = vunpack.c.l.b16 %v4051
        %v4606 = vunpack.c.h.b16 %v4051
        %v4607 = vunpack.c.l.b16 %v4052
        %v4608 = vunpack.c.h.b16 %v4052
        %v4609 = vunpack.c.l.b16 %v4053
        %v4610 = vunpack.c.h.b16 %v4053
        %v4611 = vunpack.c.l.b16 %v4054
        %v4612 = vunpack.c.l.b16 %v4055
        %v4613 = vunpack.c.h.b16 %v4055
        %v4614 = vunpack.c.l.b16 %v4056
        %v4615 = vunpack.c.h.b16 %v4056
        %v4616 = vunpack.c.l.b16 %v4057
        %v4617 = vunpack.c.h.b16 %v4057
        %v4618 = vunpack.c.l.b16 %v4058
        %v4619 = vunpack.c.l.b16 %v4059
        %v4620 = vunpack.c.h.b16 %v4059
        %v4621 = vunpack.c.l.b16 %v4060
        %v4622 = vunpack.c.h.b16 %v4060
        %v4623 = vunpack.c.l.b16 %v4061
        %v4624 = vunpack.c.h.b16 %v4061
        %v4625 = vunpack.c.l.b16 %v4062
        %v4626 = vunpack.c.l.b16 %v4063
        %v4627 = vunpack.c.h.b16 %v4063
        %v4628 = vunpack.c.l.b16 %v4064
        %v4629 = vunpack.c.h.b16 %v4064
        %v4630 = vunpack.c.l.b16 %v4065
        %v4631 = vunpack.c.h.b16 %v4065
        %v4632 = vunpack.c.l.b16 %v4066
        %v4633 = vunpack.c.l.b16 %v4067
        %v4634 = vunpack.c.h.b16 %v4067
        %v4635 = vunpack.c.l.b16 %v4068
        %v4636 = vunpack.c.h.b16 %v4068
        %v4637 = vunpack.c.l.b16 %v4069
        %v4638 = vunpack.c.h.b16 %v4069
        %v4639 = vunpack.c.l.b16 %v4070
        %v4640 = vunpack.c.l.b16 %v4071
        %v4641 = vunpack.c.h.b16 %v4071
        %v4642 = vunpack.c.l.b16 %v4072
        %v4643 = vunpack.c.h.b16 %v4072
        %v4644 = vunpack.c.l.b16 %v4073
        %v4645 = vunpack.c.h.b16 %v4073
        %v4646 = vunpack.c.l.b16 %v4074
        %v4647 = vunpack.c.l.b16 %v4075
        %v4648 = vunpack.c.h.b16 %v4075
        %v4649 = vunpack.c.l.b16 %v4076
        %v4650 = vunpack.c.h.b16 %v4076
        %v4651 = vunpack.c.l.b16 %v4077
        %v4652 = vunpack.c.h.b16 %v4077
        %v4653 = vunpack.c.l.b16 %v4078
        %v4654 = vunpack.c.l.b16 %v4079
        %v4655 = vunpack.c.h.b16 %v4079
        %v4656 = vunpack.c.l.b16 %v4080
        %v4657 = vunpack.c.h.b16 %v4080
        %v4658 = vunpack.c.l.b16 %v4081
        %v4659 = vunpack.c.h.b16 %v4081
        %v4660 = vunpack.c.l.b16 %v4082
        %v4661 = vunpack.c.l.b16 %v4083
        %v4662 = vunpack.c.h.b16 %v4083
        %v4663 = vunpack.c.l.b16 %v4084
        %v4664 = vunpack.c.h.b16 %v4084
        %v4665 = vunpack.c.l.b16 %v4085
        %v4666 = vunpack.c.h.b16 %v4085
        %v4667 = vunpack.c.l.b16 %v4086
        %v4668 = vunpack.c.l.b16 %v4087
        %v4669 = vunpack.c.h.b16 %v4087
        %v4670 = vunpack.c.l.b16 %v4088
        %v4671 = vunpack.c.h.b16 %v4088
        %v4672 = vunpack.c.l.b16 %v4089
        %v4673 = vunpack.c.h.b16 %v4089
        %v4674 = vunpack.c.l.b16 %v4090
        %v4675 = vunpack.c.l.b16 %v4091
        %v4676 = vunpack.c.h.b16 %v4091
        %v4677 = vunpack.c.l.b16 %v4092
        %v4678 = vunpack.c.h.b16 %v4092
        %v4679 = vunpack.c.l.b16 %v4093
        %v4680 = vunpack.c.h.b16 %v4093
        %v4681 = vunpack.c.l.b16 %v4094
        %v4682 = vpack.c.b16 %v4339, %v4332
        %v4683 = vpack.c.b16 %v4340, %v4333
        %v4684 = vpack.c.b16 %v4341, %v4334
        %v4685 = vpack.c.b16 %v4342, %v4335
        %v4686 = vpack.c.b16 %v4343, %v4336
        %v4687 = vpack.c.b16 %v4344, %v4337
        %v4688 = vpack.c.b16 %v4345, %v4338
        %v4689 = vpack.c.b16 %v4353, %v4346
        %v4690 = vpack.c.b16 %v4354, %v4347
        %v4691 = vpack.c.b16 %v4355, %v4348
        %v4692 = vpack.c.b16 %v4356, %v4349
        %v4693 = vpack.c.b16 %v4357, %v4350
        %v4694 = vpack.c.b16 %v4358, %v4351
        %v4695 = vpack.c.b16 %v4359, %v4352
        %v4696 = vpack.c.b16 %v4367, %v4360
        %v4697 = vpack.c.b16 %v4368, %v4361
        %v4698 = vpack.c.b16 %v4369, %v4362
        %v4699 = vpack.c.b16 %v4370, %v4363
        %v4700 = vpack.c.b16 %v4371, %v4364
        %v4701 = vpack.c.b16 %v4372, %v4365
        %v4702 = vpack.c.b16 %v4373, %v4366
        %v4703 = vpack.c.b16 %v4381, %v4374
        %v4704 = vpack.c.b16 %v4382, %v4375
        %v4705 = vpack.c.b16 %v4383, %v4376
        %v4706 = vpack.c.b16 %v4384, %v4377
        %v4707 = vpack.c.b16 %v4385, %v4378
        %v4708 = vpack.c.b16 %v4386, %v4379
        %v4709 = vpack.c.b16 %v4387, %v4380
        %v4710 = vpack.c.b16 %v4395, %v4388
        %v4711 = vpack.c.b16 %v4396, %v4389
        %v4712 = vpack.c.b16 %v4397, %v4390
        %v4713 = vpack.c.b16 %v4398, %v4391
        %v4714 = vpack.c.b16 %v4399, %v4392
        %v4715 = vpack.c.b16 %v4400, %v4393
        %v4716 = vpack.c.b16 %v4401, %v4394
        %v4717 = vpack.c.b16 %v4409, %v4402
        %v4718 = vpack.c.b16 %v4410, %v4403
        %v4719 = vpack.c.b16 %v4411, %v4404
        %v4720 = vpack.c.b16 %v4412, %v4405
        %v4721 = vpack.c.b16 %v4413, %v4406
        %v4722 = vpack.c.b16 %v4414, %v4407
        %v4723 = vpack.c.b16 %v4415, %v4408
        %v4724 = vpack.c.b16 %v4423, %v4416
        %v4725 = vpack.c.b16 %v4424, %v4417
        %v4726 = vpack.c.b16 %v4425, %v4418
        %v4727 = vpack.c.b16 %v4426, %v4419
        %v4728 = vpack.c.b16 %v4427, %v4420
        %v4729 = vpack.c.b16 %v4428, %v4421
        %v4730 = vpack.c.b16 %v4429, %v4422
        %v4731 = vpack.c.b16 %v4437, %v4430
        %v4732 = vpack.c.b16 %v4438, %v4431
        %v4733 = vpack.c.b16 %v4439, %v4432
        %v4734 = vpack.c.b16 %v4440, %v4433
        %v4735 = vpack.c.b16 %v4441, %v4434
        %v4736 = vpack.c.b16 %v4442, %v4435
        %v4737 = vpack.c.b16 %v4443, %v4436
        %v4738 = vpack.c.b16 %v4451, %v4444
        %v4739 = vpack.c.b16 %v4452, %v4445
        %v4740 = vpack.c.b16 %v4453, %v4446
        %v4741 = vpack.c.b16 %v4454, %v4447
        %v4742 = vpack.c.b16 %v4455, %v4448
        %v4743 = vpack.c.b16 %v4456, %v4449
        %v4744 = vpack.c.b16 %v4457, %v4450
        %v4745 = vpack.c.b16 %v4465, %v4458
        %v4746 = vpack.c.b16 %v4466, %v4459
        %v4747 = vpack.c.b16 %v4467, %v4460
        %v4748 = vpack.c.b16 %v4468, %v4461
        %v4749 = vpack.c.b16 %v4469, %v4462
        %v4750 = vpack.c.b16 %v4470, %v4463
        %v4751 = vpack.c.b16 %v4471, %v4464
        %v4752 = vpack.c.b16 %v4479, %v4472
        %v4753 = vpack.c.b16 %v4480, %v4473
        %v4754 = vpack.c.b16 %v4481, %v4474
        %v4755 = vpack.c.b16 %v4482, %v4475
        %v4756 = vpack.c.b16 %v4483, %v4476
        %v4757 = vpack.c.b16 %v4484, %v4477
        %v4758 = vpack.c.b16 %v4485, %v4478
        %v4759 = vpack.c.b16 %v4493, %v4486
        %v4760 = vpack.c.b16 %v4494, %v4487
        %v4761 = vpack.c.b16 %v4495, %v4488
        %v4762 = vpack.c.b16 %v4496, %v4489
        %v4763 = vpack.c.b16 %v4497, %v4490
        %v4764 = vpack.c.b16 %v4498, %v4491
        %v4765 = vpack.c.b16 %v4499, %v4492
        %v4766 = vpack.c.b16 %v4507, %v4500
        %v4767 = vpack.c.b16 %v4508, %v4501
        %v4768 = vpack.c.b16 %v4509, %v4502
        %v4769 = vpack.c.b16 %v4510, %v4503
        %v4770 = vpack.c.b16 %v4511, %v4504
        %v4771 = vpack.c.b16 %v4512, %v4505
        %v4772 = vpack.c.b16 %v4513, %v4506
        %v4773 = vpack.c.b16 %v4521, %v4514
        %v4774 = vpack.c.b16 %v4522, %v4515
        %v4775 = vpack.c.b16 %v4523, %v4516
        %v4776 = vpack.c.b16 %v4524, %v4517
        %v4777 = vpack.c.b16 %v4525, %v4518
        %v4778 = vpack.c.b16 %v4526, %v4519
        %v4779 = vpack.c.b16 %v4527, %v4520
        %v4780 = vpack.c.b16 %v4535, %v4528
        %v4781 = vpack.c.b16 %v4536, %v4529
        %v4782 = vpack.c.b16 %v4537, %v4530
        %v4783 = vpack.c.b16 %v4538, %v4531
        %v4784 = vpack.c.b16 %v4539, %v4532
        %v4785 = vpack.c.b16 %v4540, %v4533
        %v4786 = vpack.c.b16 %v4541, %v4534
        %v4787 = vpack.c.b16 %v4549, %v4542
        %v4788 = vpack.c.b16 %v4550, %v4543
        %v4789 = vpack.c.b16 %v4551, %v4544
        %v4790 = vpack.c.b16 %v4552, %v4545
        %v4791 = vpack.c.b16 %v4553, %v4546
        %v4792 = vpack.c.b16 %v4554, %v4547
        %v4793 = vpack.c.b16 %v4555, %v4548
        %v4794 = vpack.c.b16 %v4563, %v4556
        %v4795 = vpack.c.b16 %v4564, %v4557
        %v4796 = vpack.c.b16 %v4565, %v4558
        %v4797 = vpack.c.b16 %v4566, %v4559
        %v4798 = vpack.c.b16 %v4567, %v4560
        %v4799 = vpack.c.b16 %v4568, %v4561
        %v4800 = vpack.c.b16 %v4569, %v4562
        %v4801 = vpack.c.b16 %v4577, %v4570
        %v4802 = vpack.c.b16 %v4578, %v4571
        %v4803 = vpack.c.b16 %v4579, %v4572
        %v4804 = vpack.c.b16 %v4580, %v4573
        %v4805 = vpack.c.b16 %v4581, %v4574
        %v4806 = vpack.c.b16 %v4582, %v4575
        %v4807 = vpack.c.b16 %v4583, %v4576
        %v4808 = vpack.c.b16 %v4591, %v4584
        %v4809 = vpack.c.b16 %v4592, %v4585
        %v4810 = vpack.c.b16 %v4593, %v4586
        %v4811 = vpack.c.b16 %v4594, %v4587
        %v4812 = vpack.c.b16 %v4595, %v4588
        %v4813 = vpack.c.b16 %v4596, %v4589
        %v4814 = vpack.c.b16 %v4597, %v4590
        %v4815 = vpack.c.b16 %v4605, %v4598
        %v4816 = vpack.c.b16 %v4606, %v4599
        %v4817 = vpack.c.b16 %v4607, %v4600
        %v4818 = vpack.c.b16 %v4608, %v4601
        %v4819 = vpack.c.b16 %v4609, %v4602
        %v4820 = vpack.c.b16 %v4610, %v4603
        %v4821 = vpack.c.b16 %v4611, %v4604
        %v4822 = vpack.c.b16 %v4619, %v4612
        %v4823 = vpack.c.b16 %v4620, %v4613
        %v4824 = vpack.c.b16 %v4621, %v4614
        %v4825 = vpack.c.b16 %v4622, %v4615
        %v4826 = vpack.c.b16 %v4623, %v4616
        %v4827 = vpack.c.b16 %v4624, %v4617
        %v4828 = vpack.c.b16 %v4625, %v4618
        %v4829 = vpack.c.b16 %v4633, %v4626
        %v4830 = vpack.c.b16 %v4634, %v4627
        %v4831 = vpack.c.b16 %v4635, %v4628
        %v4832 = vpack.c.b16 %v4636, %v4629
        %v4833 = vpack.c.b16 %v4637, %v4630
        %v4834 = vpack.c.b16 %v4638, %v4631
        %v4835 = vpack.c.b16 %v4639, %v4632
        %v4836 = vpack.c.b16 %v4647, %v4640
        %v4837 = vpack.c.b16 %v4648, %v4641
        %v4838 = vpack.c.b16 %v4649, %v4642
        %v4839 = vpack.c.b16 %v4650, %v4643
        %v4840 = vpack.c.b16 %v4651, %v4644
        %v4841 = vpack.c.b16 %v4652, %v4645
        %v4842 = vpack.c.b16 %v4653, %v4646
        %v4843 = vpack.c.b16 %v4661, %v4654
        %v4844 = vpack.c.b16 %v4662, %v4655
        %v4845 = vpack.c.b16 %v4663, %v4656
        %v4846 = vpack.c.b16 %v4664, %v4657
        %v4847 = vpack.c.b16 %v4665, %v4658
        %v4848 = vpack.c.b16 %v4666, %v4659
        %v4849 = vpack.c.b16 %v4667, %v4660
        %v4850 = vpack.c.b16 %v4675, %v4668
        %v4851 = vpack.c.b16 %v4676, %v4669
        %v4852 = vpack.c.b16 %v4677, %v4670
        %v4853 = vpack.c.b16 %v4678, %v4671
        %v4854 = vpack.c.b16 %v4679, %v4672
        %v4855 = vpack.c.b16 %v4680, %v4673
        %v4856 = vpack.c.b16 %v4681, %v4674
        %v5033 = vsel %vm3147, %v3866, 0
        %v5036 = vsel %vm3147, %v3870, 0
        %v5039 = vsel %vm3147, %v3874, 0
        %v5042 = vsel %vm3147, %v3878, 0
        %v5045 = vsel %vm3147, %v3882, 0
        %v5048 = vsel %vm3147, %v3886, 0
        %v5051 = vsel %vm3147, %v3890, 0
        %v5054 = vsel %vm3147, %v3894, 0
        %5056 = vmatprep.subr.bf16.mxu0 %v4683
        %5057 = vmatpush1.bf16.msra.mxu0 %v4682
        %5058 = vmatprep.subr.bf16.mxu0 %v4690
        %5059 = vmatpush1.bf16.msra.mxu0 %v4689
        %5060 = vmatprep.subr.bf16.mxu0 %v4697
        %5061 = vmatpush1.bf16.msra.mxu0 %v4696
        %5062 = vmatprep.subr.bf16.mxu0 %v4704
        %5063 = vmatpush1.bf16.msra.mxu0 %v4703
        %5064 = vmatprep.subr.bf16.mxu0 %v4711
        %5065 = vmatpush1.bf16.msra.mxu0 %v4710
        %5066 = vmatprep.subr.bf16.mxu0 %v4718
        %5067 = vmatpush1.bf16.msra.mxu0 %v4717
        %5068 = vmatprep.subr.bf16.mxu0 %v4725
        %5069 = vmatpush1.bf16.msra.mxu0 %v4724
        %5070 = vmatprep.subr.bf16.mxu0 %v4732
        %5071 = vmatpush1.bf16.msra.mxu0 %v4731
        %5072 = vmatprep.subr.bf16.mxu0 %v4739
        %5073 = vmatpush1.bf16.msra.mxu0 %v4738
        %5074 = vmatprep.subr.bf16.mxu0 %v4746
        %5075 = vmatpush1.bf16.msra.mxu0 %v4745
        %5076 = vmatprep.subr.bf16.mxu0 %v4753
        %5077 = vmatpush1.bf16.msra.mxu0 %v4752
        %5078 = vmatprep.subr.bf16.mxu0 %v4760
        %5079 = vmatpush1.bf16.msra.mxu0 %v4759
        %5080 = vmatprep.subr.bf16.mxu0 %v4767
        %5081 = vmatpush1.bf16.msra.mxu0 %v4766
        %5082 = vmatprep.subr.bf16.mxu0 %v4774
        %5083 = vmatpush1.bf16.msra.mxu0 %v4773
        %5084 = vmatprep.subr.bf16.mxu0 %v4781
        %5085 = vmatpush1.bf16.msra.mxu0 %v4780
        %5086 = vmatprep.subr.bf16.mxu0 %v4788
        %5087 = vmatpush1.bf16.msra.mxu0 %v4787
        %5088 = vmatprep.mubr.bf16.mxu0 %v3864
        %5089 = vmatmul.mubr.bf16.gmra.mrb[0].mxu0 %v3863
        %v5090 = vpop.f32.mrb[0].mxu0
        %v5091 = vadd.f32 %v4100, %v5090
        %v5092 = vpop.f32.mrb[0].mxu0
        %v5093 = vadd.f32 %v4104, %v5092
        %v5094 = vpop.f32.mrb[0].mxu0
        %v5095 = vadd.f32 %v4100, %v5094
        %v5096 = vpop.f32.mrb[0].mxu0
        %v5097 = vadd.f32 %v4104, %v5096
        %5098 = vmatprep.mubr.bf16.mxu0 %v3868
        %5099 = vmatmul.mubr.bf16.gmra.mrb[0].mxu0 %v3867
        %v5100 = vpop.f32.mrb[0].mxu0
        %v5101 = vadd.f32 %v4100, %v5100
        %v5102 = vpop.f32.mrb[0].mxu0
        %v5103 = vadd.f32 %v4104, %v5102
        %v5104 = vpop.f32.mrb[0].mxu0
        %v5105 = vadd.f32 %v4100, %v5104
        %v5106 = vpop.f32.mrb[0].mxu0
        %v5107 = vadd.f32 %v4104, %v5106
        %5108 = vmatprep.mubr.bf16.mxu0 %v3872
        %5109 = vmatmul.mubr.bf16.gmra.mrb[0].mxu0 %v3871
        %v5110 = vpop.f32.mrb[0].mxu0
        %v5111 = vadd.f32 %v4100, %v5110
        %v5112 = vpop.f32.mrb[0].mxu0
        %v5113 = vadd.f32 %v4104, %v5112
        %v5114 = vpop.f32.mrb[0].mxu0
        %v5115 = vadd.f32 %v4100, %v5114
        %v5116 = vpop.f32.mrb[0].mxu0
        %v5117 = vadd.f32 %v4104, %v5116
        %5118 = vmatprep.mubr.bf16.mxu0 %v3876
        %5119 = vmatmul.mubr.bf16.gmra.mrb[0].mxu0 %v3875
        %v5120 = vpop.f32.mrb[0].mxu0
        %v5121 = vadd.f32 %v4100, %v5120
        %v5122 = vpop.f32.mrb[0].mxu0
        %v5123 = vadd.f32 %v4104, %v5122
        %v5124 = vpop.f32.mrb[0].mxu0
        %v5125 = vadd.f32 %v4100, %v5124
        %v5126 = vpop.f32.mrb[0].mxu0
        %v5127 = vadd.f32 %v4104, %v5126
        %5128 = vmatprep.mubr.bf16.mxu0 %v3880
        %5129 = vmatmul.mubr.bf16.gmra.mrb[0].mxu0 %v3879
        %v5130 = vpop.f32.mrb[0].mxu0
        %v5131 = vadd.f32 %v4100, %v5130
        %v5132 = vpop.f32.mrb[0].mxu0
        %v5133 = vadd.f32 %v4104, %v5132
        %v5134 = vpop.f32.mrb[0].mxu0
        %v5135 = vadd.f32 %v4100, %v5134
        %v5136 = vpop.f32.mrb[0].mxu0
        %v5137 = vadd.f32 %v4104, %v5136
        %5138 = vmatprep.mubr.bf16.mxu0 %v3884
        %5139 = vmatmul.mubr.bf16.gmra.mrb[0].mxu0 %v3883
        %v5140 = vpop.f32.mrb[0].mxu0
        %v5141 = vadd.f32 %v4100, %v5140
        %v5142 = vpop.f32.mrb[0].mxu0
        %v5143 = vadd.f32 %v4104, %v5142
        %v5144 = vpop.f32.mrb[0].mxu0
        %v5145 = vadd.f32 %v4100, %v5144
        %v5146 = vpop.f32.mrb[0].mxu0
        %v5147 = vadd.f32 %v4104, %v5146
        %5148 = vmatprep.mubr.bf16.mxu0 %v3888
        %5149 = vmatmul.mubr.bf16.gmra.mrb[0].mxu0 %v3887
        %v5150 = vpop.f32.mrb[0].mxu0
        %v5151 = vadd.f32 %v4100, %v5150
        %v5152 = vpop.f32.mrb[0].mxu0
        %v5153 = vadd.f32 %v4104, %v5152
        %v5154 = vpop.f32.mrb[0].mxu0
        %v5155 = vadd.f32 %v4100, %v5154
        %v5156 = vpop.f32.mrb[0].mxu0
        %v5157 = vadd.f32 %v4104, %v5156
        %5158 = vmatprep.mubr.bf16.mxu0 %v3892
        %5159 = vmatmul.mubr.bf16.gmra.mrb[0].mxu0 %v3891
        %v5160 = vpop.f32.mrb[0].mxu0
        %v5161 = vadd.f32 %v4100, %v5160
        %v5162 = vpop.f32.mrb[0].mxu0
        %v5163 = vadd.f32 %v4104, %v5162
        %v5164 = vpop.f32.mrb[0].mxu0
        %v5165 = vadd.f32 %v4100, %v5164
        %v5166 = vpop.f32.mrb[0].mxu0
        %v5167 = vadd.f32 %v4104, %v5166
        %5168 = vdwg.mxu0
        %5169 = vmatprep.subr.bf16.mxu0 %v4795
        %5170 = vmatpush1.bf16.msra.mxu0 %v4794
        %5171 = vmatprep.subr.bf16.mxu0 %v4802
        %5172 = vmatpush1.bf16.msra.mxu0 %v4801
        %5173 = vmatprep.subr.bf16.mxu0 %v4809
        %5174 = vmatpush1.bf16.msra.mxu0 %v4808
        %5175 = vmatprep.subr.bf16.mxu0 %v4816
        %5176 = vmatpush1.bf16.msra.mxu0 %v4815
        %5177 = vmatprep.subr.bf16.mxu0 %v4823
        %5178 = vmatpush1.bf16.msra.mxu0 %v4822
        %5179 = vmatprep.subr.bf16.mxu0 %v4830
        %5180 = vmatpush1.bf16.msra.mxu0 %v4829
        %5181 = vmatprep.subr.bf16.mxu0 %v4837
        %5182 = vmatpush1.bf16.msra.mxu0 %v4836
        %5183 = vmatprep.subr.bf16.mxu0 %v4844
        %5184 = vmatpush1.bf16.msra.mxu0 %v4843
        %5185 = vmatprep.subr.bf16.mxu0 %v4851
        %5186 = vmatpush1.bf16.msra.mxu0 %v4850
        %5187 = vmatprep.subr.bf16.mxu0 0
        %5188 = vmatpush1.bf16.msra.mxu0 0
        %5189 = vmatprep.subr.bf16.mxu0 0
        %5190 = vmatpush1.bf16.msra.mxu0 0
        %5191 = vmatprep.subr.bf16.mxu0 0
        %5192 = vmatpush1.bf16.msra.mxu0 0
        %5193 = vmatprep.subr.bf16.mxu0 0
        %5194 = vmatpush1.bf16.msra.mxu0 0
        %5195 = vmatprep.subr.bf16.mxu0 0
        %5196 = vmatpush1.bf16.msra.mxu0 0
        %5197 = vmatprep.subr.bf16.mxu0 0
        %5198 = vmatpush1.bf16.msra.mxu0 0
        %5199 = vmatprep.subr.bf16.mxu0 0
        %5200 = vmatpush1.bf16.msra.mxu0 0
        %5201 = vmatprep.mubr.bf16.mxu0 %v5033
        %5202 = vmatmul.mubr.bf16.gmra.mrb[0].mxu0 %v3865
        %v5203 = vpop.f32.mrb[0].mxu0
        %v5204 = vadd.f32 %v5091, %v5203
        %v5205 = vpop.f32.mrb[0].mxu0
        %v5206 = vadd.f32 %v5093, %v5205
        %v5207 = vpop.f32.mrb[0].mxu0
        %v5208 = vadd.f32 %v5095, %v5207
        %v5209 = vpop.f32.mrb[0].mxu0
        %v5210 = vadd.f32 %v5097, %v5209
        %5211 = vmatprep.mubr.bf16.mxu0 %v5036
        %5212 = vmatmul.mubr.bf16.gmra.mrb[0].mxu0 %v3869
        %v5213 = vpop.f32.mrb[0].mxu0
        %v5214 = vadd.f32 %v5101, %v5213
        %v5215 = vpop.f32.mrb[0].mxu0
        %v5216 = vadd.f32 %v5103, %v5215
        %v5217 = vpop.f32.mrb[0].mxu0
        %v5218 = vadd.f32 %v5105, %v5217
        %v5219 = vpop.f32.mrb[0].mxu0
        %v5220 = vadd.f32 %v5107, %v5219
        %5221 = vmatprep.mubr.bf16.mxu0 %v5039
        %5222 = vmatmul.mubr.bf16.gmra.mrb[0].mxu0 %v3873
        %v5223 = vpop.f32.mrb[0].mxu0
        %v5224 = vadd.f32 %v5111, %v5223
        %v5225 = vpop.f32.mrb[0].mxu0
        %v5226 = vadd.f32 %v5113, %v5225
        %v5227 = vpop.f32.mrb[0].mxu0
        %v5228 = vadd.f32 %v5115, %v5227
        %v5229 = vpop.f32.mrb[0].mxu0
        %v5230 = vadd.f32 %v5117, %v5229
        %5231 = vmatprep.mubr.bf16.mxu0 %v5042
        %5232 = vmatmul.mubr.bf16.gmra.mrb[0].mxu0 %v3877
        %v5233 = vpop.f32.mrb[0].mxu0
        %v5234 = vadd.f32 %v5121, %v5233
        %v5235 = vpop.f32.mrb[0].mxu0
        %v5236 = vadd.f32 %v5123, %v5235
        %v5237 = vpop.f32.mrb[0].mxu0
        %v5238 = vadd.f32 %v5125, %v5237
        %v5239 = vpop.f32.mrb[0].mxu0
        %v5240 = vadd.f32 %v5127, %v5239
        %5241 = vmatprep.mubr.bf16.mxu0 %v5045
        %5242 = vmatmul.mubr.bf16.gmra.mrb[0].mxu0 %v3881
        %v5243 = vpop.f32.mrb[0].mxu0
        %v5244 = vadd.f32 %v5131, %v5243
        %v5245 = vpop.f32.mrb[0].mxu0
        %v5246 = vadd.f32 %v5133, %v5245
        %v5247 = vpop.f32.mrb[0].mxu0
        %v5248 = vadd.f32 %v5135, %v5247
        %v5249 = vpop.f32.mrb[0].mxu0
        %v5250 = vadd.f32 %v5137, %v5249
        %5251 = vmatprep.mubr.bf16.mxu0 %v5048
        %5252 = vmatmul.mubr.bf16.gmra.mrb[0].mxu0 %v3885
        %v5253 = vpop.f32.mrb[0].mxu0
        %v5254 = vadd.f32 %v5141, %v5253
        %v5255 = vpop.f32.mrb[0].mxu0
        %v5256 = vadd.f32 %v5143, %v5255
        %v5257 = vpop.f32.mrb[0].mxu0
        %v5258 = vadd.f32 %v5145, %v5257
        %v5259 = vpop.f32.mrb[0].mxu0
        %v5260 = vadd.f32 %v5147, %v5259
        %5261 = vmatprep.mubr.bf16.mxu0 %v5051
        %5262 = vmatmul.mubr.bf16.gmra.mrb[0].mxu0 %v3889
        %v5263 = vpop.f32.mrb[0].mxu0
        %v5264 = vadd.f32 %v5151, %v5263
        %v5265 = vpop.f32.mrb[0].mxu0
        %v5266 = vadd.f32 %v5153, %v5265
        %v5267 = vpop.f32.mrb[0].mxu0
        %v5268 = vadd.f32 %v5155, %v5267
        %v5269 = vpop.f32.mrb[0].mxu0
        %v5270 = vadd.f32 %v5157, %v5269
        %5271 = vmatprep.mubr.bf16.mxu0 %v5054
        %5272 = vmatmul.mubr.bf16.gmra.mrb[0].mxu0 %v3893
        %v5273 = vpop.f32.mrb[0].mxu0
        %v5274 = vadd.f32 %v5161, %v5273
        %v5275 = vpop.f32.mrb[0].mxu0
        %v5276 = vadd.f32 %v5163, %v5275
        %v5277 = vpop.f32.mrb[0].mxu0
        %v5278 = vadd.f32 %v5165, %v5277
        %v5279 = vpop.f32.mrb[0].mxu0
        %v5280 = vadd.f32 %v5167, %v5279
        %5281 = vdwg.mxu0
        %5282 = vmatprep.subr.bf16.mxu0 %v4685
        %5283 = vmatpush1.bf16.msra.mxu0 %v4684
        %5284 = vmatprep.subr.bf16.mxu0 %v4692
        %5285 = vmatpush1.bf16.msra.mxu0 %v4691
        %5286 = vmatprep.subr.bf16.mxu0 %v4699
        %5287 = vmatpush1.bf16.msra.mxu0 %v4698
        %5288 = vmatprep.subr.bf16.mxu0 %v4706
        %5289 = vmatpush1.bf16.msra.mxu0 %v4705
        %5290 = vmatprep.subr.bf16.mxu0 %v4713
        %5291 = vmatpush1.bf16.msra.mxu0 %v4712
        %5292 = vmatprep.subr.bf16.mxu0 %v4720
        %5293 = vmatpush1.bf16.msra.mxu0 %v4719
        %5294 = vmatprep.subr.bf16.mxu0 %v4727
        %5295 = vmatpush1.bf16.msra.mxu0 %v4726
        %5296 = vmatprep.subr.bf16.mxu0 %v4734
        %5297 = vmatpush1.bf16.msra.mxu0 %v4733
        %5298 = vmatprep.subr.bf16.mxu0 %v4741
        %5299 = vmatpush1.bf16.msra.mxu0 %v4740
        %5300 = vmatprep.subr.bf16.mxu0 %v4748
        %5301 = vmatpush1.bf16.msra.mxu0 %v4747
        %5302 = vmatprep.subr.bf16.mxu0 %v4755
        %5303 = vmatpush1.bf16.msra.mxu0 %v4754
        %5304 = vmatprep.subr.bf16.mxu0 %v4762
        %5305 = vmatpush1.bf16.msra.mxu0 %v4761
        %5306 = vmatprep.subr.bf16.mxu0 %v4769
        %5307 = vmatpush1.bf16.msra.mxu0 %v4768
        %5308 = vmatprep.subr.bf16.mxu0 %v4776
        %5309 = vmatpush1.bf16.msra.mxu0 %v4775
        %5310 = vmatprep.subr.bf16.mxu0 %v4783
        %5311 = vmatpush1.bf16.msra.mxu0 %v4782
        %5312 = vmatprep.subr.bf16.mxu0 %v4790
        %5313 = vmatpush1.bf16.msra.mxu0 %v4789
        %5314 = vmatprep.mubr.bf16.mxu0 %v3864
        %5315 = vmatmul.mubr.bf16.gmra.mrb[0].mxu0 %v3863
        %v5316 = vpop.f32.mrb[0].mxu0
        %v5317 = vadd.f32 %v4108, %v5316
        %v5318 = vpop.f32.mrb[0].mxu0
        %v5319 = vadd.f32 %v4112, %v5318
        %v5320 = vpop.f32.mrb[0].mxu0
        %v5321 = vadd.f32 %v4108, %v5320
        %v5322 = vpop.f32.mrb[0].mxu0
        %v5323 = vadd.f32 %v4112, %v5322
        %5324 = vmatprep.mubr.bf16.mxu0 %v3868
        %5325 = vmatmul.mubr.bf16.gmra.mrb[0].mxu0 %v3867
        %v5326 = vpop.f32.mrb[0].mxu0
        %v5327 = vadd.f32 %v4108, %v5326
        %v5328 = vpop.f32.mrb[0].mxu0
        %v5329 = vadd.f32 %v4112, %v5328
        %v5330 = vpop.f32.mrb[0].mxu0
        %v5331 = vadd.f32 %v4108, %v5330
        %v5332 = vpop.f32.mrb[0].mxu0
        %v5333 = vadd.f32 %v4112, %v5332
        %5334 = vmatprep.mubr.bf16.mxu0 %v3872
        %5335 = vmatmul.mubr.bf16.gmra.mrb[0].mxu0 %v3871
        %v5336 = vpop.f32.mrb[0].mxu0
        %v5337 = vadd.f32 %v4108, %v5336
        %v5338 = vpop.f32.mrb[0].mxu0
        %v5339 = vadd.f32 %v4112, %v5338
        %v5340 = vpop.f32.mrb[0].mxu0
        %v5341 = vadd.f32 %v4108, %v5340
        %v5342 = vpop.f32.mrb[0].mxu0
        %v5343 = vadd.f32 %v4112, %v5342
        %5344 = vmatprep.mubr.bf16.mxu0 %v3876
        %5345 = vmatmul.mubr.bf16.gmra.mrb[0].mxu0 %v3875
        %v5346 = vpop.f32.mrb[0].mxu0
        %v5347 = vadd.f32 %v4108, %v5346
        %v5348 = vpop.f32.mrb[0].mxu0
        %v5349 = vadd.f32 %v4112, %v5348
        %v5350 = vpop.f32.mrb[0].mxu0
        %v5351 = vadd.f32 %v4108, %v5350
        %v5352 = vpop.f32.mrb[0].mxu0
        %v5353 = vadd.f32 %v4112, %v5352
        %5354 = vmatprep.mubr.bf16.mxu0 %v3880
        %5355 = vmatmul.mubr.bf16.gmra.mrb[0].mxu0 %v3879
        %v5356 = vpop.f32.mrb[0].mxu0
        %v5357 = vadd.f32 %v4108, %v5356
        %v5358 = vpop.f32.mrb[0].mxu0
        %v5359 = vadd.f32 %v4112, %v5358
        %v5360 = vpop.f32.mrb[0].mxu0
        %v5361 = vadd.f32 %v4108, %v5360
        %v5362 = vpop.f32.mrb[0].mxu0
        %v5363 = vadd.f32 %v4112, %v5362
        %5364 = vmatprep.mubr.bf16.mxu0 %v3884
        %5365 = vmatmul.mubr.bf16.gmra.mrb[0].mxu0 %v3883
        %v5366 = vpop.f32.mrb[0].mxu0
        %v5367 = vadd.f32 %v4108, %v5366
        %v5368 = vpop.f32.mrb[0].mxu0
        %v5369 = vadd.f32 %v4112, %v5368
        %v5370 = vpop.f32.mrb[0].mxu0
        %v5371 = vadd.f32 %v4108, %v5370
        %v5372 = vpop.f32.mrb[0].mxu0
        %v5373 = vadd.f32 %v4112, %v5372
        %5374 = vmatprep.mubr.bf16.mxu0 %v3888
        %5375 = vmatmul.mubr.bf16.gmra.mrb[0].mxu0 %v3887
        %v5376 = vpop.f32.mrb[0].mxu0
        %v5377 = vadd.f32 %v4108, %v5376
        %v5378 = vpop.f32.mrb[0].mxu0
        %v5379 = vadd.f32 %v4112, %v5378
        %v5380 = vpop.f32.mrb[0].mxu0
        %v5381 = vadd.f32 %v4108, %v5380
        %v5382 = vpop.f32.mrb[0].mxu0
        %v5383 = vadd.f32 %v4112, %v5382
        %5384 = vmatprep.mubr.bf16.mxu0 %v3892
        %5385 = vmatmul.mubr.bf16.gmra.mrb[0].mxu0 %v3891
        %v5386 = vpop.f32.mrb[0].mxu0
        %v5387 = vadd.f32 %v4108, %v5386
        %v5388 = vpop.f32.mrb[0].mxu0
        %v5389 = vadd.f32 %v4112, %v5388
        %v5390 = vpop.f32.mrb[0].mxu0
        %v5391 = vadd.f32 %v4108, %v5390
        %v5392 = vpop.f32.mrb[0].mxu0
        %v5393 = vadd.f32 %v4112, %v5392
        %5394 = vdwg.mxu0
        %5395 = vmatprep.subr.bf16.mxu0 %v4797
        %5396 = vmatpush1.bf16.msra.mxu0 %v4796
        %5397 = vmatprep.subr.bf16.mxu0 %v4804
        %5398 = vmatpush1.bf16.msra.mxu0 %v4803
        %5399 = vmatprep.subr.bf16.mxu0 %v4811
        %5400 = vmatpush1.bf16.msra.mxu0 %v4810
        %5401 = vmatprep.subr.bf16.mxu0 %v4818
        %5402 = vmatpush1.bf16.msra.mxu0 %v4817
        %5403 = vmatprep.subr.bf16.mxu0 %v4825
        %5404 = vmatpush1.bf16.msra.mxu0 %v4824
        %5405 = vmatprep.subr.bf16.mxu0 %v4832
        %5406 = vmatpush1.bf16.msra.mxu0 %v4831
        %5407 = vmatprep.subr.bf16.mxu0 %v4839
        %5408 = vmatpush1.bf16.msra.mxu0 %v4838
        %5409 = vmatprep.subr.bf16.mxu0 %v4846
        %5410 = vmatpush1.bf16.msra.mxu0 %v4845
        %5411 = vmatprep.subr.bf16.mxu0 %v4853
        %5412 = vmatpush1.bf16.msra.mxu0 %v4852
        %5413 = vmatprep.subr.bf16.mxu0 0
        %5414 = vmatpush1.bf16.msra.mxu0 0
        %5415 = vmatprep.subr.bf16.mxu0 0
        %5416 = vmatpush1.bf16.msra.mxu0 0
        %5417 = vmatprep.subr.bf16.mxu0 0
        %5418 = vmatpush1.bf16.msra.mxu0 0
        %5419 = vmatprep.subr.bf16.mxu0 0
        %5420 = vmatpush1.bf16.msra.mxu0 0
        %5421 = vmatprep.subr.bf16.mxu0 0
        %5422 = vmatpush1.bf16.msra.mxu0 0
        %5423 = vmatprep.subr.bf16.mxu0 0
        %5424 = vmatpush1.bf16.msra.mxu0 0
        %5425 = vmatprep.subr.bf16.mxu0 0
        %5426 = vmatpush1.bf16.msra.mxu0 0
        %5427 = vmatprep.mubr.bf16.mxu0 %v5033
        %5428 = vmatmul.mubr.bf16.gmra.mrb[0].mxu0 %v3865
        %v5429 = vpop.f32.mrb[0].mxu0
        %v5430 = vadd.f32 %v5317, %v5429
        %v5431 = vpop.f32.mrb[0].mxu0
        %v5432 = vadd.f32 %v5319, %v5431
        %v5433 = vpop.f32.mrb[0].mxu0
        %v5434 = vadd.f32 %v5321, %v5433
        %v5435 = vpop.f32.mrb[0].mxu0
        %v5436 = vadd.f32 %v5323, %v5435
        %5437 = vmatprep.mubr.bf16.mxu0 %v5036
        %5438 = vmatmul.mubr.bf16.gmra.mrb[0].mxu0 %v3869
        %v5439 = vpop.f32.mrb[0].mxu0
        %v5440 = vadd.f32 %v5327, %v5439
        %v5441 = vpop.f32.mrb[0].mxu0
        %v5442 = vadd.f32 %v5329, %v5441
        %v5443 = vpop.f32.mrb[0].mxu0
        %v5444 = vadd.f32 %v5331, %v5443
        %v5445 = vpop.f32.mrb[0].mxu0
        %v5446 = vadd.f32 %v5333, %v5445
        %5447 = vmatprep.mubr.bf16.mxu0 %v5039
        %5448 = vmatmul.mubr.bf16.gmra.mrb[0].mxu0 %v3873
        %v5449 = vpop.f32.mrb[0].mxu0
        %v5450 = vadd.f32 %v5337, %v5449
        %v5451 = vpop.f32.mrb[0].mxu0
        %v5452 = vadd.f32 %v5339, %v5451
        %v5453 = vpop.f32.mrb[0].mxu0
        %v5454 = vadd.f32 %v5341, %v5453
        %v5455 = vpop.f32.mrb[0].mxu0
        %v5456 = vadd.f32 %v5343, %v5455
        %5457 = vmatprep.mubr.bf16.mxu0 %v5042
        %5458 = vmatmul.mubr.bf16.gmra.mrb[0].mxu0 %v3877
        %v5459 = vpop.f32.mrb[0].mxu0
        %v5460 = vadd.f32 %v5347, %v5459
        %v5461 = vpop.f32.mrb[0].mxu0
        %v5462 = vadd.f32 %v5349, %v5461
        %v5463 = vpop.f32.mrb[0].mxu0
        %v5464 = vadd.f32 %v5351, %v5463
        %v5465 = vpop.f32.mrb[0].mxu0
        %v5466 = vadd.f32 %v5353, %v5465
        %5467 = vmatprep.mubr.bf16.mxu0 %v5045
        %5468 = vmatmul.mubr.bf16.gmra.mrb[0].mxu0 %v3881
        %v5469 = vpop.f32.mrb[0].mxu0
        %v5470 = vadd.f32 %v5357, %v5469
        %v5471 = vpop.f32.mrb[0].mxu0
        %v5472 = vadd.f32 %v5359, %v5471
        %v5473 = vpop.f32.mrb[0].mxu0
        %v5474 = vadd.f32 %v5361, %v5473
        %v5475 = vpop.f32.mrb[0].mxu0
        %v5476 = vadd.f32 %v5363, %v5475
        %5477 = vmatprep.mubr.bf16.mxu0 %v5048
        %5478 = vmatmul.mubr.bf16.gmra.mrb[0].mxu0 %v3885
        %v5479 = vpop.f32.mrb[0].mxu0
        %v5480 = vadd.f32 %v5367, %v5479
        %v5481 = vpop.f32.mrb[0].mxu0
        %v5482 = vadd.f32 %v5369, %v5481
        %v5483 = vpop.f32.mrb[0].mxu0
        %v5484 = vadd.f32 %v5371, %v5483
        %v5485 = vpop.f32.mrb[0].mxu0
        %v5486 = vadd.f32 %v5373, %v5485
        %5487 = vmatprep.mubr.bf16.mxu0 %v5051
        %5488 = vmatmul.mubr.bf16.gmra.mrb[0].mxu0 %v3889
        %v5489 = vpop.f32.mrb[0].mxu0
        %v5490 = vadd.f32 %v5377, %v5489
        %v5491 = vpop.f32.mrb[0].mxu0
        %v5492 = vadd.f32 %v5379, %v5491
        %v5493 = vpop.f32.mrb[0].mxu0
        %v5494 = vadd.f32 %v5381, %v5493
        %v5495 = vpop.f32.mrb[0].mxu0
        %v5496 = vadd.f32 %v5383, %v5495
        %5497 = vmatprep.mubr.bf16.mxu0 %v5054
        %5498 = vmatmul.mubr.bf16.gmra.mrb[0].mxu0 %v3893
        %v5499 = vpop.f32.mrb[0].mxu0
        %v5500 = vadd.f32 %v5387, %v5499
        %v5501 = vpop.f32.mrb[0].mxu0
        %v5502 = vadd.f32 %v5389, %v5501
        %v5503 = vpop.f32.mrb[0].mxu0
        %v5504 = vadd.f32 %v5391, %v5503
        %v5505 = vpop.f32.mrb[0].mxu0
        %v5506 = vadd.f32 %v5393, %v5505
        %5507 = vdwg.mxu0
        %5508 = vmatprep.subr.bf16.mxu0 %v4687
        %5509 = vmatpush1.bf16.msra.mxu0 %v4686
        %5510 = vmatprep.subr.bf16.mxu0 %v4694
        %5511 = vmatpush1.bf16.msra.mxu0 %v4693
        %5512 = vmatprep.subr.bf16.mxu0 %v4701
        %5513 = vmatpush1.bf16.msra.mxu0 %v4700
        %5514 = vmatprep.subr.bf16.mxu0 %v4708
        %5515 = vmatpush1.bf16.msra.mxu0 %v4707
        %5516 = vmatprep.subr.bf16.mxu0 %v4715
        %5517 = vmatpush1.bf16.msra.mxu0 %v4714
        %5518 = vmatprep.subr.bf16.mxu0 %v4722
        %5519 = vmatpush1.bf16.msra.mxu0 %v4721
        %5520 = vmatprep.subr.bf16.mxu0 %v4729
        %5521 = vmatpush1.bf16.msra.mxu0 %v4728
        %5522 = vmatprep.subr.bf16.mxu0 %v4736
        %5523 = vmatpush1.bf16.msra.mxu0 %v4735
        %5524 = vmatprep.subr.bf16.mxu0 %v4743
        %5525 = vmatpush1.bf16.msra.mxu0 %v4742
        %5526 = vmatprep.subr.bf16.mxu0 %v4750
        %5527 = vmatpush1.bf16.msra.mxu0 %v4749
        %5528 = vmatprep.subr.bf16.mxu0 %v4757
        %5529 = vmatpush1.bf16.msra.mxu0 %v4756
        %5530 = vmatprep.subr.bf16.mxu0 %v4764
        %5531 = vmatpush1.bf16.msra.mxu0 %v4763
        %5532 = vmatprep.subr.bf16.mxu0 %v4771
        %5533 = vmatpush1.bf16.msra.mxu0 %v4770
        %5534 = vmatprep.subr.bf16.mxu0 %v4778
        %5535 = vmatpush1.bf16.msra.mxu0 %v4777
        %5536 = vmatprep.subr.bf16.mxu0 %v4785
        %5537 = vmatpush1.bf16.msra.mxu0 %v4784
        %5538 = vmatprep.subr.bf16.mxu0 %v4792
        %5539 = vmatpush1.bf16.msra.mxu0 %v4791
        %5540 = vmatprep.mubr.bf16.mxu0 %v3864
        %5541 = vmatmul.mubr.bf16.gmra.mrb[0].mxu0 %v3863
        %v5542 = vpop.f32.mrb[0].mxu0
        %v5543 = vadd.f32 %v4116, %v5542
        %v5544 = vpop.f32.mrb[0].mxu0
        %v5545 = vadd.f32 %v4120, %v5544
        %v5546 = vpop.f32.mrb[0].mxu0
        %v5547 = vadd.f32 %v4116, %v5546
        %v5548 = vpop.f32.mrb[0].mxu0
        %v5549 = vadd.f32 %v4120, %v5548
        %5550 = vmatprep.mubr.bf16.mxu0 %v3868
        %5551 = vmatmul.mubr.bf16.gmra.mrb[0].mxu0 %v3867
        %v5552 = vpop.f32.mrb[0].mxu0
        %v5553 = vadd.f32 %v4116, %v5552
        %v5554 = vpop.f32.mrb[0].mxu0
        %v5555 = vadd.f32 %v4120, %v5554
        %v5556 = vpop.f32.mrb[0].mxu0
        %v5557 = vadd.f32 %v4116, %v5556
        %v5558 = vpop.f32.mrb[0].mxu0
        %v5559 = vadd.f32 %v4120, %v5558
        %5560 = vmatprep.mubr.bf16.mxu0 %v3872
        %5561 = vmatmul.mubr.bf16.gmra.mrb[0].mxu0 %v3871
        %v5562 = vpop.f32.mrb[0].mxu0
        %v5563 = vadd.f32 %v4116, %v5562
        %v5564 = vpop.f32.mrb[0].mxu0
        %v5565 = vadd.f32 %v4120, %v5564
        %v5566 = vpop.f32.mrb[0].mxu0
        %v5567 = vadd.f32 %v4116, %v5566
        %v5568 = vpop.f32.mrb[0].mxu0
        %v5569 = vadd.f32 %v4120, %v5568
        %5570 = vmatprep.mubr.bf16.mxu0 %v3876
        %5571 = vmatmul.mubr.bf16.gmra.mrb[0].mxu0 %v3875
        %v5572 = vpop.f32.mrb[0].mxu0
        %v5573 = vadd.f32 %v4116, %v5572
        %v5574 = vpop.f32.mrb[0].mxu0
        %v5575 = vadd.f32 %v4120, %v5574
        %v5576 = vpop.f32.mrb[0].mxu0
        %v5577 = vadd.f32 %v4116, %v5576
        %v5578 = vpop.f32.mrb[0].mxu0
        %v5579 = vadd.f32 %v4120, %v5578
        %5580 = vmatprep.mubr.bf16.mxu0 %v3880
        %5581 = vmatmul.mubr.bf16.gmra.mrb[0].mxu0 %v3879
        %v5582 = vpop.f32.mrb[0].mxu0
        %v5583 = vadd.f32 %v4116, %v5582
        %v5584 = vpop.f32.mrb[0].mxu0
        %v5585 = vadd.f32 %v4120, %v5584
        %v5586 = vpop.f32.mrb[0].mxu0
        %v5587 = vadd.f32 %v4116, %v5586
        %v5588 = vpop.f32.mrb[0].mxu0
        %v5589 = vadd.f32 %v4120, %v5588
        %5590 = vmatprep.mubr.bf16.mxu0 %v3884
        %5591 = vmatmul.mubr.bf16.gmra.mrb[0].mxu0 %v3883
        %v5592 = vpop.f32.mrb[0].mxu0
        %v5593 = vadd.f32 %v4116, %v5592
        %v5594 = vpop.f32.mrb[0].mxu0
        %v5595 = vadd.f32 %v4120, %v5594
        %v5596 = vpop.f32.mrb[0].mxu0
        %v5597 = vadd.f32 %v4116, %v5596
        %v5598 = vpop.f32.mrb[0].mxu0
        %v5599 = vadd.f32 %v4120, %v5598
        %5600 = vmatprep.mubr.bf16.mxu0 %v3888
        %5601 = vmatmul.mubr.bf16.gmra.mrb[0].mxu0 %v3887
        %v5602 = vpop.f32.mrb[0].mxu0
        %v5603 = vadd.f32 %v4116, %v5602
        %v5604 = vpop.f32.mrb[0].mxu0
        %v5605 = vadd.f32 %v4120, %v5604
        %v5606 = vpop.f32.mrb[0].mxu0
        %v5607 = vadd.f32 %v4116, %v5606
        %v5608 = vpop.f32.mrb[0].mxu0
        %v5609 = vadd.f32 %v4120, %v5608
        %5610 = vmatprep.mubr.bf16.mxu0 %v3892
        %5611 = vmatmul.mubr.bf16.gmra.mrb[0].mxu0 %v3891
        %v5612 = vpop.f32.mrb[0].mxu0
        %v5613 = vadd.f32 %v4116, %v5612
        %v5614 = vpop.f32.mrb[0].mxu0
        %v5615 = vadd.f32 %v4120, %v5614
        %v5616 = vpop.f32.mrb[0].mxu0
        %v5617 = vadd.f32 %v4116, %v5616
        %v5618 = vpop.f32.mrb[0].mxu0
        %v5619 = vadd.f32 %v4120, %v5618
        %5620 = vdwg.mxu0
        %5621 = vmatprep.subr.bf16.mxu0 %v4799
        %5622 = vmatpush1.bf16.msra.mxu0 %v4798
        %5623 = vmatprep.subr.bf16.mxu0 %v4806
        %5624 = vmatpush1.bf16.msra.mxu0 %v4805
        %5625 = vmatprep.subr.bf16.mxu0 %v4813
        %5626 = vmatpush1.bf16.msra.mxu0 %v4812
        %5627 = vmatprep.subr.bf16.mxu0 %v4820
        %5628 = vmatpush1.bf16.msra.mxu0 %v4819
        %5629 = vmatprep.subr.bf16.mxu0 %v4827
        %5630 = vmatpush1.bf16.msra.mxu0 %v4826
        %5631 = vmatprep.subr.bf16.mxu0 %v4834
        %5632 = vmatpush1.bf16.msra.mxu0 %v4833
        %5633 = vmatprep.subr.bf16.mxu0 %v4841
        %5634 = vmatpush1.bf16.msra.mxu0 %v4840
        %5635 = vmatprep.subr.bf16.mxu0 %v4848
        %5636 = vmatpush1.bf16.msra.mxu0 %v4847
        %5637 = vmatprep.subr.bf16.mxu0 %v4855
        %5638 = vmatpush1.bf16.msra.mxu0 %v4854
        %5639 = vmatprep.subr.bf16.mxu0 0
        %5640 = vmatpush1.bf16.msra.mxu0 0
        %5641 = vmatprep.subr.bf16.mxu0 0
        %5642 = vmatpush1.bf16.msra.mxu0 0
        %5643 = vmatprep.subr.bf16.mxu0 0
        %5644 = vmatpush1.bf16.msra.mxu0 0
        %5645 = vmatprep.subr.bf16.mxu0 0
        %5646 = vmatpush1.bf16.msra.mxu0 0
        %5647 = vmatprep.subr.bf16.mxu0 0
        %5648 = vmatpush1.bf16.msra.mxu0 0
        %5649 = vmatprep.subr.bf16.mxu0 0
        %5650 = vmatpush1.bf16.msra.mxu0 0
        %5651 = vmatprep.subr.bf16.mxu0 0
        %5652 = vmatpush1.bf16.msra.mxu0 0
        %5653 = vmatprep.mubr.bf16.mxu0 %v5033
        %5654 = vmatmul.mubr.bf16.gmra.mrb[0].mxu0 %v3865
        %v5655 = vpop.f32.mrb[0].mxu0
        %v5656 = vadd.f32 %v5543, %v5655
        %v5657 = vpop.f32.mrb[0].mxu0
        %v5658 = vadd.f32 %v5545, %v5657
        %v5659 = vpop.f32.mrb[0].mxu0
        %v5660 = vadd.f32 %v5547, %v5659
        %v5661 = vpop.f32.mrb[0].mxu0
        %v5662 = vadd.f32 %v5549, %v5661
        %5663 = vmatprep.mubr.bf16.mxu0 %v5036
        %5664 = vmatmul.mubr.bf16.gmra.mrb[0].mxu0 %v3869
        %v5665 = vpop.f32.mrb[0].mxu0
        %v5666 = vadd.f32 %v5553, %v5665
        %v5667 = vpop.f32.mrb[0].mxu0
        %v5668 = vadd.f32 %v5555, %v5667
        %v5669 = vpop.f32.mrb[0].mxu0
        %v5670 = vadd.f32 %v5557, %v5669
        %v5671 = vpop.f32.mrb[0].mxu0
        %v5672 = vadd.f32 %v5559, %v5671
        %5673 = vmatprep.mubr.bf16.mxu0 %v5039
        %5674 = vmatmul.mubr.bf16.gmra.mrb[0].mxu0 %v3873
        %v5675 = vpop.f32.mrb[0].mxu0
        %v5676 = vadd.f32 %v5563, %v5675
        %v5677 = vpop.f32.mrb[0].mxu0
        %v5678 = vadd.f32 %v5565, %v5677
        %v5679 = vpop.f32.mrb[0].mxu0
        %v5680 = vadd.f32 %v5567, %v5679
        %v5681 = vpop.f32.mrb[0].mxu0
        %v5682 = vadd.f32 %v5569, %v5681
        %5683 = vmatprep.mubr.bf16.mxu0 %v5042
        %5684 = vmatmul.mubr.bf16.gmra.mrb[0].mxu0 %v3877
        %v5685 = vpop.f32.mrb[0].mxu0
        %v5686 = vadd.f32 %v5573, %v5685
        %v5687 = vpop.f32.mrb[0].mxu0
        %v5688 = vadd.f32 %v5575, %v5687
        %v5689 = vpop.f32.mrb[0].mxu0
        %v5690 = vadd.f32 %v5577, %v5689
        %v5691 = vpop.f32.mrb[0].mxu0
        %v5692 = vadd.f32 %v5579, %v5691
        %5693 = vmatprep.mubr.bf16.mxu0 %v5045
        %5694 = vmatmul.mubr.bf16.gmra.mrb[0].mxu0 %v3881
        %v5695 = vpop.f32.mrb[0].mxu0
        %v5696 = vadd.f32 %v5583, %v5695
        %v5697 = vpop.f32.mrb[0].mxu0
        %v5698 = vadd.f32 %v5585, %v5697
        %v5699 = vpop.f32.mrb[0].mxu0
        %v5700 = vadd.f32 %v5587, %v5699
        %v5701 = vpop.f32.mrb[0].mxu0
        %v5702 = vadd.f32 %v5589, %v5701
        %5703 = vmatprep.mubr.bf16.mxu0 %v5048
        %5704 = vmatmul.mubr.bf16.gmra.mrb[0].mxu0 %v3885
        %v5705 = vpop.f32.mrb[0].mxu0
        %v5706 = vadd.f32 %v5593, %v5705
        %v5707 = vpop.f32.mrb[0].mxu0
        %v5708 = vadd.f32 %v5595, %v5707
        %v5709 = vpop.f32.mrb[0].mxu0
        %v5710 = vadd.f32 %v5597, %v5709
        %v5711 = vpop.f32.mrb[0].mxu0
        %v5712 = vadd.f32 %v5599, %v5711
        %5713 = vmatprep.mubr.bf16.mxu0 %v5051
        %5714 = vmatmul.mubr.bf16.gmra.mrb[0].mxu0 %v3889
        %v5715 = vpop.f32.mrb[0].mxu0
        %v5716 = vadd.f32 %v5603, %v5715
        %v5717 = vpop.f32.mrb[0].mxu0
        %v5718 = vadd.f32 %v5605, %v5717
        %v5719 = vpop.f32.mrb[0].mxu0
        %v5720 = vadd.f32 %v5607, %v5719
        %v5721 = vpop.f32.mrb[0].mxu0
        %v5722 = vadd.f32 %v5609, %v5721
        %5723 = vmatprep.mubr.bf16.mxu0 %v5054
        %5724 = vmatmul.mubr.bf16.gmra.mrb[0].mxu0 %v3893
        %v5725 = vpop.f32.mrb[0].mxu0
        %v5726 = vadd.f32 %v5613, %v5725
        %v5727 = vpop.f32.mrb[0].mxu0
        %v5728 = vadd.f32 %v5615, %v5727
        %v5729 = vpop.f32.mrb[0].mxu0
        %v5730 = vadd.f32 %v5617, %v5729
        %v5731 = vpop.f32.mrb[0].mxu0
        %v5732 = vadd.f32 %v5619, %v5731
        %5733 = vdwg.mxu0
        %5734 = vmatprep.subr.bf16.mxu0 0
        %5735 = vmatpush1.bf16.msra.mxu0 %v4688
        %5736 = vmatprep.subr.bf16.mxu0 0
        %5737 = vmatpush1.bf16.msra.mxu0 %v4695
        %5738 = vmatprep.subr.bf16.mxu0 0
        %5739 = vmatpush1.bf16.msra.mxu0 %v4702
        %5740 = vmatprep.subr.bf16.mxu0 0
        %5741 = vmatpush1.bf16.msra.mxu0 %v4709
        %5742 = vmatprep.subr.bf16.mxu0 0
        %5743 = vmatpush1.bf16.msra.mxu0 %v4716
        %5744 = vmatprep.subr.bf16.mxu0 0
        %5745 = vmatpush1.bf16.msra.mxu0 %v4723
        %5746 = vmatprep.subr.bf16.mxu0 0
        %5747 = vmatpush1.bf16.msra.mxu0 %v4730
        %5748 = vmatprep.subr.bf16.mxu0 0
        %5749 = vmatpush1.bf16.msra.mxu0 %v4737
        %5750 = vmatprep.subr.bf16.mxu0 0
        %5751 = vmatpush1.bf16.msra.mxu0 %v4744
        %5752 = vmatprep.subr.bf16.mxu0 0
        %5753 = vmatpush1.bf16.msra.mxu0 %v4751
        %5754 = vmatprep.subr.bf16.mxu0 0
        %5755 = vmatpush1.bf16.msra.mxu0 %v4758
        %5756 = vmatprep.subr.bf16.mxu0 0
        %5757 = vmatpush1.bf16.msra.mxu0 %v4765
        %5758 = vmatprep.subr.bf16.mxu0 0
        %5759 = vmatpush1.bf16.msra.mxu0 %v4772
        %5760 = vmatprep.subr.bf16.mxu0 0
        %5761 = vmatpush1.bf16.msra.mxu0 %v4779
        %5762 = vmatprep.subr.bf16.mxu0 0
        %5763 = vmatpush1.bf16.msra.mxu0 %v4786
        %5764 = vmatprep.subr.bf16.mxu0 0
        %5765 = vmatpush1.bf16.msra.mxu0 %v4793
        %5766 = vmatprep.mubr.bf16.mxu0 %v3864
        %5767 = vmatmul.mubr.bf16.gmra.mrb[0].mxu0 %v3863
        %v5768 = vpop.f32.mrb[0].mxu0
        %v5769 = vadd.f32 %v4124, %v5768
        %v5770 = vpop.f32.mrb[0].mxu0
        %v5771 = vpop.f32.mrb[0].mxu0
        %v5772 = vadd.f32 %v4124, %v5771
        %v5773 = vpop.f32.mrb[0].mxu0
        %5774 = vmatprep.mubr.bf16.mxu0 %v3868
        %5775 = vmatmul.mubr.bf16.gmra.mrb[0].mxu0 %v3867
        %v5776 = vpop.f32.mrb[0].mxu0
        %v5777 = vadd.f32 %v4124, %v5776
        %v5778 = vpop.f32.mrb[0].mxu0
        %v5779 = vpop.f32.mrb[0].mxu0
        %v5780 = vadd.f32 %v4124, %v5779
        %v5781 = vpop.f32.mrb[0].mxu0
        %5782 = vmatprep.mubr.bf16.mxu0 %v3872
        %5783 = vmatmul.mubr.bf16.gmra.mrb[0].mxu0 %v3871
        %v5784 = vpop.f32.mrb[0].mxu0
        %v5785 = vadd.f32 %v4124, %v5784
        %v5786 = vpop.f32.mrb[0].mxu0
        %v5787 = vpop.f32.mrb[0].mxu0
        %v5788 = vadd.f32 %v4124, %v5787
        %v5789 = vpop.f32.mrb[0].mxu0
        %5790 = vmatprep.mubr.bf16.mxu0 %v3876
        %5791 = vmatmul.mubr.bf16.gmra.mrb[0].mxu0 %v3875
        %v5792 = vpop.f32.mrb[0].mxu0
        %v5793 = vadd.f32 %v4124, %v5792
        %v5794 = vpop.f32.mrb[0].mxu0
        %v5795 = vpop.f32.mrb[0].mxu0
        %v5796 = vadd.f32 %v4124, %v5795
        %v5797 = vpop.f32.mrb[0].mxu0
        %5798 = vmatprep.mubr.bf16.mxu0 %v3880
        %5799 = vmatmul.mubr.bf16.gmra.mrb[0].mxu0 %v3879
        %v5800 = vpop.f32.mrb[0].mxu0
        %v5801 = vadd.f32 %v4124, %v5800
        %v5802 = vpop.f32.mrb[0].mxu0
        %v5803 = vpop.f32.mrb[0].mxu0
        %v5804 = vadd.f32 %v4124, %v5803
        %v5805 = vpop.f32.mrb[0].mxu0
        %5806 = vmatprep.mubr.bf16.mxu0 %v3884
        %5807 = vmatmul.mubr.bf16.gmra.mrb[0].mxu0 %v3883
        %v5808 = vpop.f32.mrb[0].mxu0
        %v5809 = vadd.f32 %v4124, %v5808
        %v5810 = vpop.f32.mrb[0].mxu0
        %v5811 = vpop.f32.mrb[0].mxu0
        %v5812 = vadd.f32 %v4124, %v5811
        %v5813 = vpop.f32.mrb[0].mxu0
        %5814 = vmatprep.mubr.bf16.mxu0 %v3888
        %5815 = vmatmul.mubr.bf16.gmra.mrb[0].mxu0 %v3887
        %v5816 = vpop.f32.mrb[0].mxu0
        %v5817 = vadd.f32 %v4124, %v5816
        %v5818 = vpop.f32.mrb[0].mxu0
        %v5819 = vpop.f32.mrb[0].mxu0
        %v5820 = vadd.f32 %v4124, %v5819
        %v5821 = vpop.f32.mrb[0].mxu0
        %5822 = vmatprep.mubr.bf16.mxu0 %v3892
        %5823 = vmatmul.mubr.bf16.gmra.mrb[0].mxu0 %v3891
        %v5824 = vpop.f32.mrb[0].mxu0
        %v5825 = vadd.f32 %v4124, %v5824
        %v5826 = vpop.f32.mrb[0].mxu0
        %v5827 = vpop.f32.mrb[0].mxu0
        %v5828 = vadd.f32 %v4124, %v5827
        %v5829 = vpop.f32.mrb[0].mxu0
        %5830 = vdwg.mxu0
        %5831 = vmatprep.subr.bf16.mxu0 0
        %5832 = vmatpush1.bf16.msra.mxu0 %v4800
        %5833 = vmatprep.subr.bf16.mxu0 0
        %5834 = vmatpush1.bf16.msra.mxu0 %v4807
        %5835 = vmatprep.subr.bf16.mxu0 0
        %5836 = vmatpush1.bf16.msra.mxu0 %v4814
        %5837 = vmatprep.subr.bf16.mxu0 0
        %5838 = vmatpush1.bf16.msra.mxu0 %v4821
        %5839 = vmatprep.subr.bf16.mxu0 0
        %5840 = vmatpush1.bf16.msra.mxu0 %v4828
        %5841 = vmatprep.subr.bf16.mxu0 0
        %5842 = vmatpush1.bf16.msra.mxu0 %v4835
        %5843 = vmatprep.subr.bf16.mxu0 0
        %5844 = vmatpush1.bf16.msra.mxu0 %v4842
        %5845 = vmatprep.subr.bf16.mxu0 0
        %5846 = vmatpush1.bf16.msra.mxu0 %v4849
        %5847 = vmatprep.subr.bf16.mxu0 0
        %5848 = vmatpush1.bf16.msra.mxu0 %v4856
        %5849 = vmatprep.subr.bf16.mxu0 0
        %5850 = vmatpush1.bf16.msra.mxu0 0
        %5851 = vmatprep.subr.bf16.mxu0 0
        %5852 = vmatpush1.bf16.msra.mxu0 0
        %5853 = vmatprep.subr.bf16.mxu0 0
        %5854 = vmatpush1.bf16.msra.mxu0 0
        %5855 = vmatprep.subr.bf16.mxu0 0
        %5856 = vmatpush1.bf16.msra.mxu0 0
        %5857 = vmatprep.subr.bf16.mxu0 0
        %5858 = vmatpush1.bf16.msra.mxu0 0
        %5859 = vmatprep.subr.bf16.mxu0 0
        %5860 = vmatpush1.bf16.msra.mxu0 0
        %5861 = vmatprep.subr.bf16.mxu0 0
        %5862 = vmatpush1.bf16.msra.mxu0 0
        %5863 = vmatprep.mubr.bf16.mxu0 %v5033
        %5864 = vmatmul.mubr.bf16.gmra.mrb[0].mxu0 %v3865
        %v5865 = vpop.f32.mrb[0].mxu0
        %v5866 = vadd.f32 %v5769, %v5865
        %v5867 = vpop.f32.mrb[0].mxu0
        %v5868 = vpop.f32.mrb[0].mxu0
        %v5869 = vadd.f32 %v5772, %v5868
        %v5870 = vpop.f32.mrb[0].mxu0
        %5871 = vmatprep.mubr.bf16.mxu0 %v5036
        %5872 = vmatmul.mubr.bf16.gmra.mrb[0].mxu0 %v3869
        %v5873 = vpop.f32.mrb[0].mxu0
        %v5874 = vadd.f32 %v5777, %v5873
        %v5875 = vpop.f32.mrb[0].mxu0
        %v5876 = vpop.f32.mrb[0].mxu0
        %v5877 = vadd.f32 %v5780, %v5876
        %v5878 = vpop.f32.mrb[0].mxu0
        %5879 = vmatprep.mubr.bf16.mxu0 %v5039
        %5880 = vmatmul.mubr.bf16.gmra.mrb[0].mxu0 %v3873
        %v5881 = vpop.f32.mrb[0].mxu0
        %v5882 = vadd.f32 %v5785, %v5881
        %v5883 = vpop.f32.mrb[0].mxu0
        %v5884 = vpop.f32.mrb[0].mxu0
        %v5885 = vadd.f32 %v5788, %v5884
        %v5886 = vpop.f32.mrb[0].mxu0
        %5887 = vmatprep.mubr.bf16.mxu0 %v5042
        %5888 = vmatmul.mubr.bf16.gmra.mrb[0].mxu0 %v3877
        %v5889 = vpop.f32.mrb[0].mxu0
        %v5890 = vadd.f32 %v5793, %v5889
        %v5891 = vpop.f32.mrb[0].mxu0
        %v5892 = vpop.f32.mrb[0].mxu0
        %v5893 = vadd.f32 %v5796, %v5892
        %v5894 = vpop.f32.mrb[0].mxu0
        %5895 = vmatprep.mubr.bf16.mxu0 %v5045
        %5896 = vmatmul.mubr.bf16.gmra.mrb[0].mxu0 %v3881
        %v5897 = vpop.f32.mrb[0].mxu0
        %v5898 = vadd.f32 %v5801, %v5897
        %v5899 = vpop.f32.mrb[0].mxu0
        %v5900 = vpop.f32.mrb[0].mxu0
        %v5901 = vadd.f32 %v5804, %v5900
        %v5902 = vpop.f32.mrb[0].mxu0
        %5903 = vmatprep.mubr.bf16.mxu0 %v5048
        %5904 = vmatmul.mubr.bf16.gmra.mrb[0].mxu0 %v3885
        %v5905 = vpop.f32.mrb[0].mxu0
        %v5906 = vadd.f32 %v5809, %v5905
        %v5907 = vpop.f32.mrb[0].mxu0
        %v5908 = vpop.f32.mrb[0].mxu0
        %v5909 = vadd.f32 %v5812, %v5908
        %v5910 = vpop.f32.mrb[0].mxu0
        %5911 = vmatprep.mubr.bf16.mxu0 %v5051
        %5912 = vmatmul.mubr.bf16.gmra.mrb[0].mxu0 %v3889
        %v5913 = vpop.f32.mrb[0].mxu0
        %v5914 = vadd.f32 %v5817, %v5913
        %v5915 = vpop.f32.mrb[0].mxu0
        %v5916 = vpop.f32.mrb[0].mxu0
        %v5917 = vadd.f32 %v5820, %v5916
        %v5918 = vpop.f32.mrb[0].mxu0
        %5919 = vmatprep.mubr.bf16.mxu0 %v5054
        %5920 = vmatmul.mubr.bf16.gmra.mrb[0].mxu0 %v3893
        %v5921 = vpop.f32.mrb[0].mxu0
        %v5922 = vadd.f32 %v5825, %v5921
        %v5923 = vpop.f32.mrb[0].mxu0
        %v5924 = vpop.f32.mrb[0].mxu0
        %v5925 = vadd.f32 %v5828, %v5924
        %v5926 = vpop.f32.mrb[0].mxu0
        %5927 = vdwg.mxu0
        %v5928 = vsub.f32 0.0, %v5204
        %v5929 = vsub.f32 0.0, %v5206
        %v5930 = vsub.f32 0.0, %v5430
        %v5931 = vsub.f32 0.0, %v5432
        %v5932 = vsub.f32 0.0, %v5656
        %v5933 = vsub.f32 0.0, %v5658
        %v5934 = vsub.f32 0.0, %v5866
        %v5935 = vsub.f32 0.0, %v5208
        %v5936 = vsub.f32 0.0, %v5210
        %v5937 = vsub.f32 0.0, %v5434
        %v5938 = vsub.f32 0.0, %v5436
        %v5939 = vsub.f32 0.0, %v5660
        %v5940 = vsub.f32 0.0, %v5662
        %v5941 = vsub.f32 0.0, %v5869
        %v5942 = vsub.f32 0.0, %v5214
        %v5943 = vsub.f32 0.0, %v5216
        %v5944 = vsub.f32 0.0, %v5440
        %v5945 = vsub.f32 0.0, %v5442
        %v5946 = vsub.f32 0.0, %v5666
        %v5947 = vsub.f32 0.0, %v5668
        %v5948 = vsub.f32 0.0, %v5874
        %v5949 = vsub.f32 0.0, %v5218
        %v5950 = vsub.f32 0.0, %v5220
        %v5951 = vsub.f32 0.0, %v5444
        %v5952 = vsub.f32 0.0, %v5446
        %v5953 = vsub.f32 0.0, %v5670
        %v5954 = vsub.f32 0.0, %v5672
        %v5955 = vsub.f32 0.0, %v5877
        %v5956 = vsub.f32 0.0, %v5224
        %v5957 = vsub.f32 0.0, %v5226
        %v5958 = vsub.f32 0.0, %v5450
        %v5959 = vsub.f32 0.0, %v5452
        %v5960 = vsub.f32 0.0, %v5676
        %v5961 = vsub.f32 0.0, %v5678
        %v5962 = vsub.f32 0.0, %v5882
        %v5963 = vsub.f32 0.0, %v5228
        %v5964 = vsub.f32 0.0, %v5230
        %v5965 = vsub.f32 0.0, %v5454
        %v5966 = vsub.f32 0.0, %v5456
        %v5967 = vsub.f32 0.0, %v5680
        %v5968 = vsub.f32 0.0, %v5682
        %v5969 = vsub.f32 0.0, %v5885
        %v5970 = vsub.f32 0.0, %v5234
        %v5971 = vsub.f32 0.0, %v5236
        %v5972 = vsub.f32 0.0, %v5460
        %v5973 = vsub.f32 0.0, %v5462
        %v5974 = vsub.f32 0.0, %v5686
        %v5975 = vsub.f32 0.0, %v5688
        %v5976 = vsub.f32 0.0, %v5890
        %v5977 = vsub.f32 0.0, %v5238
        %v5978 = vsub.f32 0.0, %v5240
        %v5979 = vsub.f32 0.0, %v5464
        %v5980 = vsub.f32 0.0, %v5466
        %v5981 = vsub.f32 0.0, %v5690
        %v5982 = vsub.f32 0.0, %v5692
        %v5983 = vsub.f32 0.0, %v5893
        %v5984 = vsub.f32 0.0, %v5244
        %v5985 = vsub.f32 0.0, %v5246
        %v5986 = vsub.f32 0.0, %v5470
        %v5987 = vsub.f32 0.0, %v5472
        %v5988 = vsub.f32 0.0, %v5696
        %v5989 = vsub.f32 0.0, %v5698
        %v5990 = vsub.f32 0.0, %v5898
        %v5991 = vsub.f32 0.0, %v5248
        %v5992 = vsub.f32 0.0, %v5250
        %v5993 = vsub.f32 0.0, %v5474
        %v5994 = vsub.f32 0.0, %v5476
        %v5995 = vsub.f32 0.0, %v5700
        %v5996 = vsub.f32 0.0, %v5702
        %v5997 = vsub.f32 0.0, %v5901
        %v5998 = vsub.f32 0.0, %v5254
        %v5999 = vsub.f32 0.0, %v5256
        %v6000 = vsub.f32 0.0, %v5480
        %v6001 = vsub.f32 0.0, %v5482
        %v6002 = vsub.f32 0.0, %v5706
        %v6003 = vsub.f32 0.0, %v5708
        %v6004 = vsub.f32 0.0, %v5906
        %v6005 = vsub.f32 0.0, %v5258
        %v6006 = vsub.f32 0.0, %v5260
        %v6007 = vsub.f32 0.0, %v5484
        %v6008 = vsub.f32 0.0, %v5486
        %v6009 = vsub.f32 0.0, %v5710
        %v6010 = vsub.f32 0.0, %v5712
        %v6011 = vsub.f32 0.0, %v5909
        %v6012 = vsub.f32 0.0, %v5264
        %v6013 = vsub.f32 0.0, %v5266
        %v6014 = vsub.f32 0.0, %v5490
        %v6015 = vsub.f32 0.0, %v5492
        %v6016 = vsub.f32 0.0, %v5716
        %v6017 = vsub.f32 0.0, %v5718
        %v6018 = vsub.f32 0.0, %v5914
        %v6019 = vsub.f32 0.0, %v5268
        %v6020 = vsub.f32 0.0, %v5270
        %v6021 = vsub.f32 0.0, %v5494
        %v6022 = vsub.f32 0.0, %v5496
        %v6023 = vsub.f32 0.0, %v5720
        %v6024 = vsub.f32 0.0, %v5722
        %v6025 = vsub.f32 0.0, %v5917
        %v6026 = vsub.f32 0.0, %v5274
        %v6027 = vsub.f32 0.0, %v5276
        %v6028 = vsub.f32 0.0, %v5500
        %v6029 = vsub.f32 0.0, %v5502
        %v6030 = vsub.f32 0.0, %v5726
        %v6031 = vsub.f32 0.0, %v5728
        %v6032 = vsub.f32 0.0, %v5922
        %v6033 = vsub.f32 0.0, %v5278
        %v6034 = vsub.f32 0.0, %v5280
        %v6035 = vsub.f32 0.0, %v5504
        %v6036 = vsub.f32 0.0, %v5506
        %v6037 = vsub.f32 0.0, %v5730
        %v6038 = vsub.f32 0.0, %v5732
        %v6039 = vsub.f32 0.0, %v5925
        %v6040 = vmul.f32 %v5928, 1.442695
        %v6041 = vpow.pop %v6040
        %v6042 = vmul.f32 %v5929, 1.442695
        %v6043 = vpow.pop %v6042
        %v6044 = vmul.f32 %v5930, 1.442695
        %v6045 = vpow.pop %v6044
        %v6046 = vmul.f32 %v5931, 1.442695
        %v6047 = vpow.pop %v6046
        %v6048 = vmul.f32 %v5932, 1.442695
        %v6049 = vpow.pop %v6048
        %v6050 = vmul.f32 %v5933, 1.442695
        %v6051 = vpow.pop %v6050
        %v6052 = vmul.f32 %v5934, 1.442695
        %v6053 = vpow.pop %v6052
        %v6054 = vmul.f32 %v5935, 1.442695
        %v6055 = vpow.pop %v6054
        %v6056 = vmul.f32 %v5936, 1.442695
        %v6057 = vpow.pop %v6056
        %v6058 = vmul.f32 %v5937, 1.442695
        %v6059 = vpow.pop %v6058
        %v6060 = vmul.f32 %v5938, 1.442695
        %v6061 = vpow.pop %v6060
        %v6062 = vmul.f32 %v5939, 1.442695
        %v6063 = vpow.pop %v6062
        %v6064 = vmul.f32 %v5940, 1.442695
        %v6065 = vpow.pop %v6064
        %v6066 = vmul.f32 %v5941, 1.442695
        %v6067 = vpow.pop %v6066
        %v6068 = vmul.f32 %v5942, 1.442695
        %v6069 = vpow.pop %v6068
        %v6070 = vmul.f32 %v5943, 1.442695
        %v6071 = vpow.pop %v6070
        %v6072 = vmul.f32 %v5944, 1.442695
        %v6073 = vpow.pop %v6072
        %v6074 = vmul.f32 %v5945, 1.442695
        %v6075 = vpow.pop %v6074
        %v6076 = vmul.f32 %v5946, 1.442695
        %v6077 = vpow.pop %v6076
        %v6078 = vmul.f32 %v5947, 1.442695
        %v6079 = vpow.pop %v6078
        %v6080 = vmul.f32 %v5948, 1.442695
        %v6081 = vpow.pop %v6080
        %v6082 = vmul.f32 %v5949, 1.442695
        %v6083 = vpow.pop %v6082
        %v6084 = vmul.f32 %v5950, 1.442695
        %v6085 = vpow.pop %v6084
        %v6086 = vmul.f32 %v5951, 1.442695
        %v6087 = vpow.pop %v6086
        %v6088 = vmul.f32 %v5952, 1.442695
        %v6089 = vpow.pop %v6088
        %v6090 = vmul.f32 %v5953, 1.442695
        %v6091 = vpow.pop %v6090
        %v6092 = vmul.f32 %v5954, 1.442695
        %v6093 = vpow.pop %v6092
        %v6094 = vmul.f32 %v5955, 1.442695
        %v6095 = vpow.pop %v6094
        %v6096 = vmul.f32 %v5956, 1.442695
        %v6097 = vpow.pop %v6096
        %v6098 = vmul.f32 %v5957, 1.442695
        %v6099 = vpow.pop %v6098
        %v6100 = vmul.f32 %v5958, 1.442695
        %v6101 = vpow.pop %v6100
        %v6102 = vmul.f32 %v5959, 1.442695
        %v6103 = vpow.pop %v6102
        %v6104 = vmul.f32 %v5960, 1.442695
        %v6105 = vpow.pop %v6104
        %v6106 = vmul.f32 %v5961, 1.442695
        %v6107 = vpow.pop %v6106
        %v6108 = vmul.f32 %v5962, 1.442695
        %v6109 = vpow.pop %v6108
        %v6110 = vmul.f32 %v5963, 1.442695
        %v6111 = vpow.pop %v6110
        %v6112 = vmul.f32 %v5964, 1.442695
        %v6113 = vpow.pop %v6112
        %v6114 = vmul.f32 %v5965, 1.442695
        %v6115 = vpow.pop %v6114
        %v6116 = vmul.f32 %v5966, 1.442695
        %v6117 = vpow.pop %v6116
        %v6118 = vmul.f32 %v5967, 1.442695
        %v6119 = vpow.pop %v6118
        %v6120 = vmul.f32 %v5968, 1.442695
        %v6121 = vpow.pop %v6120
        %v6122 = vmul.f32 %v5969, 1.442695
        %v6123 = vpow.pop %v6122
        %v6124 = vmul.f32 %v5970, 1.442695
        %v6125 = vpow.pop %v6124
        %v6126 = vmul.f32 %v5971, 1.442695
        %v6127 = vpow.pop %v6126
        %v6128 = vmul.f32 %v5972, 1.442695
        %v6129 = vpow.pop %v6128
        %v6130 = vmul.f32 %v5973, 1.442695
        %v6131 = vpow.pop %v6130
        %v6132 = vmul.f32 %v5974, 1.442695
        %v6133 = vpow.pop %v6132
        %v6134 = vmul.f32 %v5975, 1.442695
        %v6135 = vpow.pop %v6134
        %v6136 = vmul.f32 %v5976, 1.442695
        %v6137 = vpow.pop %v6136
        %v6138 = vmul.f32 %v5977, 1.442695
        %v6139 = vpow.pop %v6138
        %v6140 = vmul.f32 %v5978, 1.442695
        %v6141 = vpow.pop %v6140
        %v6142 = vmul.f32 %v5979, 1.442695
        %v6143 = vpow.pop %v6142
        %v6144 = vmul.f32 %v5980, 1.442695
        %v6145 = vpow.pop %v6144
        %v6146 = vmul.f32 %v5981, 1.442695
        %v6147 = vpow.pop %v6146
        %v6148 = vmul.f32 %v5982, 1.442695
        %v6149 = vpow.pop %v6148
        %v6150 = vmul.f32 %v5983, 1.442695
        %v6151 = vpow.pop %v6150
        %v6152 = vmul.f32 %v5984, 1.442695
        %v6153 = vpow.pop %v6152
        %v6154 = vmul.f32 %v5985, 1.442695
        %v6155 = vpow.pop %v6154
        %v6156 = vmul.f32 %v5986, 1.442695
        %v6157 = vpow.pop %v6156
        %v6158 = vmul.f32 %v5987, 1.442695
        %v6159 = vpow.pop %v6158
        %v6160 = vmul.f32 %v5988, 1.442695
        %v6161 = vpow.pop %v6160
        %v6162 = vmul.f32 %v5989, 1.442695
        %v6163 = vpow.pop %v6162
        %v6164 = vmul.f32 %v5990, 1.442695
        %v6165 = vpow.pop %v6164
        %v6166 = vmul.f32 %v5991, 1.442695
        %v6167 = vpow.pop %v6166
        %v6168 = vmul.f32 %v5992, 1.442695
        %v6169 = vpow.pop %v6168
        %v6170 = vmul.f32 %v5993, 1.442695
        %v6171 = vpow.pop %v6170
        %v6172 = vmul.f32 %v5994, 1.442695
        %v6173 = vpow.pop %v6172
        %v6174 = vmul.f32 %v5995, 1.442695
        %v6175 = vpow.pop %v6174
        %v6176 = vmul.f32 %v5996, 1.442695
        %v6177 = vpow.pop %v6176
        %v6178 = vmul.f32 %v5997, 1.442695
        %v6179 = vpow.pop %v6178
        %v6180 = vmul.f32 %v5998, 1.442695
        %v6181 = vpow.pop %v6180
        %v6182 = vmul.f32 %v5999, 1.442695
        %v6183 = vpow.pop %v6182
        %v6184 = vmul.f32 %v6000, 1.442695
        %v6185 = vpow.pop %v6184
        %v6186 = vmul.f32 %v6001, 1.442695
        %v6187 = vpow.pop %v6186
        %v6188 = vmul.f32 %v6002, 1.442695
        %v6189 = vpow.pop %v6188
        %v6190 = vmul.f32 %v6003, 1.442695
        %v6191 = vpow.pop %v6190
        %v6192 = vmul.f32 %v6004, 1.442695
        %v6193 = vpow.pop %v6192
        %v6194 = vmul.f32 %v6005, 1.442695
        %v6195 = vpow.pop %v6194
        %v6196 = vmul.f32 %v6006, 1.442695
        %v6197 = vpow.pop %v6196
        %v6198 = vmul.f32 %v6007, 1.442695
        %v6199 = vpow.pop %v6198
        %v6200 = vmul.f32 %v6008, 1.442695
        %v6201 = vpow.pop %v6200
        %v6202 = vmul.f32 %v6009, 1.442695
        %v6203 = vpow.pop %v6202
        %v6204 = vmul.f32 %v6010, 1.442695
        %v6205 = vpow.pop %v6204
        %v6206 = vmul.f32 %v6011, 1.442695
        %v6207 = vpow.pop %v6206
        %v6208 = vmul.f32 %v6012, 1.442695
        %v6209 = vpow.pop %v6208
        %v6210 = vmul.f32 %v6013, 1.442695
        %v6211 = vpow.pop %v6210
        %v6212 = vmul.f32 %v6014, 1.442695
        %v6213 = vpow.pop %v6212
        %v6214 = vmul.f32 %v6015, 1.442695
        %v6215 = vpow.pop %v6214
        %v6216 = vmul.f32 %v6016, 1.442695
        %v6217 = vpow.pop %v6216
        %v6218 = vmul.f32 %v6017, 1.442695
        %v6219 = vpow.pop %v6218
        %v6220 = vmul.f32 %v6018, 1.442695
        %v6221 = vpow.pop %v6220
        %v6222 = vmul.f32 %v6019, 1.442695
        %v6223 = vpow.pop %v6222
        %v6224 = vmul.f32 %v6020, 1.442695
        %v6225 = vpow.pop %v6224
        %v6226 = vmul.f32 %v6021, 1.442695
        %v6227 = vpow.pop %v6226
        %v6228 = vmul.f32 %v6022, 1.442695
        %v6229 = vpow.pop %v6228
        %v6230 = vmul.f32 %v6023, 1.442695
        %v6231 = vpow.pop %v6230
        %v6232 = vmul.f32 %v6024, 1.442695
        %v6233 = vpow.pop %v6232
        %v6234 = vmul.f32 %v6025, 1.442695
        %v6235 = vpow.pop %v6234
        %v6236 = vmul.f32 %v6026, 1.442695
        %v6237 = vpow.pop %v6236
        %v6238 = vmul.f32 %v6027, 1.442695
        %v6239 = vpow.pop %v6238
        %v6240 = vmul.f32 %v6028, 1.442695
        %v6241 = vpow.pop %v6240
        %v6242 = vmul.f32 %v6029, 1.442695
        %v6243 = vpow.pop %v6242
        %v6244 = vmul.f32 %v6030, 1.442695
        %v6245 = vpow.pop %v6244
        %v6246 = vmul.f32 %v6031, 1.442695
        %v6247 = vpow.pop %v6246
        %v6248 = vmul.f32 %v6032, 1.442695
        %v6249 = vpow.pop %v6248
        %v6250 = vmul.f32 %v6033, 1.442695
        %v6251 = vpow.pop %v6250
        %v6252 = vmul.f32 %v6034, 1.442695
        %v6253 = vpow.pop %v6252
        %v6254 = vmul.f32 %v6035, 1.442695
        %v6255 = vpow.pop %v6254
        %v6256 = vmul.f32 %v6036, 1.442695
        %v6257 = vpow.pop %v6256
        %v6258 = vmul.f32 %v6037, 1.442695
        %v6259 = vpow.pop %v6258
        %v6260 = vmul.f32 %v6038, 1.442695
        %v6261 = vpow.pop %v6260
        %v6262 = vmul.f32 %v6039, 1.442695
        %v6263 = vpow.pop %v6262
        %v6264 = vadd.f32 %v6041, 1.0
        %v6265 = vadd.f32 %v6043, 1.0
        %v6266 = vadd.f32 %v6045, 1.0
        %v6267 = vadd.f32 %v6047, 1.0
        %v6268 = vadd.f32 %v6049, 1.0
        %v6269 = vadd.f32 %v6051, 1.0
        %v6270 = vadd.f32 %v6053, 1.0
        %v6271 = vadd.f32 %v6055, 1.0
        %v6272 = vadd.f32 %v6057, 1.0
        %v6273 = vadd.f32 %v6059, 1.0
        %v6274 = vadd.f32 %v6061, 1.0
        %v6275 = vadd.f32 %v6063, 1.0
        %v6276 = vadd.f32 %v6065, 1.0
        %v6277 = vadd.f32 %v6067, 1.0
        %v6278 = vadd.f32 %v6069, 1.0
        %v6279 = vadd.f32 %v6071, 1.0
        %v6280 = vadd.f32 %v6073, 1.0
        %v6281 = vadd.f32 %v6075, 1.0
        %v6282 = vadd.f32 %v6077, 1.0
        %v6283 = vadd.f32 %v6079, 1.0
        %v6284 = vadd.f32 %v6081, 1.0
        %v6285 = vadd.f32 %v6083, 1.0
        %v6286 = vadd.f32 %v6085, 1.0
        %v6287 = vadd.f32 %v6087, 1.0
        %v6288 = vadd.f32 %v6089, 1.0
        %v6289 = vadd.f32 %v6091, 1.0
        %v6290 = vadd.f32 %v6093, 1.0
        %v6291 = vadd.f32 %v6095, 1.0
        %v6292 = vadd.f32 %v6097, 1.0
        %v6293 = vadd.f32 %v6099, 1.0
        %v6294 = vadd.f32 %v6101, 1.0
        %v6295 = vadd.f32 %v6103, 1.0
        %v6296 = vadd.f32 %v6105, 1.0
        %v6297 = vadd.f32 %v6107, 1.0
        %v6298 = vadd.f32 %v6109, 1.0
        %v6299 = vadd.f32 %v6111, 1.0
        %v6300 = vadd.f32 %v6113, 1.0
        %v6301 = vadd.f32 %v6115, 1.0
        %v6302 = vadd.f32 %v6117, 1.0
        %v6303 = vadd.f32 %v6119, 1.0
        %v6304 = vadd.f32 %v6121, 1.0
        %v6305 = vadd.f32 %v6123, 1.0
        %v6306 = vadd.f32 %v6125, 1.0
        %v6307 = vadd.f32 %v6127, 1.0
        %v6308 = vadd.f32 %v6129, 1.0
        %v6309 = vadd.f32 %v6131, 1.0
        %v6310 = vadd.f32 %v6133, 1.0
        %v6311 = vadd.f32 %v6135, 1.0
        %v6312 = vadd.f32 %v6137, 1.0
        %v6313 = vadd.f32 %v6139, 1.0
        %v6314 = vadd.f32 %v6141, 1.0
        %v6315 = vadd.f32 %v6143, 1.0
        %v6316 = vadd.f32 %v6145, 1.0
        %v6317 = vadd.f32 %v6147, 1.0
        %v6318 = vadd.f32 %v6149, 1.0
        %v6319 = vadd.f32 %v6151, 1.0
        %v6320 = vadd.f32 %v6153, 1.0
        %v6321 = vadd.f32 %v6155, 1.0
        %v6322 = vadd.f32 %v6157, 1.0
        %v6323 = vadd.f32 %v6159, 1.0
        %v6324 = vadd.f32 %v6161, 1.0
        %v6325 = vadd.f32 %v6163, 1.0
        %v6326 = vadd.f32 %v6165, 1.0
        %v6327 = vadd.f32 %v6167, 1.0
        %v6328 = vadd.f32 %v6169, 1.0
        %v6329 = vadd.f32 %v6171, 1.0
        %v6330 = vadd.f32 %v6173, 1.0
        %v6331 = vadd.f32 %v6175, 1.0
        %v6332 = vadd.f32 %v6177, 1.0
        %v6333 = vadd.f32 %v6179, 1.0
        %v6334 = vadd.f32 %v6181, 1.0
        %v6335 = vadd.f32 %v6183, 1.0
        %v6336 = vadd.f32 %v6185, 1.0
        %v6337 = vadd.f32 %v6187, 1.0
        %v6338 = vadd.f32 %v6189, 1.0
        %v6339 = vadd.f32 %v6191, 1.0
        %v6340 = vadd.f32 %v6193, 1.0
        %v6341 = vadd.f32 %v6195, 1.0
        %v6342 = vadd.f32 %v6197, 1.0
        %v6343 = vadd.f32 %v6199, 1.0
        %v6344 = vadd.f32 %v6201, 1.0
        %v6345 = vadd.f32 %v6203, 1.0
        %v6346 = vadd.f32 %v6205, 1.0
        %v6347 = vadd.f32 %v6207, 1.0
        %v6348 = vadd.f32 %v6209, 1.0
        %v6349 = vadd.f32 %v6211, 1.0
        %v6350 = vadd.f32 %v6213, 1.0
        %v6351 = vadd.f32 %v6215, 1.0
        %v6352 = vadd.f32 %v6217, 1.0
        %v6353 = vadd.f32 %v6219, 1.0
        %v6354 = vadd.f32 %v6221, 1.0
        %v6355 = vadd.f32 %v6223, 1.0
        %v6356 = vadd.f32 %v6225, 1.0
        %v6357 = vadd.f32 %v6227, 1.0
        %v6358 = vadd.f32 %v6229, 1.0
        %v6359 = vadd.f32 %v6231, 1.0
        %v6360 = vadd.f32 %v6233, 1.0
        %v6361 = vadd.f32 %v6235, 1.0
        %v6362 = vadd.f32 %v6237, 1.0
        %v6363 = vadd.f32 %v6239, 1.0
        %v6364 = vadd.f32 %v6241, 1.0
        %v6365 = vadd.f32 %v6243, 1.0
        %v6366 = vadd.f32 %v6245, 1.0
        %v6367 = vadd.f32 %v6247, 1.0
        %v6368 = vadd.f32 %v6249, 1.0
        %v6369 = vadd.f32 %v6251, 1.0
        %v6370 = vadd.f32 %v6253, 1.0
        %v6371 = vadd.f32 %v6255, 1.0
        %v6372 = vadd.f32 %v6257, 1.0
        %v6373 = vadd.f32 %v6259, 1.0
        %v6374 = vadd.f32 %v6261, 1.0
        %v6375 = vadd.f32 %v6263, 1.0
        %v6376 = vrcp.pop %v6264
        %v6377 = vrcp.pop %v6265
        %v6378 = vrcp.pop %v6266
        %v6379 = vrcp.pop %v6267
        %v6380 = vrcp.pop %v6268
        %v6381 = vrcp.pop %v6269
        %v6382 = vrcp.pop %v6270
        %v6383 = vrcp.pop %v6271
        %v6384 = vrcp.pop %v6272
        %v6385 = vrcp.pop %v6273
        %v6386 = vrcp.pop %v6274
        %v6387 = vrcp.pop %v6275
        %v6388 = vrcp.pop %v6276
        %v6389 = vrcp.pop %v6277
        %v6390 = vrcp.pop %v6278
        %v6391 = vrcp.pop %v6279
        %v6392 = vrcp.pop %v6280
        %v6393 = vrcp.pop %v6281
        %v6394 = vrcp.pop %v6282
        %v6395 = vrcp.pop %v6283
        %v6396 = vrcp.pop %v6284
        %v6397 = vrcp.pop %v6285
        %v6398 = vrcp.pop %v6286
        %v6399 = vrcp.pop %v6287
        %v6400 = vrcp.pop %v6288
        %v6401 = vrcp.pop %v6289
        %v6402 = vrcp.pop %v6290
        %v6403 = vrcp.pop %v6291
        %v6404 = vrcp.pop %v6292
        %v6405 = vrcp.pop %v6293
        %v6406 = vrcp.pop %v6294
        %v6407 = vrcp.pop %v6295
        %v6408 = vrcp.pop %v6296
        %v6409 = vrcp.pop %v6297
        %v6410 = vrcp.pop %v6298
        %v6411 = vrcp.pop %v6299
        %v6412 = vrcp.pop %v6300
        %v6413 = vrcp.pop %v6301
        %v6414 = vrcp.pop %v6302
        %v6415 = vrcp.pop %v6303
        %v6416 = vrcp.pop %v6304
        %v6417 = vrcp.pop %v6305
        %v6418 = vrcp.pop %v6306
        %v6419 = vrcp.pop %v6307
        %v6420 = vrcp.pop %v6308
        %v6421 = vrcp.pop %v6309
        %v6422 = vrcp.pop %v6310
        %v6423 = vrcp.pop %v6311
        %v6424 = vrcp.pop %v6312
        %v6425 = vrcp.pop %v6313
        %v6426 = vrcp.pop %v6314
        %v6427 = vrcp.pop %v6315
        %v6428 = vrcp.pop %v6316
        %v6429 = vrcp.pop %v6317
        %v6430 = vrcp.pop %v6318
        %v6431 = vrcp.pop %v6319
        %v6432 = vrcp.pop %v6320
        %v6433 = vrcp.pop %v6321
        %v6434 = vrcp.pop %v6322
        %v6435 = vrcp.pop %v6323
        %v6436 = vrcp.pop %v6324
        %v6437 = vrcp.pop %v6325
        %v6438 = vrcp.pop %v6326
        %v6439 = vrcp.pop %v6327
        %v6440 = vrcp.pop %v6328
        %v6441 = vrcp.pop %v6329
        %v6442 = vrcp.pop %v6330
        %v6443 = vrcp.pop %v6331
        %v6444 = vrcp.pop %v6332
        %v6445 = vrcp.pop %v6333
        %v6446 = vrcp.pop %v6334
        %v6447 = vrcp.pop %v6335
        %v6448 = vrcp.pop %v6336
        %v6449 = vrcp.pop %v6337
        %v6450 = vrcp.pop %v6338
        %v6451 = vrcp.pop %v6339
        %v6452 = vrcp.pop %v6340
        %v6453 = vrcp.pop %v6341
        %v6454 = vrcp.pop %v6342
        %v6455 = vrcp.pop %v6343
        %v6456 = vrcp.pop %v6344
        %v6457 = vrcp.pop %v6345
        %v6458 = vrcp.pop %v6346
        %v6459 = vrcp.pop %v6347
        %v6460 = vrcp.pop %v6348
        %v6461 = vrcp.pop %v6349
        %v6462 = vrcp.pop %v6350
        %v6463 = vrcp.pop %v6351
        %v6464 = vrcp.pop %v6352
        %v6465 = vrcp.pop %v6353
        %v6466 = vrcp.pop %v6354
        %v6467 = vrcp.pop %v6355
        %v6468 = vrcp.pop %v6356
        %v6469 = vrcp.pop %v6357
        %v6470 = vrcp.pop %v6358
        %v6471 = vrcp.pop %v6359
        %v6472 = vrcp.pop %v6360
        %v6473 = vrcp.pop %v6361
        %v6474 = vrcp.pop %v6362
        %v6475 = vrcp.pop %v6363
        %v6476 = vrcp.pop %v6364
        %v6477 = vrcp.pop %v6365
        %v6478 = vrcp.pop %v6366
        %v6479 = vrcp.pop %v6367
        %v6480 = vrcp.pop %v6368
        %v6481 = vrcp.pop %v6369
        %v6482 = vrcp.pop %v6370
        %v6483 = vrcp.pop %v6371
        %v6484 = vrcp.pop %v6372
        %v6485 = vrcp.pop %v6373
        %v6486 = vrcp.pop %v6374
        %v6487 = vrcp.pop %v6375
        %6488 = vst [vmem:[%s383] sm:$0xff] %v6376
        %6489 = vst [vmem:[%s383 + $0x8] sm:$0xff] %v6377
        %6490 = vst [vmem:[%s383 + $0x10] sm:$0xff] %v6378
        %6491 = vst [vmem:[%s383 + $0x18] sm:$0xff] %v6379
        %6492 = vst [vmem:[%s383 + $0x20] sm:$0xff] %v6380
        %6493 = vst [vmem:[%s383 + $0x28] sm:$0xff] %v6381
        %6494 = vst [vmem:[%s383 + $0x30] sm:$0xff] %v6382
        %6495 = vst [vmem:[%s383 + $0x38] sm:$0xff] %v6383
        %6496 = vst [vmem:[%s383 + $0x40] sm:$0xff] %v6384
        %6497 = vst [vmem:[%s383 + $0x48] sm:$0xff] %v6385
        %6498 = vst [vmem:[%s383 + $0x50] sm:$0xff] %v6386
        %6499 = vst [vmem:[%s383 + $0x58] sm:$0xff] %v6387
        %6500 = vst [vmem:[%s383 + $0x60] sm:$0xff] %v6388
        %6501 = vst [vmem:[%s383 + $0x68] sm:$0xff] %v6389
        %6502 = vst [vmem:[%s383 + $0x70] sm:$0xff] %v6390
        %6503 = vst [vmem:[%s383 + $0x78] sm:$0xff] %v6391
        %6504 = vst [vmem:[%s383 + $0x80] sm:$0xff] %v6392
        %6505 = vst [vmem:[%s383 + $0x88] sm:$0xff] %v6393
        %6506 = vst [vmem:[%s383 + $0x90] sm:$0xff] %v6394
        %6507 = vst [vmem:[%s383 + $0x98] sm:$0xff] %v6395
        %6508 = vst [vmem:[%s383 + $0xa0] sm:$0xff] %v6396
        %6509 = vst [vmem:[%s383 + $0xa8] sm:$0xff] %v6397
        %6510 = vst [vmem:[%s383 + $0xb0] sm:$0xff] %v6398
        %6511 = vst [vmem:[%s383 + $0xb8] sm:$0xff] %v6399
        %6512 = vst [vmem:[%s383 + $0xc0] sm:$0xff] %v6400
        %6513 = vst [vmem:[%s383 + $0xc8] sm:$0xff] %v6401
        %6514 = vst [vmem:[%s383 + $0xd0] sm:$0xff] %v6402
        %6515 = vst [vmem:[%s383 + $0xd8] sm:$0xff] %v6403
        %6516 = vst [vmem:[%s383 + $0xe0] sm:$0xff] %v6404
        %6517 = vst [vmem:[%s383 + $0xe8] sm:$0xff] %v6405
        %6518 = vst [vmem:[%s383 + $0xf0] sm:$0xff] %v6406
        %6519 = vst [vmem:[%s383 + $0xf8] sm:$0xff] %v6407
        %6520 = vst [vmem:[%s383 + $0x100] sm:$0xff] %v6408
        %6521 = vst [vmem:[%s383 + $0x108] sm:$0xff] %v6409
        %6522 = vst [vmem:[%s383 + $0x110] sm:$0xff] %v6410
        %6523 = vst [vmem:[%s383 + $0x118] sm:$0xff] %v6411
        %6524 = vst [vmem:[%s383 + $0x120] sm:$0xff] %v6412
        %6525 = vst [vmem:[%s383 + $0x128] sm:$0xff] %v6413
        %6526 = vst [vmem:[%s383 + $0x130] sm:$0xff] %v6414
        %6527 = vst [vmem:[%s383 + $0x138] sm:$0xff] %v6415
        %6528 = vst [vmem:[%s383 + $0x140] sm:$0xff] %v6416
        %6529 = vst [vmem:[%s383 + $0x148] sm:$0xff] %v6417
        %6530 = vst [vmem:[%s383 + $0x150] sm:$0xff] %v6418
        %6531 = vst [vmem:[%s383 + $0x158] sm:$0xff] %v6419
        %6532 = vst [vmem:[%s383 + $0x160] sm:$0xff] %v6420
        %6533 = vst [vmem:[%s383 + $0x168] sm:$0xff] %v6421
        %6534 = vst [vmem:[%s383 + $0x170] sm:$0xff] %v6422
        %6535 = vst [vmem:[%s383 + $0x178] sm:$0xff] %v6423
        %6536 = vst [vmem:[%s383 + $0x180] sm:$0xff] %v6424
        %6537 = vst [vmem:[%s383 + $0x188] sm:$0xff] %v6425
        %6538 = vst [vmem:[%s383 + $0x190] sm:$0xff] %v6426
        %6539 = vst [vmem:[%s383 + $0x198] sm:$0xff] %v6427
        %6540 = vst [vmem:[%s383 + $0x1a0] sm:$0xff] %v6428
        %6541 = vst [vmem:[%s383 + $0x1a8] sm:$0xff] %v6429
        %6542 = vst [vmem:[%s383 + $0x1b0] sm:$0xff] %v6430
        %6543 = vst [vmem:[%s383 + $0x1b8] sm:$0xff] %v6431
        %6544 = vst [vmem:[%s383 + $0x1c0] sm:$0xff] %v6432
        %6545 = vst [vmem:[%s383 + $0x1c8] sm:$0xff] %v6433
        %6546 = vst [vmem:[%s383 + $0x1d0] sm:$0xff] %v6434
        %6547 = vst [vmem:[%s383 + $0x1d8] sm:$0xff] %v6435
        %6548 = vst [vmem:[%s383 + $0x1e0] sm:$0xff] %v6436
        %6549 = vst [vmem:[%s383 + $0x1e8] sm:$0xff] %v6437
        %6550 = vst [vmem:[%s383 + $0x1f0] sm:$0xff] %v6438
        %6551 = vst [vmem:[%s383 + $0x1f8] sm:$0xff] %v6439
        %6552 = vst [vmem:[%s383 + $0x200] sm:$0xff] %v6440
        %6553 = vst [vmem:[%s383 + $0x208] sm:$0xff] %v6441
        %6554 = vst [vmem:[%s383 + $0x210] sm:$0xff] %v6442
        %6555 = vst [vmem:[%s383 + $0x218] sm:$0xff] %v6443
        %6556 = vst [vmem:[%s383 + $0x220] sm:$0xff] %v6444
        %6557 = vst [vmem:[%s383 + $0x228] sm:$0xff] %v6445
        %6558 = vst [vmem:[%s383 + $0x230] sm:$0xff] %v6446
        %6559 = vst [vmem:[%s383 + $0x238] sm:$0xff] %v6447
        %6560 = vst [vmem:[%s383 + $0x240] sm:$0xff] %v6448
        %6561 = vst [vmem:[%s383 + $0x248] sm:$0xff] %v6449
        %6562 = vst [vmem:[%s383 + $0x250] sm:$0xff] %v6450
        %6563 = vst [vmem:[%s383 + $0x258] sm:$0xff] %v6451
        %6564 = vst [vmem:[%s383 + $0x260] sm:$0xff] %v6452
        %6565 = vst [vmem:[%s383 + $0x268] sm:$0xff] %v6453
        %6566 = vst [vmem:[%s383 + $0x270] sm:$0xff] %v6454
        %6567 = vst [vmem:[%s383 + $0x278] sm:$0xff] %v6455
        %6568 = vst [vmem:[%s383 + $0x280] sm:$0xff] %v6456
        %6569 = vst [vmem:[%s383 + $0x288] sm:$0xff] %v6457
        %6570 = vst [vmem:[%s383 + $0x290] sm:$0xff] %v6458
        %6571 = vst [vmem:[%s383 + $0x298] sm:$0xff] %v6459
        %6572 = vst [vmem:[%s383 + $0x2a0] sm:$0xff] %v6460
        %6573 = vst [vmem:[%s383 + $0x2a8] sm:$0xff] %v6461
        %6574 = vst [vmem:[%s383 + $0x2b0] sm:$0xff] %v6462
        %6575 = vst [vmem:[%s383 + $0x2b8] sm:$0xff] %v6463
        %6576 = vst [vmem:[%s383 + $0x2c0] sm:$0xff] %v6464
        %6577 = vst [vmem:[%s383 + $0x2c8] sm:$0xff] %v6465
        %6578 = vst [vmem:[%s383 + $0x2d0] sm:$0xff] %v6466
        %6579 = vst [vmem:[%s383 + $0x2d8] sm:$0xff] %v6467
        %6580 = vst [vmem:[%s383 + $0x2e0] sm:$0xff] %v6468
        %6581 = vst [vmem:[%s383 + $0x2e8] sm:$0xff] %v6469
        %6582 = vst [vmem:[%s383 + $0x2f0] sm:$0xff] %v6470
        %6583 = vst [vmem:[%s383 + $0x2f8] sm:$0xff] %v6471
        %6584 = vst [vmem:[%s383 + $0x300] sm:$0xff] %v6472
        %6585 = vst [vmem:[%s383 + $0x308] sm:$0xff] %v6473
        %6586 = vst [vmem:[%s383 + $0x310] sm:$0xff] %v6474
        %6587 = vst [vmem:[%s383 + $0x318] sm:$0xff] %v6475
        %6588 = vst [vmem:[%s383 + $0x320] sm:$0xff] %v6476
        %6589 = vst [vmem:[%s383 + $0x328] sm:$0xff] %v6477
        %6590 = vst [vmem:[%s383 + $0x330] sm:$0xff] %v6478
        %6591 = vst [vmem:[%s383 + $0x338] sm:$0xff] %v6479
        %6592 = vst [vmem:[%s383 + $0x340] sm:$0xff] %v6480
        %6593 = vst [vmem:[%s383 + $0x348] sm:$0xff] %v6481
        %6594 = vst [vmem:[%s383 + $0x350] sm:$0xff] %v6482
        %6595 = vst [vmem:[%s383 + $0x358] sm:$0xff] %v6483
        %6596 = vst [vmem:[%s383 + $0x360] sm:$0xff] %v6484
        %6597 = vst [vmem:[%s383 + $0x368] sm:$0xff] %v6485
        %6598 = vst [vmem:[%s383 + $0x370] sm:$0xff] %v6486
        %6599 = vst [vmem:[%s383 + $0x378] sm:$0xff] %v6487
        %vm6600 = vcmask 326656
        %6601 = vst.msk [vmem:[%s403] sm:$0xff] %vm6600, %v3304
        %6602 = vst.msk [vmem:[%s403 + $0x8] sm:$0xff] %vm6600, %v3307
        %6603 = vst.msk [vmem:[%s403 + $0x10] sm:$0xff] %vm6600, %v3312
        %6604 = vst.msk [vmem:[%s403 + $0x18] sm:$0xff] %vm6600, %v3315
        %6605 = vst.msk [vmem:[%s403 + $0x20] sm:$0xff] %vm6600, %v3320
        %6606 = vst.msk [vmem:[%s403 + $0x28] sm:$0xff] %vm6600, %v3323
        %6607 = vst.msk [vmem:[%s403 + $0x30] sm:$0xff] %vm6600, %v3328
        %6608 = vst.msk [vmem:[%s403 + $0x38] sm:$0xff] %vm6600, %v3331
        %6609 = vst.msk [vmem:[%s403 + $0x40] sm:$0xff] %vm6600, %v3336
        %6610 = vst.msk [vmem:[%s403 + $0x48] sm:$0xff] %vm6600, %v3339
        %6611 = vst.msk [vmem:[%s403 + $0x50] sm:$0xff] %vm6600, %v3344
        %6612 = vst.msk [vmem:[%s403 + $0x58] sm:$0xff] %vm6600, %v3347
        %6613 = vst.msk [vmem:[%s403 + $0x60] sm:$0xff] %vm6600, %v3352
        %6614 = vst.msk [vmem:[%s403 + $0x68] sm:$0xff] %vm6600, %v3355
        %6615 = vst.msk [vmem:[%s403 + $0x70] sm:$0xff] %vm6600, %v3360
        %6616 = vst.msk [vmem:[%s403 + $0x78] sm:$0xff] %vm6600, %v3363
        %s6617 = sand.u32 %s249, 1
        %s6618 = scalar_lea.sflag [#allocation3], %s6617
        %s6619 = sand.u32 %s249, 1
        %s6620 = smul.addr %s6619, 896
        %s6621 = scalar_lea.vmem [#allocation2], %s6620
        %s6622 = smul.u32 16, %s26
        %p6623 = scmp.lt.s32.totalorder %s6622, 31
        %s6624 = scalar_select %p6623, %s6622, 31
        %s6625 = smul.addr %s6624, 8
        %s6626 = scalar_lea.vmem %s11, %s6625
        // Predicated region
        $region61: #{tpu_custom_call.1} parent=59 // pred_check
          %p6627 = pneg %p259
        $region62: #{tpu_custom_call.1} parent=59 // pred_check_branch
          %6629 = sbr.rel (%p6627) target = $region64
        $region63: #{tpu_custom_call.1} parent=59 // pred_region
          %s6630 = smul.u32 16, %s26
          %s6632 = ssub.s32 14336, 14336
          %6633 = vsyncadd %s6618, %s6632
          %s6634 = smul.addr %s6630, 7
          %s6635 = smul.addr %s6634, 128
          %s6636 = scalar_lea.hbm %s10, %s6635
          %s6637 = sshll.u32 %s6621, 4
          %s6638 = int_to_ptr.vmem [resolvable:$true] %s6637
          %6643 = dma.vmem_to_hbm [thread:$0]  %s6638, 14336, %s6636, %s6618, 896, 896, 56
        $region64: #{tpu_custom_call.1} parent=59 // pred_fallthru
          _
        // Predicated region
        $region65: #{tpu_custom_call.1} parent=59 // pred_check
          %p6644 = pneg %p285
        $region66: #{tpu_custom_call.1} parent=59 // pred_check_branch
          %6646 = sbr.rel (%p6644) target = $region68
        $region67: #{tpu_custom_call.1} parent=59 // pred_region
          %s6647 = smul.u32 16, %s26
        $region68: #{tpu_custom_call.1} parent=59 // pred_fallthru
          _
      $region60: #{tpu_custom_call.1} parent=5 // pred_fallthru
        _
      %p6648 = scmp.le.s32.totalorder 2, %s21
      // Predicated region
      $region69: #{tpu_custom_call.1} parent=5 // pred_check
        %p6649 = pneg %p6648
      $region70: #{tpu_custom_call.1} parent=5 // pred_check_branch
        %6651 = sbr.rel (%p6649) target = $region72
      $region71: #{tpu_custom_call.1} parent=5 // pred_region
        %s6652 = ssub.s32 %s21, 2
        // Predicated region
        $region73: #{tpu_custom_call.1} parent=71 // pred_check
          %p6653 = pneg %p265
        $region74: #{tpu_custom_call.1} parent=71 // pred_check_branch
          %6655 = sbr.rel (%p6653) target = $region76
        $region75: #{tpu_custom_call.1} parent=71 // pred_region
          %s6656 = sand.u32 %s250, 1
          %s6657 = scalar_lea.sflag [#allocation3], %s6656
          %s6658 = sand.u32 %s250, 1
          %s6659 = smul.addr %s6658, 896
          %s6660 = scalar_lea.vmem [#allocation2], %s6659
          %6661 = dma.done %s6657, 14336
        $region76: #{tpu_custom_call.1} parent=71 // pred_fallthru
          _
        // Predicated region
        $region77: #{tpu_custom_call.1} parent=71 // pred_check
          %p6662 = pneg %p291
        $region78: #{tpu_custom_call.1} parent=71 // pred_check_branch
          %6664 = sbr.rel (%p6662) target = $region80
        $region79: #{tpu_custom_call.1} parent=71 // pred_region
          %s6665 = smul.u32 16, %s27
          %p6666 = scmp.lt.s32.totalorder %s6665, 31
          %s6667 = scalar_select %p6666, %s6665, 31
          %s6668 = smul.addr %s6667, 8
          %s6669 = scalar_lea.vmem %s11, %s6668
        $region80: #{tpu_custom_call.1} parent=71 // pred_fallthru
          _
      $region72: #{tpu_custom_call.1} parent=5 // pred_fallthru
        _
    $region6: #{tpu_custom_call.1} parent=1 // loop_footer
      %s25 = sadd.s32 1, %s21
    $region7: #{tpu_custom_call.1} parent=1 // loop_footer_branch
      %20 = sbr.rel target = $region3
    $region8: #{tpu_custom_call.1} parent=1 // loop_exit
      _
    %6670 = vsyncpa [#allocation3], 1
    %s6671 = scalar_lea.sflag [#allocation3], 1
    %6672 = vsyncpa %s6671, 1

</llo_original>
